<compile_context>
chip_gen: v5e
topology: v5e:2x2
jax: 0.10.0
libtpu: 0.0.40
codegen_flags: <defaults>
</compile_context>

<pallas_src>
import functools

import jax
import jax.numpy as jnp
import numpy as np
from jax.experimental import pallas as pl
from jax.experimental.pallas import tpu as pltpu


def block3d_kernel(x_ref, ln1_w_ref, ln1_b_ref,
                   wq_ref, wk_ref, wv_ref, bq_ref, bk_ref, bv_ref,
                   wproj_ref, bproj_ref, ln2_w_ref, ln2_b_ref,
                   wfc1_ref, bfc1_ref, wfc2_ref, bfc2_ref,
                   o_ref, *, num_heads, head_dim, exact_softmax):
    eps = 1e-5
    x = x_ref[...].astype(jnp.float32)               # (N, C); leading batch dim squeezed
    N, C = x.shape
    H, hd = num_heads, head_dim
    scale = float(hd) ** -0.5
    bf16 = jnp.bfloat16

    def layernorm(y, w, b):                          # f32 stats on the VPU
        mu = jnp.mean(y, axis=-1, keepdims=True)
        var = jnp.mean((y - mu) ** 2, axis=-1, keepdims=True)
        return (y - mu) * jax.lax.rsqrt(var + eps) * w + b

    def gelu_exact(y):                               # PyTorch nn.GELU default (erf form)
        return 0.5 * y * (1.0 + jax.lax.erf(y * 0.7071067811865476))

    # Batched-over-heads matmul dimension numbers (reused by 3 of the 4 dots):
    #   (H, N, K) x (H, K, M) -> (H, N, M)
    bmm = (((2,), (1,)), ((0,), (0,)))
    # QK^T contracts the hd dim of both operands: (H,N,hd) x (H,N,hd) -> (H,N,N)
    qk = (((2,), (2,)), ((0,), (0,)))

    # ---------------- attention branch: x + proj(attn(LN1(x))) ----------------
    h1 = layernorm(x, ln1_w_ref[...], ln1_b_ref[...]).astype(bf16)   # cast once
    h1h = jnp.broadcast_to(h1[None], (H, N, C))                      # head-batched lhs

    def qkv_proj(w_ref, b_ref):                      # (H, N, hd) bf16
        y = jax.lax.dot_general(h1h, w_ref[...], bmm,
                                preferred_element_type=jnp.float32)
        return (y + b_ref[...]).astype(bf16)

    q = qkv_proj(wq_ref, bq_ref)
    k = qkv_proj(wk_ref, bk_ref)
    v = qkv_proj(wv_ref, bv_ref)

    s = jax.lax.dot_general(q, k, qk, preferred_element_type=jnp.float32) * scale
    s = s - jnp.max(s, axis=-1, keepdims=True)       # (H, N, N) f32
    p = jnp.exp(s)
    denom = jnp.sum(p, axis=-1, keepdims=True)
    if exact_softmax:
        p = p / denom
    else:
        p = p * pl.reciprocal(denom, approx=True)    # EUP slot; ~1e-3 deviation

    pv = jax.lax.dot_general(p.astype(bf16), v, bmm,
                             preferred_element_type=jnp.float32)     # (H, N, hd)
    # Head merge absorbed into per-head proj weights (H, hd, C): summing the
    # per-head projections over H is exactly concat(heads) @ wproj.
    per_head = jax.lax.dot_general(pv.astype(bf16), wproj_ref[...], bmm,
                                   preferred_element_type=jnp.float32)  # (H, N, C)
    attn_out = jnp.sum(per_head, axis=0) + bproj_ref[...]
    x1 = x + attn_out                                # residual in f32

    # ---------------- MLP branch: x1 + fc2(gelu(fc1(LN2(x1)))) ----------------
    h2 = layernorm(x1, ln2_w_ref[...], ln2_b_ref[...]).astype(bf16)  # cast once
    f1 = gelu_exact(jnp.dot(h2, wfc1_ref[...],
                            preferred_element_type=jnp.float32) + bfc1_ref[...])
    f1 = f1.astype(bf16)                             # halve largest live slab (N, 4C)
    f2 = jnp.dot(f1, wfc2_ref[...],
                 preferred_element_type=jnp.float32) + bfc2_ref[...]

    o_ref[...] = (x1 + f2).astype(o_ref.dtype)


def _vmem_limit_bytes():
    """<= 3/4 of physical VMEM (headroom on v7x's 64 MiB), capped at 100 MiB."""
    try:
        cap = int(pltpu.get_tpu_info().vmem_capacity_bytes)
        return min(cap * 3 // 4, 100 * 1024 * 1024)
    except Exception:
        return 32 * 1024 * 1024      # conservative default, fits every generation


def block3d(x, params, num_heads, *, exact_softmax=True, single_buffer_weights=True):
    B, N, C = x.shape
    assert C % num_heads == 0, "num_heads must divide the channel dim"
    hd = C // num_heads
    bf16 = jnp.bfloat16

    # Head split absorbed into the weights (wrapper-side reshapes, done once).
    wqkv, bqkv = params["wqkv"], params["bqkv"]

    def head_w(w):      # (C, C) -> (H, C, hd) bf16 MXU operand
        return jnp.transpose(w.reshape(C, num_heads, hd), (1, 0, 2)).astype(bf16)

    def head_b(b):      # (1, C) -> (H, 1, hd) f32
        return b.reshape(num_heads, 1, hd).astype(jnp.float32)

    wq3, wk3, wv3 = (head_w(wqkv[:, i * C:(i + 1) * C]) for i in range(3))
    bq3, bk3, bv3 = (head_b(bqkv[:, i * C:(i + 1) * C]) for i in range(3))
    wproj3 = params["wproj"].reshape(num_heads, hd, C).astype(bf16)   # (H, hd, C)
    wfc1 = params["wfc1"].astype(bf16)
    wfc2 = params["wfc2"].astype(bf16)

    inputs = [x,
              params["ln1_w"], params["ln1_b"],
              wq3, wk3, wv3, bq3, bk3, bv3,
              wproj3, params["bproj"],
              params["ln2_w"], params["ln2_b"],
              wfc1, params["bfc1"], wfc2, params["bfc2"]]

    kernel = functools.partial(block3d_kernel, num_heads=num_heads, head_dim=hd,
                               exact_softmax=exact_softmax)
    vmem_limit = _vmem_limit_bytes()

    def call(use_single_buffer):
        def fixed(a):   # whole-array block, constant index -> resident weight
            nd = a.ndim
            if use_single_buffer:
                return pl.BlockSpec(a.shape, lambda i, _n=nd: (0,) * _n,
                                    pipeline_mode=pl.Buffered(1))
            return pl.BlockSpec(a.shape, lambda i, _n=nd: (0,) * _n)

        xspec = pl.BlockSpec((None, N, C), lambda i: (i, 0, 0))
        return pl.pallas_call(
            kernel,
            out_shape=jax.ShapeDtypeStruct((B, N, C), x.dtype),
            grid=(B,),
            in_specs=[xspec] + [fixed(a) for a in inputs[1:]],
            out_specs=pl.BlockSpec((None, N, C), lambda i: (i, 0, 0)),
            compiler_params=pltpu.CompilerParams(
                dimension_semantics=("parallel",),
                vmem_limit_bytes=vmem_limit),
        )(*inputs)

    if single_buffer_weights:
        try:
            return call(True)
        except Exception:
            pass      # older jax may reject Buffered(1); fall back to default buffering
    return call(False)


def block3d_reference(x, params, num_heads):
    """Pure-JAX f32 reference mirroring the PyTorch Block3D forward (eval mode)."""
    B, N, C = x.shape
    hd = C // num_heads
    scale = hd ** -0.5
    eps = 1e-5

    def ln(y, w, b):
        mu = jnp.mean(y, axis=-1, keepdims=True)
        var = jnp.mean((y - mu) ** 2, axis=-1, keepdims=True)
        return (y - mu) / jnp.sqrt(var + eps) * w + b

    h = ln(x, params["ln1_w"][0], params["ln1_b"][0])
    qkv = h @ params["wqkv"] + params["bqkv"][0]
    qkv = qkv.reshape(B, N, 3, num_heads, hd).transpose(2, 0, 3, 1, 4)
    q, k, v = qkv[0], qkv[1], qkv[2]
    attn = jnp.einsum("bhnd,bhmd->bhnm", q, k) * scale
    attn = jax.nn.softmax(attn, axis=-1)
    out = jnp.einsum("bhnm,bhmd->bhnd", attn, v).transpose(0, 2, 1, 3).reshape(B, N, C)
    out = out @ params["wproj"] + params["bproj"][0]
    x1 = x + out

    h2 = ln(x1, params["ln2_w"][0], params["ln2_b"][0])
    f1 = jax.nn.gelu(h2 @ params["wfc1"] + params["bfc1"][0], approximate=False)
    f2 = f1 @ params["wfc2"] + params["bfc2"][0]
    return x1 + f2


if __name__ == "__main__":
    B, N, C = 2, 8, 32
    num_heads = 4
    mlp_ratio = 4.0
    H = int(C * mlp_ratio)

    key = jax.random.PRNGKey(0)
    ks = jax.random.split(key, 9)

    params = {
        "ln1_w": jnp.ones((1, C), jnp.float32),
        "ln1_b": jnp.zeros((1, C), jnp.float32),
        "wqkv": 0.02 * jax.random.normal(ks[0], (C, 3 * C), jnp.float32),
        "bqkv": 0.01 * jax.random.normal(ks[1], (1, 3 * C), jnp.float32),
        "wproj": 0.02 * jax.random.normal(ks[2], (C, C), jnp.float32),
        "bproj": 0.01 * jax.random.normal(ks[3], (1, C), jnp.float32),
        "ln2_w": jnp.ones((1, C), jnp.float32),
        "ln2_b": jnp.zeros((1, C), jnp.float32),
        "wfc1": 0.02 * jax.random.normal(ks[4], (C, H), jnp.float32),
        "bfc1": 0.01 * jax.random.normal(ks[5], (1, H), jnp.float32),
        "wfc2": 0.02 * jax.random.normal(ks[6], (H, C), jnp.float32),
        "bfc2": 0.01 * jax.random.normal(ks[7], (1, C), jnp.float32),
    }

    x = jax.random.normal(ks[8], (B, N, C), jnp.float32)

    out = jax.block_until_ready(block3d(x, params, num_heads))
    ref = jax.block_until_ready(block3d_reference(x, params, num_heads))

    # bf16 MXU operands with f32 accumulation => compare against the f32
    # reference with a bf16-appropriate tolerance.
    np.testing.assert_allclose(np.asarray(out), np.asarray(ref), rtol=2e-2, atol=2e-2)

    print("KERNEL_OK")
</pallas_src>

<mosaic_0001>
module attributes {stable_mosaic.version = 11 : i64} {
  func.func @block3d_kernel(%arg0: i32, %arg1: memref<1x8x32xf32, #tpu.memory_space<vmem>>, %arg2: memref<1x32xf32, #tpu.memory_space<vmem>>, %arg3: memref<1x32xf32, #tpu.memory_space<vmem>>, %arg4: memref<4x32x8xbf16, #tpu.memory_space<vmem>>, %arg5: memref<4x32x8xbf16, #tpu.memory_space<vmem>>, %arg6: memref<4x32x8xbf16, #tpu.memory_space<vmem>>, %arg7: memref<4x1x8xf32, #tpu.memory_space<vmem>>, %arg8: memref<4x1x8xf32, #tpu.memory_space<vmem>>, %arg9: memref<4x1x8xf32, #tpu.memory_space<vmem>>, %arg10: memref<4x8x32xbf16, #tpu.memory_space<vmem>>, %arg11: memref<1x32xf32, #tpu.memory_space<vmem>>, %arg12: memref<1x32xf32, #tpu.memory_space<vmem>>, %arg13: memref<1x32xf32, #tpu.memory_space<vmem>>, %arg14: memref<32x128xbf16, #tpu.memory_space<vmem>>, %arg15: memref<1x128xf32, #tpu.memory_space<vmem>>, %arg16: memref<128x32xbf16, #tpu.memory_space<vmem>>, %arg17: memref<1x32xf32, #tpu.memory_space<vmem>>, %arg18: memref<1x8x32xf32, #tpu.memory_space<vmem>>) attributes {dimension_semantics = [#tpu.dimension_semantics<parallel>], iteration_bounds = array<i64: 2>, scalar_prefetch = 0 : i64, scratch_operands = 0 : i64, tpu.core_type = #tpu.core_type<tc>, window_params = [{transform_indices = @transform_0, window_bounds = array<i64: 1, 8, 32>}, {pipeline_mode = #tpu.pipeline_mode<synchronous>, transform_indices = @transform_1, window_bounds = array<i64: 1, 32>}, {pipeline_mode = #tpu.pipeline_mode<synchronous>, transform_indices = @transform_2, window_bounds = array<i64: 1, 32>}, {pipeline_mode = #tpu.pipeline_mode<synchronous>, transform_indices = @transform_3, window_bounds = array<i64: 4, 32, 8>}, {pipeline_mode = #tpu.pipeline_mode<synchronous>, transform_indices = @transform_4, window_bounds = array<i64: 4, 32, 8>}, {pipeline_mode = #tpu.pipeline_mode<synchronous>, transform_indices = @transform_5, window_bounds = array<i64: 4, 32, 8>}, {pipeline_mode = #tpu.pipeline_mode<synchronous>, transform_indices = @transform_6, window_bounds = array<i64: 4, 1, 8>}, {pipeline_mode = #tpu.pipeline_mode<synchronous>, transform_indices = @transform_7, window_bounds = array<i64: 4, 1, 8>}, {pipeline_mode = #tpu.pipeline_mode<synchronous>, transform_indices = @transform_8, window_bounds = array<i64: 4, 1, 8>}, {pipeline_mode = #tpu.pipeline_mode<synchronous>, transform_indices = @transform_9, window_bounds = array<i64: 4, 8, 32>}, {pipeline_mode = #tpu.pipeline_mode<synchronous>, transform_indices = @transform_10, window_bounds = array<i64: 1, 32>}, {pipeline_mode = #tpu.pipeline_mode<synchronous>, transform_indices = @transform_11, window_bounds = array<i64: 1, 32>}, {pipeline_mode = #tpu.pipeline_mode<synchronous>, transform_indices = @transform_12, window_bounds = array<i64: 1, 32>}, {pipeline_mode = #tpu.pipeline_mode<synchronous>, transform_indices = @transform_13, window_bounds = array<i64: 32, 128>}, {pipeline_mode = #tpu.pipeline_mode<synchronous>, transform_indices = @transform_14, window_bounds = array<i64: 1, 128>}, {pipeline_mode = #tpu.pipeline_mode<synchronous>, transform_indices = @transform_15, window_bounds = array<i64: 128, 32>}, {pipeline_mode = #tpu.pipeline_mode<synchronous>, transform_indices = @transform_16, window_bounds = array<i64: 1, 32>}, {transform_indices = @transform_17, window_bounds = array<i64: 1, 8, 32>}]} {
    %c0 = arith.constant 0 : index
    %c0_0 = arith.constant 0 : index
    %c0_1 = arith.constant 0 : index
    %0 = vector.load %arg1[%c0, %c0_0, %c0_1] : memref<1x8x32xf32, #tpu.memory_space<vmem>>, vector<1x8x32xf32>
    %1 = vector.shape_cast %0 : vector<1x8x32xf32> to vector<8x32xf32>
    %c0_2 = arith.constant 0 : index
    %c0_3 = arith.constant 0 : index
    %2 = vector.load %arg2[%c0_2, %c0_3] : memref<1x32xf32, #tpu.memory_space<vmem>>, vector<1x32xf32>
    %c0_4 = arith.constant 0 : index
    %c0_5 = arith.constant 0 : index
    %3 = vector.load %arg3[%c0_4, %c0_5] : memref<1x32xf32, #tpu.memory_space<vmem>>, vector<1x32xf32>
    %cst = arith.constant dense<0.000000e+00> : vector<8xf32>
    %4 = vector.multi_reduction <add>, %1, %cst [1] : vector<8x32xf32> to vector<8xf32>
    %5 = vector.shape_cast %4 : vector<8xf32> to vector<8x1xf32>
    %cst_6 = arith.constant 3.200000e+01 : f32
    %6 = vector.broadcast %cst_6 : f32 to vector<8x1xf32>
    %7 = arith.divf %5, %6 : vector<8x1xf32>
    %8 = vector.broadcast %7 : vector<8x1xf32> to vector<8x32xf32>
    %9 = arith.subf %1, %8 : vector<8x32xf32>
    %10 = arith.mulf %9, %9 : vector<8x32xf32>
    %cst_7 = arith.constant dense<0.000000e+00> : vector<8xf32>
    %11 = vector.multi_reduction <add>, %10, %cst_7 [1] : vector<8x32xf32> to vector<8xf32>
    %12 = vector.shape_cast %11 : vector<8xf32> to vector<8x1xf32>
    %cst_8 = arith.constant 3.200000e+01 : f32
    %13 = vector.broadcast %cst_8 : f32 to vector<8x1xf32>
    %14 = arith.divf %12, %13 : vector<8x1xf32>
    %15 = vector.broadcast %7 : vector<8x1xf32> to vector<8x32xf32>
    %16 = arith.subf %1, %15 : vector<8x32xf32>
    %cst_9 = arith.constant 9.99999974E-6 : f32
    %17 = vector.broadcast %cst_9 : f32 to vector<8x1xf32>
    %18 = arith.addf %14, %17 : vector<8x1xf32>
    %19 = math.rsqrt %18 : vector<8x1xf32>
    %20 = vector.broadcast %19 : vector<8x1xf32> to vector<8x32xf32>
    %21 = arith.mulf %16, %20 : vector<8x32xf32>
    %22 = vector.broadcast %2 : vector<1x32xf32> to vector<8x32xf32>
    %23 = arith.mulf %21, %22 : vector<8x32xf32>
    %24 = vector.broadcast %3 : vector<1x32xf32> to vector<8x32xf32>
    %25 = arith.addf %23, %24 : vector<8x32xf32>
    %26 = arith.truncf %25 : vector<8x32xf32> to vector<8x32xbf16>
    %27 = vector.shape_cast %26 : vector<8x32xbf16> to vector<1x8x32xbf16>
    %28 = vector.shape_cast %27 : vector<1x8x32xbf16> to vector<1x8x32xbf16>
    %29 = vector.broadcast %28 : vector<1x8x32xbf16> to vector<4x8x32xbf16>
    %c0_10 = arith.constant 0 : index
    %c0_11 = arith.constant 0 : index
    %c0_12 = arith.constant 0 : index
    %30 = vector.load %arg4[%c0_10, %c0_11, %c0_12] : memref<4x32x8xbf16, #tpu.memory_space<vmem>>, vector<4x32x8xbf16>
    %cst_13 = arith.constant dense<0.000000e+00> : vector<4x8x8xf32>
    %31 = tpu.matmul %29, %30, %cst_13 {dimension_numbers = #tpu.dot_dimension_numbers<[2], [1], [1], [2], [0, 0, 0, 1, 1, 2], [0], [0]>} : vector<4x8x32xbf16>, vector<4x32x8xbf16>, vector<4x8x8xf32> -> vector<4x8x8xf32>
    %c0_14 = arith.constant 0 : index
    %c0_15 = arith.constant 0 : index
    %c0_16 = arith.constant 0 : index
    %32 = vector.load %arg7[%c0_14, %c0_15, %c0_16] : memref<4x1x8xf32, #tpu.memory_space<vmem>>, vector<4x1x8xf32>
    %33 = vector.broadcast %32 : vector<4x1x8xf32> to vector<4x8x8xf32>
    %34 = arith.addf %31, %33 : vector<4x8x8xf32>
    %35 = arith.truncf %34 : vector<4x8x8xf32> to vector<4x8x8xbf16>
    %c0_17 = arith.constant 0 : index
    %c0_18 = arith.constant 0 : index
    %c0_19 = arith.constant 0 : index
    %36 = vector.load %arg5[%c0_17, %c0_18, %c0_19] : memref<4x32x8xbf16, #tpu.memory_space<vmem>>, vector<4x32x8xbf16>
    %cst_20 = arith.constant dense<0.000000e+00> : vector<4x8x8xf32>
    %37 = tpu.matmul %29, %36, %cst_20 {dimension_numbers = #tpu.dot_dimension_numbers<[2], [1], [1], [2], [0, 0, 0, 1, 1, 2], [0], [0]>} : vector<4x8x32xbf16>, vector<4x32x8xbf16>, vector<4x8x8xf32> -> vector<4x8x8xf32>
    %c0_21 = arith.constant 0 : index
    %c0_22 = arith.constant 0 : index
    %c0_23 = arith.constant 0 : index
    %38 = vector.load %arg8[%c0_21, %c0_22, %c0_23] : memref<4x1x8xf32, #tpu.memory_space<vmem>>, vector<4x1x8xf32>
    %39 = vector.broadcast %38 : vector<4x1x8xf32> to vector<4x8x8xf32>
    %40 = arith.addf %37, %39 : vector<4x8x8xf32>
    %41 = arith.truncf %40 : vector<4x8x8xf32> to vector<4x8x8xbf16>
    %c0_24 = arith.constant 0 : index
    %c0_25 = arith.constant 0 : index
    %c0_26 = arith.constant 0 : index
    %42 = vector.load %arg6[%c0_24, %c0_25, %c0_26] : memref<4x32x8xbf16, #tpu.memory_space<vmem>>, vector<4x32x8xbf16>
    %cst_27 = arith.constant dense<0.000000e+00> : vector<4x8x8xf32>
    %43 = tpu.matmul %29, %42, %cst_27 {dimension_numbers = #tpu.dot_dimension_numbers<[2], [1], [1], [2], [0, 0, 0, 1, 1, 2], [0], [0]>} : vector<4x8x32xbf16>, vector<4x32x8xbf16>, vector<4x8x8xf32> -> vector<4x8x8xf32>
    %c0_28 = arith.constant 0 : index
    %c0_29 = arith.constant 0 : index
    %c0_30 = arith.constant 0 : index
    %44 = vector.load %arg9[%c0_28, %c0_29, %c0_30] : memref<4x1x8xf32, #tpu.memory_space<vmem>>, vector<4x1x8xf32>
    %45 = vector.broadcast %44 : vector<4x1x8xf32> to vector<4x8x8xf32>
    %46 = arith.addf %43, %45 : vector<4x8x8xf32>
    %47 = arith.truncf %46 : vector<4x8x8xf32> to vector<4x8x8xbf16>
    %cst_31 = arith.constant dense<0.000000e+00> : vector<4x8x8xf32>
    %48 = tpu.matmul %35, %41, %cst_31 {dimension_numbers = #tpu.dot_dimension_numbers<[2], [2], [1], [1], [0, 0, 0, 1, 1, 1], [0], [0]>} : vector<4x8x8xbf16>, vector<4x8x8xbf16>, vector<4x8x8xf32> -> vector<4x8x8xf32>
    %cst_32 = arith.constant 0.353553385 : f32
    %49 = vector.broadcast %cst_32 : f32 to vector<4x8x8xf32>
    %50 = arith.mulf %48, %49 : vector<4x8x8xf32>
    %cst_33 = arith.constant dense<0xFF800000> : vector<4x8xf32>
    %51 = vector.multi_reduction <maximumf>, %50, %cst_33 [2] : vector<4x8x8xf32> to vector<4x8xf32>
    %52 = vector.shape_cast %51 : vector<4x8xf32> to vector<4x8x1xf32>
    %53 = vector.broadcast %52 : vector<4x8x1xf32> to vector<4x8x8xf32>
    %54 = arith.subf %50, %53 : vector<4x8x8xf32>
    %55 = math.exp %54 : vector<4x8x8xf32>
    %cst_34 = arith.constant dense<0.000000e+00> : vector<4x8xf32>
    %56 = vector.multi_reduction <add>, %55, %cst_34 [2] : vector<4x8x8xf32> to vector<4x8xf32>
    %57 = vector.shape_cast %56 : vector<4x8xf32> to vector<4x8x1xf32>
    %58 = vector.broadcast %57 : vector<4x8x1xf32> to vector<4x8x8xf32>
    %59 = arith.divf %55, %58 : vector<4x8x8xf32>
    %60 = arith.truncf %59 : vector<4x8x8xf32> to vector<4x8x8xbf16>
    %cst_35 = arith.constant dense<0.000000e+00> : vector<4x8x8xf32>
    %61 = tpu.matmul %60, %47, %cst_35 {dimension_numbers = #tpu.dot_dimension_numbers<[2], [1], [1], [2], [0, 0, 0, 1, 1, 2], [0], [0]>} : vector<4x8x8xbf16>, vector<4x8x8xbf16>, vector<4x8x8xf32> -> vector<4x8x8xf32>
    %62 = arith.truncf %61 : vector<4x8x8xf32> to vector<4x8x8xbf16>
    %c0_36 = arith.constant 0 : index
    %c0_37 = arith.constant 0 : index
    %c0_38 = arith.constant 0 : index
    %63 = vector.load %arg10[%c0_36, %c0_37, %c0_38] : memref<4x8x32xbf16, #tpu.memory_space<vmem>>, vector<4x8x32xbf16>
    %cst_39 = arith.constant dense<0.000000e+00> : vector<4x8x32xf32>
    %64 = tpu.matmul %62, %63, %cst_39 {dimension_numbers = #tpu.dot_dimension_numbers<[2], [1], [1], [2], [0, 0, 0, 1, 1, 2], [0], [0]>} : vector<4x8x8xbf16>, vector<4x8x32xbf16>, vector<4x8x32xf32> -> vector<4x8x32xf32>
    %cst_40 = arith.constant dense<0.000000e+00> : vector<8x32xf32>
    %65 = vector.multi_reduction <add>, %64, %cst_40 [0] : vector<4x8x32xf32> to vector<8x32xf32>
    %c0_41 = arith.constant 0 : index
    %c0_42 = arith.constant 0 : index
    %66 = vector.load %arg11[%c0_41, %c0_42] : memref<1x32xf32, #tpu.memory_space<vmem>>, vector<1x32xf32>
    %67 = vector.broadcast %66 : vector<1x32xf32> to vector<8x32xf32>
    %68 = arith.addf %65, %67 : vector<8x32xf32>
    %69 = arith.addf %1, %68 : vector<8x32xf32>
    %c0_43 = arith.constant 0 : index
    %c0_44 = arith.constant 0 : index
    %70 = vector.load %arg12[%c0_43, %c0_44] : memref<1x32xf32, #tpu.memory_space<vmem>>, vector<1x32xf32>
    %c0_45 = arith.constant 0 : index
    %c0_46 = arith.constant 0 : index
    %71 = vector.load %arg13[%c0_45, %c0_46] : memref<1x32xf32, #tpu.memory_space<vmem>>, vector<1x32xf32>
    %cst_47 = arith.constant dense<0.000000e+00> : vector<8xf32>
    %72 = vector.multi_reduction <add>, %69, %cst_47 [1] : vector<8x32xf32> to vector<8xf32>
    %73 = vector.shape_cast %72 : vector<8xf32> to vector<8x1xf32>
    %cst_48 = arith.constant 3.200000e+01 : f32
    %74 = vector.broadcast %cst_48 : f32 to vector<8x1xf32>
    %75 = arith.divf %73, %74 : vector<8x1xf32>
    %76 = vector.broadcast %75 : vector<8x1xf32> to vector<8x32xf32>
    %77 = arith.subf %69, %76 : vector<8x32xf32>
    %78 = arith.mulf %77, %77 : vector<8x32xf32>
    %cst_49 = arith.constant dense<0.000000e+00> : vector<8xf32>
    %79 = vector.multi_reduction <add>, %78, %cst_49 [1] : vector<8x32xf32> to vector<8xf32>
    %80 = vector.shape_cast %79 : vector<8xf32> to vector<8x1xf32>
    %cst_50 = arith.constant 3.200000e+01 : f32
    %81 = vector.broadcast %cst_50 : f32 to vector<8x1xf32>
    %82 = arith.divf %80, %81 : vector<8x1xf32>
    %83 = vector.broadcast %75 : vector<8x1xf32> to vector<8x32xf32>
    %84 = arith.subf %69, %83 : vector<8x32xf32>
    %cst_51 = arith.constant 9.99999974E-6 : f32
    %85 = vector.broadcast %cst_51 : f32 to vector<8x1xf32>
    %86 = arith.addf %82, %85 : vector<8x1xf32>
    %87 = math.rsqrt %86 : vector<8x1xf32>
    %88 = vector.broadcast %87 : vector<8x1xf32> to vector<8x32xf32>
    %89 = arith.mulf %84, %88 : vector<8x32xf32>
    %90 = vector.broadcast %70 : vector<1x32xf32> to vector<8x32xf32>
    %91 = arith.mulf %89, %90 : vector<8x32xf32>
    %92 = vector.broadcast %71 : vector<1x32xf32> to vector<8x32xf32>
    %93 = arith.addf %91, %92 : vector<8x32xf32>
    %94 = arith.truncf %93 : vector<8x32xf32> to vector<8x32xbf16>
    %c0_52 = arith.constant 0 : index
    %c0_53 = arith.constant 0 : index
    %95 = vector.load %arg14[%c0_52, %c0_53] : memref<32x128xbf16, #tpu.memory_space<vmem>>, vector<32x128xbf16>
    %cst_54 = arith.constant dense<0.000000e+00> : vector<8x128xf32>
    %96 = tpu.matmul %94, %95, %cst_54 {dimension_numbers = #tpu.dot_dimension_numbers<[1], [0], [0], [1], [0, 0, 1, 1], [], []>} : vector<8x32xbf16>, vector<32x128xbf16>, vector<8x128xf32> -> vector<8x128xf32>
    %c0_55 = arith.constant 0 : index
    %c0_56 = arith.constant 0 : index
    %97 = vector.load %arg15[%c0_55, %c0_56] : memref<1x128xf32, #tpu.memory_space<vmem>>, vector<1x128xf32>
    %98 = vector.broadcast %97 : vector<1x128xf32> to vector<8x128xf32>
    %99 = arith.addf %96, %98 : vector<8x128xf32>
    %cst_57 = arith.constant 5.000000e-01 : f32
    %100 = vector.broadcast %cst_57 : f32 to vector<8x128xf32>
    %101 = arith.mulf %100, %99 : vector<8x128xf32>
    %cst_58 = arith.constant 0.707106769 : f32
    %102 = vector.broadcast %cst_58 : f32 to vector<8x128xf32>
    %103 = arith.mulf %99, %102 : vector<8x128xf32>
    %104 = math.erf %103 : vector<8x128xf32>
    %cst_59 = arith.constant 1.000000e+00 : f32
    %105 = vector.broadcast %cst_59 : f32 to vector<8x128xf32>
    %106 = arith.addf %105, %104 : vector<8x128xf32>
    %107 = arith.mulf %101, %106 : vector<8x128xf32>
    %108 = arith.truncf %107 : vector<8x128xf32> to vector<8x128xbf16>
    %c0_60 = arith.constant 0 : index
    %c0_61 = arith.constant 0 : index
    %109 = vector.load %arg16[%c0_60, %c0_61] : memref<128x32xbf16, #tpu.memory_space<vmem>>, vector<128x32xbf16>
    %cst_62 = arith.constant dense<0.000000e+00> : vector<8x32xf32>
    %110 = tpu.matmul %108, %109, %cst_62 {dimension_numbers = #tpu.dot_dimension_numbers<[1], [0], [0], [1], [0, 0, 1, 1], [], []>} : vector<8x128xbf16>, vector<128x32xbf16>, vector<8x32xf32> -> vector<8x32xf32>
    %c0_63 = arith.constant 0 : index
    %c0_64 = arith.constant 0 : index
    %111 = vector.load %arg17[%c0_63, %c0_64] : memref<1x32xf32, #tpu.memory_space<vmem>>, vector<1x32xf32>
    %112 = vector.broadcast %111 : vector<1x32xf32> to vector<8x32xf32>
    %113 = arith.addf %110, %112 : vector<8x32xf32>
    %114 = arith.addf %69, %113 : vector<8x32xf32>
    %c0_65 = arith.constant 0 : index
    %c0_66 = arith.constant 0 : index
    %c0_67 = arith.constant 0 : index
    %115 = vector.load %arg18[%c0_65, %c0_66, %c0_67] : memref<1x8x32xf32, #tpu.memory_space<vmem>>, vector<1x8x32xf32>
    %116 = vector.shape_cast %115 : vector<1x8x32xf32> to vector<8x32xf32>
    %117 = vector.shape_cast %114 : vector<8x32xf32> to vector<1x8x32xf32>
    tpu.vector_store %arg18[%c0_65, %c0_66, %c0_67], %117 {strides = array<i32>} : memref<1x8x32xf32, #tpu.memory_space<vmem>>, vector<1x8x32xf32>,
    return
  }
  func.func @transform_0(%arg0: i32) -> (i32, i32, i32) {
    %c0_i32 = arith.constant 0 : i32
    %c0_i32_0 = arith.constant 0 : i32
    %c0_i32_1 = arith.constant 0 : i32
    return %arg0, %c0_i32, %c0_i32_0 : i32, i32, i32
  }
  func.func @transform_1(%arg0: i32) -> (i32, i32) {
    %c0_i32 = arith.constant 0 : i32
    %c0_i32_0 = arith.constant 0 : i32
    %c0_i32_1 = arith.constant 0 : i32
    return %c0_i32, %c0_i32_0 : i32, i32
  }
  func.func @transform_2(%arg0: i32) -> (i32, i32) {
    %c0_i32 = arith.constant 0 : i32
    %c0_i32_0 = arith.constant 0 : i32
    %c0_i32_1 = arith.constant 0 : i32
    return %c0_i32, %c0_i32_0 : i32, i32
  }
  func.func @transform_3(%arg0: i32) -> (i32, i32, i32) {
    %c0_i32 = arith.constant 0 : i32
    %c0_i32_0 = arith.constant 0 : i32
    %c0_i32_1 = arith.constant 0 : i32
    %c0_i32_2 = arith.constant 0 : i32
    return %c0_i32, %c0_i32_0, %c0_i32_1 : i32, i32, i32
  }
  func.func @transform_4(%arg0: i32) -> (i32, i32, i32) {
    %c0_i32 = arith.constant 0 : i32
    %c0_i32_0 = arith.constant 0 : i32
    %c0_i32_1 = arith.constant 0 : i32
    %c0_i32_2 = arith.constant 0 : i32
    return %c0_i32, %c0_i32_0, %c0_i32_1 : i32, i32, i32
  }
  func.func @transform_5(%arg0: i32) -> (i32, i32, i32) {
    %c0_i32 = arith.constant 0 : i32
    %c0_i32_0 = arith.constant 0 : i32
    %c0_i32_1 = arith.constant 0 : i32
    %c0_i32_2 = arith.constant 0 : i32
    return %c0_i32, %c0_i32_0, %c0_i32_1 : i32, i32, i32
  }
  func.func @transform_6(%arg0: i32) -> (i32, i32, i32) {
    %c0_i32 = arith.constant 0 : i32
    %c0_i32_0 = arith.constant 0 : i32
    %c0_i32_1 = arith.constant 0 : i32
    %c0_i32_2 = arith.constant 0 : i32
    return %c0_i32, %c0_i32_0, %c0_i32_1 : i32, i32, i32
  }
  func.func @transform_7(%arg0: i32) -> (i32, i32, i32) {
    %c0_i32 = arith.constant 0 : i32
    %c0_i32_0 = arith.constant 0 : i32
    %c0_i32_1 = arith.constant 0 : i32
    %c0_i32_2 = arith.constant 0 : i32
    return %c0_i32, %c0_i32_0, %c0_i32_1 : i32, i32, i32
  }
  func.func @transform_8(%arg0: i32) -> (i32, i32, i32) {
    %c0_i32 = arith.constant 0 : i32
    %c0_i32_0 = arith.constant 0 : i32
    %c0_i32_1 = arith.constant 0 : i32
    %c0_i32_2 = arith.constant 0 : i32
    return %c0_i32, %c0_i32_0, %c0_i32_1 : i32, i32, i32
  }
  func.func @transform_9(%arg0: i32) -> (i32, i32, i32) {
    %c0_i32 = arith.constant 0 : i32
    %c0_i32_0 = arith.constant 0 : i32
    %c0_i32_1 = arith.constant 0 : i32
    %c0_i32_2 = arith.constant 0 : i32
    return %c0_i32, %c0_i32_0, %c0_i32_1 : i32, i32, i32
  }
  func.func @transform_10(%arg0: i32) -> (i32, i32) {
    %c0_i32 = arith.constant 0 : i32
    %c0_i32_0 = arith.constant 0 : i32
    %c0_i32_1 = arith.constant 0 : i32
    return %c0_i32, %c0_i32_0 : i32, i32
  }
  func.func @transform_11(%arg0: i32) -> (i32, i32) {
    %c0_i32 = arith.constant 0 : i32
    %c0_i32_0 = arith.constant 0 : i32
    %c0_i32_1 = arith.constant 0 : i32
    return %c0_i32, %c0_i32_0 : i32, i32
  }
  func.func @transform_12(%arg0: i32) -> (i32, i32) {
    %c0_i32 = arith.constant 0 : i32
    %c0_i32_0 = arith.constant 0 : i32
    %c0_i32_1 = arith.constant 0 : i32
    return %c0_i32, %c0_i32_0 : i32, i32
  }
  func.func @transform_13(%arg0: i32) -> (i32, i32) {
    %c0_i32 = arith.constant 0 : i32
    %c0_i32_0 = arith.constant 0 : i32
    %c0_i32_1 = arith.constant 0 : i32
    return %c0_i32, %c0_i32_0 : i32, i32
  }
  func.func @transform_14(%arg0: i32) -> (i32, i32) {
    %c0_i32 = arith.constant 0 : i32
    %c0_i32_0 = arith.constant 0 : i32
    %c0_i32_1 = arith.constant 0 : i32
    return %c0_i32, %c0_i32_0 : i32, i32
  }
  func.func @transform_15(%arg0: i32) -> (i32, i32) {
    %c0_i32 = arith.constant 0 : i32
    %c0_i32_0 = arith.constant 0 : i32
    %c0_i32_1 = arith.constant 0 : i32
    return %c0_i32, %c0_i32_0 : i32, i32
  }
  func.func @transform_16(%arg0: i32) -> (i32, i32) {
    %c0_i32 = arith.constant 0 : i32
    %c0_i32_0 = arith.constant 0 : i32
    %c0_i32_1 = arith.constant 0 : i32
    return %c0_i32, %c0_i32_0 : i32, i32
  }
  func.func @transform_17(%arg0: i32) -> (i32, i32, i32) {
    %c0_i32 = arith.constant 0 : i32
    %c0_i32_0 = arith.constant 0 : i32
    %c0_i32_1 = arith.constant 0 : i32
    return %arg0, %c0_i32, %c0_i32_0 : i32, i32, i32
  }
}

module attributes {stable_mosaic.version = 11 : i64} {
  func.func @block3d_kernel(%arg0: i32, %arg1: memref<1x8x32xf32, #tpu.memory_space<vmem>>, %arg2: memref<1x32xf32, #tpu.memory_space<vmem>>, %arg3: memref<1x32xf32, #tpu.memory_space<vmem>>, %arg4: memref<4x32x8xbf16, #tpu.memory_space<vmem>>, %arg5: memref<4x32x8xbf16, #tpu.memory_space<vmem>>, %arg6: memref<4x32x8xbf16, #tpu.memory_space<vmem>>, %arg7: memref<4x1x8xf32, #tpu.memory_space<vmem>>, %arg8: memref<4x1x8xf32, #tpu.memory_space<vmem>>, %arg9: memref<4x1x8xf32, #tpu.memory_space<vmem>>, %arg10: memref<4x8x32xbf16, #tpu.memory_space<vmem>>, %arg11: memref<1x32xf32, #tpu.memory_space<vmem>>, %arg12: memref<1x32xf32, #tpu.memory_space<vmem>>, %arg13: memref<1x32xf32, #tpu.memory_space<vmem>>, %arg14: memref<32x128xbf16, #tpu.memory_space<vmem>>, %arg15: memref<1x128xf32, #tpu.memory_space<vmem>>, %arg16: memref<128x32xbf16, #tpu.memory_space<vmem>>, %arg17: memref<1x32xf32, #tpu.memory_space<vmem>>, %arg18: memref<1x8x32xf32, #tpu.memory_space<vmem>>) attributes {dimension_semantics = [#tpu.dimension_semantics<parallel>], iteration_bounds = array<i64: 2>, scalar_prefetch = 0 : i64, scratch_operands = 0 : i64, tpu.core_type = #tpu.core_type<tc>, window_params = [{transform_indices = @transform_0, window_bounds = array<i64: 1, 8, 32>}, {pipeline_mode = #tpu.pipeline_mode<synchronous>, transform_indices = @transform_1, window_bounds = array<i64: 1, 32>}, {pipeline_mode = #tpu.pipeline_mode<synchronous>, transform_indices = @transform_2, window_bounds = array<i64: 1, 32>}, {pipeline_mode = #tpu.pipeline_mode<synchronous>, transform_indices = @transform_3, window_bounds = array<i64: 4, 32, 8>}, {pipeline_mode = #tpu.pipeline_mode<synchronous>, transform_indices = @transform_4, window_bounds = array<i64: 4, 32, 8>}, {pipeline_mode = #tpu.pipeline_mode<synchronous>, transform_indices = @transform_5, window_bounds = array<i64: 4, 32, 8>}, {pipeline_mode = #tpu.pipeline_mode<synchronous>, transform_indices = @transform_6, window_bounds = array<i64: 4, 1, 8>}, {pipeline_mode = #tpu.pipeline_mode<synchronous>, transform_indices = @transform_7, window_bounds = array<i64: 4, 1, 8>}, {pipeline_mode = #tpu.pipeline_mode<synchronous>, transform_indices = @transform_8, window_bounds = array<i64: 4, 1, 8>}, {pipeline_mode = #tpu.pipeline_mode<synchronous>, transform_indices = @transform_9, window_bounds = array<i64: 4, 8, 32>}, {pipeline_mode = #tpu.pipeline_mode<synchronous>, transform_indices = @transform_10, window_bounds = array<i64: 1, 32>}, {pipeline_mode = #tpu.pipeline_mode<synchronous>, transform_indices = @transform_11, window_bounds = array<i64: 1, 32>}, {pipeline_mode = #tpu.pipeline_mode<synchronous>, transform_indices = @transform_12, window_bounds = array<i64: 1, 32>}, {pipeline_mode = #tpu.pipeline_mode<synchronous>, transform_indices = @transform_13, window_bounds = array<i64: 32, 128>}, {pipeline_mode = #tpu.pipeline_mode<synchronous>, transform_indices = @transform_14, window_bounds = array<i64: 1, 128>}, {pipeline_mode = #tpu.pipeline_mode<synchronous>, transform_indices = @transform_15, window_bounds = array<i64: 128, 32>}, {pipeline_mode = #tpu.pipeline_mode<synchronous>, transform_indices = @transform_16, window_bounds = array<i64: 1, 32>}, {transform_indices = @transform_17, window_bounds = array<i64: 1, 8, 32>}]} {
    %c0 = arith.constant 0 : index
    %c0_0 = arith.constant 0 : index
    %c0_1 = arith.constant 0 : index
    %0 = vector.load %arg1[%c0, %c0_0, %c0_1] : memref<1x8x32xf32, #tpu.memory_space<vmem>>, vector<1x8x32xf32>
    %1 = vector.shape_cast %0 : vector<1x8x32xf32> to vector<8x32xf32>
    %c0_2 = arith.constant 0 : index
    %c0_3 = arith.constant 0 : index
    %2 = vector.load %arg2[%c0_2, %c0_3] : memref<1x32xf32, #tpu.memory_space<vmem>>, vector<1x32xf32>
    %c0_4 = arith.constant 0 : index
    %c0_5 = arith.constant 0 : index
    %3 = vector.load %arg3[%c0_4, %c0_5] : memref<1x32xf32, #tpu.memory_space<vmem>>, vector<1x32xf32>
    %cst = arith.constant dense<0.000000e+00> : vector<8xf32>
    %4 = vector.multi_reduction <add>, %1, %cst [1] : vector<8x32xf32> to vector<8xf32>
    %5 = vector.shape_cast %4 : vector<8xf32> to vector<8x1xf32>
    %cst_6 = arith.constant 3.200000e+01 : f32
    %6 = vector.broadcast %cst_6 : f32 to vector<8x1xf32>
    %7 = arith.divf %5, %6 : vector<8x1xf32>
    %8 = vector.broadcast %7 : vector<8x1xf32> to vector<8x32xf32>
    %9 = arith.subf %1, %8 : vector<8x32xf32>
    %10 = arith.mulf %9, %9 : vector<8x32xf32>
    %cst_7 = arith.constant dense<0.000000e+00> : vector<8xf32>
    %11 = vector.multi_reduction <add>, %10, %cst_7 [1] : vector<8x32xf32> to vector<8xf32>
    %12 = vector.shape_cast %11 : vector<8xf32> to vector<8x1xf32>
    %cst_8 = arith.constant 3.200000e+01 : f32
    %13 = vector.broadcast %cst_8 : f32 to vector<8x1xf32>
    %14 = arith.divf %12, %13 : vector<8x1xf32>
    %15 = vector.broadcast %7 : vector<8x1xf32> to vector<8x32xf32>
    %16 = arith.subf %1, %15 : vector<8x32xf32>
    %cst_9 = arith.constant 9.99999974E-6 : f32
    %17 = vector.broadcast %cst_9 : f32 to vector<8x1xf32>
    %18 = arith.addf %14, %17 : vector<8x1xf32>
    %19 = math.rsqrt %18 : vector<8x1xf32>
    %20 = vector.broadcast %19 : vector<8x1xf32> to vector<8x32xf32>
    %21 = arith.mulf %16, %20 : vector<8x32xf32>
    %22 = vector.broadcast %2 : vector<1x32xf32> to vector<8x32xf32>
    %23 = arith.mulf %21, %22 : vector<8x32xf32>
    %24 = vector.broadcast %3 : vector<1x32xf32> to vector<8x32xf32>
    %25 = arith.addf %23, %24 : vector<8x32xf32>
    %26 = arith.truncf %25 : vector<8x32xf32> to vector<8x32xbf16>
    %27 = vector.shape_cast %26 : vector<8x32xbf16> to vector<1x8x32xbf16>
    %28 = vector.shape_cast %27 : vector<1x8x32xbf16> to vector<1x8x32xbf16>
    %29 = vector.broadcast %28 : vector<1x8x32xbf16> to vector<4x8x32xbf16>
    %c0_10 = arith.constant 0 : index
    %c0_11 = arith.constant 0 : index
    %c0_12 = arith.constant 0 : index
    %30 = vector.load %arg4[%c0_10, %c0_11, %c0_12] : memref<4x32x8xbf16, #tpu.memory_space<vmem>>, vector<4x32x8xbf16>
    %cst_13 = arith.constant dense<0.000000e+00> : vector<4x8x8xf32>
    %31 = tpu.matmul %29, %30, %cst_13 {dimension_numbers = #tpu.dot_dimension_numbers<[2], [1], [1], [2], [0, 0, 0, 1, 1, 2], [0], [0]>} : vector<4x8x32xbf16>, vector<4x32x8xbf16>, vector<4x8x8xf32> -> vector<4x8x8xf32>
    %c0_14 = arith.constant 0 : index
    %c0_15 = arith.constant 0 : index
    %c0_16 = arith.constant 0 : index
    %32 = vector.load %arg7[%c0_14, %c0_15, %c0_16] : memref<4x1x8xf32, #tpu.memory_space<vmem>>, vector<4x1x8xf32>
    %33 = vector.broadcast %32 : vector<4x1x8xf32> to vector<4x8x8xf32>
    %34 = arith.addf %31, %33 : vector<4x8x8xf32>
    %35 = arith.truncf %34 : vector<4x8x8xf32> to vector<4x8x8xbf16>
    %c0_17 = arith.constant 0 : index
    %c0_18 = arith.constant 0 : index
    %c0_19 = arith.constant 0 : index
    %36 = vector.load %arg5[%c0_17, %c0_18, %c0_19] : memref<4x32x8xbf16, #tpu.memory_space<vmem>>, vector<4x32x8xbf16>
    %cst_20 = arith.constant dense<0.000000e+00> : vector<4x8x8xf32>
    %37 = tpu.matmul %29, %36, %cst_20 {dimension_numbers = #tpu.dot_dimension_numbers<[2], [1], [1], [2], [0, 0, 0, 1, 1, 2], [0], [0]>} : vector<4x8x32xbf16>, vector<4x32x8xbf16>, vector<4x8x8xf32> -> vector<4x8x8xf32>
    %c0_21 = arith.constant 0 : index
    %c0_22 = arith.constant 0 : index
    %c0_23 = arith.constant 0 : index
    %38 = vector.load %arg8[%c0_21, %c0_22, %c0_23] : memref<4x1x8xf32, #tpu.memory_space<vmem>>, vector<4x1x8xf32>
    %39 = vector.broadcast %38 : vector<4x1x8xf32> to vector<4x8x8xf32>
    %40 = arith.addf %37, %39 : vector<4x8x8xf32>
    %41 = arith.truncf %40 : vector<4x8x8xf32> to vector<4x8x8xbf16>
    %c0_24 = arith.constant 0 : index
    %c0_25 = arith.constant 0 : index
    %c0_26 = arith.constant 0 : index
    %42 = vector.load %arg6[%c0_24, %c0_25, %c0_26] : memref<4x32x8xbf16, #tpu.memory_space<vmem>>, vector<4x32x8xbf16>
    %cst_27 = arith.constant dense<0.000000e+00> : vector<4x8x8xf32>
    %43 = tpu.matmul %29, %42, %cst_27 {dimension_numbers = #tpu.dot_dimension_numbers<[2], [1], [1], [2], [0, 0, 0, 1, 1, 2], [0], [0]>} : vector<4x8x32xbf16>, vector<4x32x8xbf16>, vector<4x8x8xf32> -> vector<4x8x8xf32>
    %c0_28 = arith.constant 0 : index
    %c0_29 = arith.constant 0 : index
    %c0_30 = arith.constant 0 : index
    %44 = vector.load %arg9[%c0_28, %c0_29, %c0_30] : memref<4x1x8xf32, #tpu.memory_space<vmem>>, vector<4x1x8xf32>
    %45 = vector.broadcast %44 : vector<4x1x8xf32> to vector<4x8x8xf32>
    %46 = arith.addf %43, %45 : vector<4x8x8xf32>
    %47 = arith.truncf %46 : vector<4x8x8xf32> to vector<4x8x8xbf16>
    %cst_31 = arith.constant dense<0.000000e+00> : vector<4x8x8xf32>
    %48 = tpu.matmul %35, %41, %cst_31 {dimension_numbers = #tpu.dot_dimension_numbers<[2], [2], [1], [1], [0, 0, 0, 1, 1, 1], [0], [0]>} : vector<4x8x8xbf16>, vector<4x8x8xbf16>, vector<4x8x8xf32> -> vector<4x8x8xf32>
    %cst_32 = arith.constant 0.353553385 : f32
    %49 = vector.broadcast %cst_32 : f32 to vector<4x8x8xf32>
    %50 = arith.mulf %48, %49 : vector<4x8x8xf32>
    %cst_33 = arith.constant dense<0xFF800000> : vector<4x8xf32>
    %51 = vector.multi_reduction <maximumf>, %50, %cst_33 [2] : vector<4x8x8xf32> to vector<4x8xf32>
    %52 = vector.shape_cast %51 : vector<4x8xf32> to vector<4x8x1xf32>
    %53 = vector.broadcast %52 : vector<4x8x1xf32> to vector<4x8x8xf32>
    %54 = arith.subf %50, %53 : vector<4x8x8xf32>
    %55 = math.exp %54 : vector<4x8x8xf32>
    %cst_34 = arith.constant dense<0.000000e+00> : vector<4x8xf32>
    %56 = vector.multi_reduction <add>, %55, %cst_34 [2] : vector<4x8x8xf32> to vector<4x8xf32>
    %57 = vector.shape_cast %56 : vector<4x8xf32> to vector<4x8x1xf32>
    %58 = vector.broadcast %57 : vector<4x8x1xf32> to vector<4x8x8xf32>
    %59 = arith.divf %55, %58 : vector<4x8x8xf32>
    %60 = arith.truncf %59 : vector<4x8x8xf32> to vector<4x8x8xbf16>
    %cst_35 = arith.constant dense<0.000000e+00> : vector<4x8x8xf32>
    %61 = tpu.matmul %60, %47, %cst_35 {dimension_numbers = #tpu.dot_dimension_numbers<[2], [1], [1], [2], [0, 0, 0, 1, 1, 2], [0], [0]>} : vector<4x8x8xbf16>, vector<4x8x8xbf16>, vector<4x8x8xf32> -> vector<4x8x8xf32>
    %62 = arith.truncf %61 : vector<4x8x8xf32> to vector<4x8x8xbf16>
    %c0_36 = arith.constant 0 : index
    %c0_37 = arith.constant 0 : index
    %c0_38 = arith.constant 0 : index
    %63 = vector.load %arg10[%c0_36, %c0_37, %c0_38] : memref<4x8x32xbf16, #tpu.memory_space<vmem>>, vector<4x8x32xbf16>
    %cst_39 = arith.constant dense<0.000000e+00> : vector<4x8x32xf32>
    %64 = tpu.matmul %62, %63, %cst_39 {dimension_numbers = #tpu.dot_dimension_numbers<[2], [1], [1], [2], [0, 0, 0, 1, 1, 2], [0], [0]>} : vector<4x8x8xbf16>, vector<4x8x32xbf16>, vector<4x8x32xf32> -> vector<4x8x32xf32>
    %cst_40 = arith.constant dense<0.000000e+00> : vector<8x32xf32>
    %65 = vector.multi_reduction <add>, %64, %cst_40 [0] : vector<4x8x32xf32> to vector<8x32xf32>
    %c0_41 = arith.constant 0 : index
    %c0_42 = arith.constant 0 : index
    %66 = vector.load %arg11[%c0_41, %c0_42] : memref<1x32xf32, #tpu.memory_space<vmem>>, vector<1x32xf32>
    %67 = vector.broadcast %66 : vector<1x32xf32> to vector<8x32xf32>
    %68 = arith.addf %65, %67 : vector<8x32xf32>
    %69 = arith.addf %1, %68 : vector<8x32xf32>
    %c0_43 = arith.constant 0 : index
    %c0_44 = arith.constant 0 : index
    %70 = vector.load %arg12[%c0_43, %c0_44] : memref<1x32xf32, #tpu.memory_space<vmem>>, vector<1x32xf32>
    %c0_45 = arith.constant 0 : index
    %c0_46 = arith.constant 0 : index
    %71 = vector.load %arg13[%c0_45, %c0_46] : memref<1x32xf32, #tpu.memory_space<vmem>>, vector<1x32xf32>
    %cst_47 = arith.constant dense<0.000000e+00> : vector<8xf32>
    %72 = vector.multi_reduction <add>, %69, %cst_47 [1] : vector<8x32xf32> to vector<8xf32>
    %73 = vector.shape_cast %72 : vector<8xf32> to vector<8x1xf32>
    %cst_48 = arith.constant 3.200000e+01 : f32
    %74 = vector.broadcast %cst_48 : f32 to vector<8x1xf32>
    %75 = arith.divf %73, %74 : vector<8x1xf32>
    %76 = vector.broadcast %75 : vector<8x1xf32> to vector<8x32xf32>
    %77 = arith.subf %69, %76 : vector<8x32xf32>
    %78 = arith.mulf %77, %77 : vector<8x32xf32>
    %cst_49 = arith.constant dense<0.000000e+00> : vector<8xf32>
    %79 = vector.multi_reduction <add>, %78, %cst_49 [1] : vector<8x32xf32> to vector<8xf32>
    %80 = vector.shape_cast %79 : vector<8xf32> to vector<8x1xf32>
    %cst_50 = arith.constant 3.200000e+01 : f32
    %81 = vector.broadcast %cst_50 : f32 to vector<8x1xf32>
    %82 = arith.divf %80, %81 : vector<8x1xf32>
    %83 = vector.broadcast %75 : vector<8x1xf32> to vector<8x32xf32>
    %84 = arith.subf %69, %83 : vector<8x32xf32>
    %cst_51 = arith.constant 9.99999974E-6 : f32
    %85 = vector.broadcast %cst_51 : f32 to vector<8x1xf32>
    %86 = arith.addf %82, %85 : vector<8x1xf32>
    %87 = math.rsqrt %86 : vector<8x1xf32>
    %88 = vector.broadcast %87 : vector<8x1xf32> to vector<8x32xf32>
    %89 = arith.mulf %84, %88 : vector<8x32xf32>
    %90 = vector.broadcast %70 : vector<1x32xf32> to vector<8x32xf32>
    %91 = arith.mulf %89, %90 : vector<8x32xf32>
    %92 = vector.broadcast %71 : vector<1x32xf32> to vector<8x32xf32>
    %93 = arith.addf %91, %92 : vector<8x32xf32>
    %94 = arith.truncf %93 : vector<8x32xf32> to vector<8x32xbf16>
    %c0_52 = arith.constant 0 : index
    %c0_53 = arith.constant 0 : index
    %95 = vector.load %arg14[%c0_52, %c0_53] : memref<32x128xbf16, #tpu.memory_space<vmem>>, vector<32x128xbf16>
    %cst_54 = arith.constant dense<0.000000e+00> : vector<8x128xf32>
    %96 = tpu.matmul %94, %95, %cst_54 {dimension_numbers = #tpu.dot_dimension_numbers<[1], [0], [0], [1], [0, 0, 1, 1], [], []>} : vector<8x32xbf16>, vector<32x128xbf16>, vector<8x128xf32> -> vector<8x128xf32>
    %c0_55 = arith.constant 0 : index
    %c0_56 = arith.constant 0 : index
    %97 = vector.load %arg15[%c0_55, %c0_56] : memref<1x128xf32, #tpu.memory_space<vmem>>, vector<1x128xf32>
    %98 = vector.broadcast %97 : vector<1x128xf32> to vector<8x128xf32>
    %99 = arith.addf %96, %98 : vector<8x128xf32>
    %cst_57 = arith.constant 5.000000e-01 : f32
    %100 = vector.broadcast %cst_57 : f32 to vector<8x128xf32>
    %101 = arith.mulf %100, %99 : vector<8x128xf32>
    %cst_58 = arith.constant 0.707106769 : f32
    %102 = vector.broadcast %cst_58 : f32 to vector<8x128xf32>
    %103 = arith.mulf %99, %102 : vector<8x128xf32>
    %104 = math.erf %103 : vector<8x128xf32>
    %cst_59 = arith.constant 1.000000e+00 : f32
    %105 = vector.broadcast %cst_59 : f32 to vector<8x128xf32>
    %106 = arith.addf %105, %104 : vector<8x128xf32>
    %107 = arith.mulf %101, %106 : vector<8x128xf32>
    %108 = arith.truncf %107 : vector<8x128xf32> to vector<8x128xbf16>
    %c0_60 = arith.constant 0 : index
    %c0_61 = arith.constant 0 : index
    %109 = vector.load %arg16[%c0_60, %c0_61] : memref<128x32xbf16, #tpu.memory_space<vmem>>, vector<128x32xbf16>
    %cst_62 = arith.constant dense<0.000000e+00> : vector<8x32xf32>
    %110 = tpu.matmul %108, %109, %cst_62 {dimension_numbers = #tpu.dot_dimension_numbers<[1], [0], [0], [1], [0, 0, 1, 1], [], []>} : vector<8x128xbf16>, vector<128x32xbf16>, vector<8x32xf32> -> vector<8x32xf32>
    %c0_63 = arith.constant 0 : index
    %c0_64 = arith.constant 0 : index
    %111 = vector.load %arg17[%c0_63, %c0_64] : memref<1x32xf32, #tpu.memory_space<vmem>>, vector<1x32xf32>
    %112 = vector.broadcast %111 : vector<1x32xf32> to vector<8x32xf32>
    %113 = arith.addf %110, %112 : vector<8x32xf32>
    %114 = arith.addf %69, %113 : vector<8x32xf32>
    %c0_65 = arith.constant 0 : index
    %c0_66 = arith.constant 0 : index
    %c0_67 = arith.constant 0 : index
    %115 = vector.load %arg18[%c0_65, %c0_66, %c0_67] : memref<1x8x32xf32, #tpu.memory_space<vmem>>, vector<1x8x32xf32>
    %116 = vector.shape_cast %115 : vector<1x8x32xf32> to vector<8x32xf32>
    %117 = vector.shape_cast %114 : vector<8x32xf32> to vector<1x8x32xf32>
    tpu.vector_store %arg18[%c0_65, %c0_66, %c0_67], %117 {strides = array<i32>} : memref<1x8x32xf32, #tpu.memory_space<vmem>>, vector<1x8x32xf32>,
    return
  }
  func.func @transform_0(%arg0: i32) -> (i32, i32, i32) {
    %c0_i32 = arith.constant 0 : i32
    %c0_i32_0 = arith.constant 0 : i32
    %c0_i32_1 = arith.constant 0 : i32
    return %arg0, %c0_i32, %c0_i32_0 : i32, i32, i32
  }
  func.func @transform_1(%arg0: i32) -> (i32, i32) {
    %c0_i32 = arith.constant 0 : i32
    %c0_i32_0 = arith.constant 0 : i32
    %c0_i32_1 = arith.constant 0 : i32
    return %c0_i32, %c0_i32_0 : i32, i32
  }
  func.func @transform_2(%arg0: i32) -> (i32, i32) {
    %c0_i32 = arith.constant 0 : i32
    %c0_i32_0 = arith.constant 0 : i32
    %c0_i32_1 = arith.constant 0 : i32
    return %c0_i32, %c0_i32_0 : i32, i32
  }
  func.func @transform_3(%arg0: i32) -> (i32, i32, i32) {
    %c0_i32 = arith.constant 0 : i32
    %c0_i32_0 = arith.constant 0 : i32
    %c0_i32_1 = arith.constant 0 : i32
    %c0_i32_2 = arith.constant 0 : i32
    return %c0_i32, %c0_i32_0, %c0_i32_1 : i32, i32, i32
  }
  func.func @transform_4(%arg0: i32) -> (i32, i32, i32) {
    %c0_i32 = arith.constant 0 : i32
    %c0_i32_0 = arith.constant 0 : i32
    %c0_i32_1 = arith.constant 0 : i32
    %c0_i32_2 = arith.constant 0 : i32
    return %c0_i32, %c0_i32_0, %c0_i32_1 : i32, i32, i32
  }
  func.func @transform_5(%arg0: i32) -> (i32, i32, i32) {
    %c0_i32 = arith.constant 0 : i32
    %c0_i32_0 = arith.constant 0 : i32
    %c0_i32_1 = arith.constant 0 : i32
    %c0_i32_2 = arith.constant 0 : i32
    return %c0_i32, %c0_i32_0, %c0_i32_1 : i32, i32, i32
  }
  func.func @transform_6(%arg0: i32) -> (i32, i32, i32) {
    %c0_i32 = arith.constant 0 : i32
    %c0_i32_0 = arith.constant 0 : i32
    %c0_i32_1 = arith.constant 0 : i32
    %c0_i32_2 = arith.constant 0 : i32
    return %c0_i32, %c0_i32_0, %c0_i32_1 : i32, i32, i32
  }
  func.func @transform_7(%arg0: i32) -> (i32, i32, i32) {
    %c0_i32 = arith.constant 0 : i32
    %c0_i32_0 = arith.constant 0 : i32
    %c0_i32_1 = arith.constant 0 : i32
    %c0_i32_2 = arith.constant 0 : i32
    return %c0_i32, %c0_i32_0, %c0_i32_1 : i32, i32, i32
  }
  func.func @transform_8(%arg0: i32) -> (i32, i32, i32) {
    %c0_i32 = arith.constant 0 : i32
    %c0_i32_0 = arith.constant 0 : i32
    %c0_i32_1 = arith.constant 0 : i32
    %c0_i32_2 = arith.constant 0 : i32
    return %c0_i32, %c0_i32_0, %c0_i32_1 : i32, i32, i32
  }
  func.func @transform_9(%arg0: i32) -> (i32, i32, i32) {
    %c0_i32 = arith.constant 0 : i32
    %c0_i32_0 = arith.constant 0 : i32
    %c0_i32_1 = arith.constant 0 : i32
    %c0_i32_2 = arith.constant 0 : i32
    return %c0_i32, %c0_i32_0, %c0_i32_1 : i32, i32, i32
  }
  func.func @transform_10(%arg0: i32) -> (i32, i32) {
    %c0_i32 = arith.constant 0 : i32
    %c0_i32_0 = arith.constant 0 : i32
    %c0_i32_1 = arith.constant 0 : i32
    return %c0_i32, %c0_i32_0 : i32, i32
  }
  func.func @transform_11(%arg0: i32) -> (i32, i32) {
    %c0_i32 = arith.constant 0 : i32
    %c0_i32_0 = arith.constant 0 : i32
    %c0_i32_1 = arith.constant 0 : i32
    return %c0_i32, %c0_i32_0 : i32, i32
  }
  func.func @transform_12(%arg0: i32) -> (i32, i32) {
    %c0_i32 = arith.constant 0 : i32
    %c0_i32_0 = arith.constant 0 : i32
    %c0_i32_1 = arith.constant 0 : i32
    return %c0_i32, %c0_i32_0 : i32, i32
  }
  func.func @transform_13(%arg0: i32) -> (i32, i32) {
    %c0_i32 = arith.constant 0 : i32
    %c0_i32_0 = arith.constant 0 : i32
    %c0_i32_1 = arith.constant 0 : i32
    return %c0_i32, %c0_i32_0 : i32, i32
  }
  func.func @transform_14(%arg0: i32) -> (i32, i32) {
    %c0_i32 = arith.constant 0 : i32
    %c0_i32_0 = arith.constant 0 : i32
    %c0_i32_1 = arith.constant 0 : i32
    return %c0_i32, %c0_i32_0 : i32, i32
  }
  func.func @transform_15(%arg0: i32) -> (i32, i32) {
    %c0_i32 = arith.constant 0 : i32
    %c0_i32_0 = arith.constant 0 : i32
    %c0_i32_1 = arith.constant 0 : i32
    return %c0_i32, %c0_i32_0 : i32, i32
  }
  func.func @transform_16(%arg0: i32) -> (i32, i32) {
    %c0_i32 = arith.constant 0 : i32
    %c0_i32_0 = arith.constant 0 : i32
    %c0_i32_1 = arith.constant 0 : i32
    return %c0_i32, %c0_i32_0 : i32, i32
  }
  func.func @transform_17(%arg0: i32) -> (i32, i32, i32) {
    %c0_i32 = arith.constant 0 : i32
    %c0_i32_0 = arith.constant 0 : i32
    %c0_i32_1 = arith.constant 0 : i32
    return %arg0, %c0_i32, %c0_i32_0 : i32, i32, i32
  }
}

</mosaic_0001>

<llo_original>
// kernel: tpu_custom_call.1
$region0: #{tpu_custom_call.1}
  #allocation0 [shape = 'u32[]', space=smem, size = 0x4, offset = 0x4, fixed_abs, tag = 'smem constant byte address 0x4 - core index']
  #allocation1 [shape = 'u32[72,128]{1,0:T(1,128)}', space=vmem, size = 0x9000, scoped, tag = 'internal scratch']
  %s0 = inlined_call_operand.vmem [shape: f32[2,8,32], index: 0, kind: input, shape index: {}]
  %s1 = inlined_call_operand.vmem [shape: f32[1,32], index: 1, kind: input, shape index: {}]
  %s2 = inlined_call_operand.vmem [shape: f32[1,32], index: 2, kind: input, shape index: {}]
  %s3 = inlined_call_operand.vmem [shape: bf16[4,32,8], index: 3, kind: input, shape index: {}]
  %s4 = inlined_call_operand.vmem [shape: bf16[4,32,8], index: 4, kind: input, shape index: {}]
  %s5 = inlined_call_operand.vmem [shape: bf16[4,32,8], index: 5, kind: input, shape index: {}]
  %s6 = inlined_call_operand.vmem [shape: f32[4,1,8], index: 6, kind: input, shape index: {}]
  %s7 = inlined_call_operand.vmem [shape: f32[4,1,8], index: 7, kind: input, shape index: {}]
  %s8 = inlined_call_operand.vmem [shape: f32[4,1,8], index: 8, kind: input, shape index: {}]
  %s9 = inlined_call_operand.vmem [shape: bf16[4,8,32], index: 9, kind: input, shape index: {}]
  %s10 = inlined_call_operand.vmem [shape: f32[1,32], index: 10, kind: input, shape index: {}]
  %s11 = inlined_call_operand.vmem [shape: f32[1,32], index: 11, kind: input, shape index: {}]
  %s12 = inlined_call_operand.vmem [shape: f32[1,32], index: 12, kind: input, shape index: {}]
  %s13 = inlined_call_operand.vmem [shape: bf16[32,128], index: 13, kind: input, shape index: {}]
  %s14 = inlined_call_operand.vmem [shape: f32[1,128], index: 14, kind: input, shape index: {}]
  %s15 = inlined_call_operand.vmem [shape: bf16[128,32], index: 15, kind: input, shape index: {}]
  %s16 = inlined_call_operand.vmem [shape: f32[1,32], index: 16, kind: input, shape index: {}]
  %s17 = inlined_call_operand.hbm [shape: f32[2,8,32], index: 17, kind: output, shape index: {}]
  %s18 = sld [smem:[#allocation0]]
  $region101: #{tpu_custom_call.1} parent=0
    _
  %s20 = ssub.s32 1, %s18
  %s21 = scalar_select 0, %s20, %s18
  $region1: #{tpu_custom_call.1} parent=0
    #allocation2 [shape = 'u8[8192]{0}', space=vmem, size = 0x2000, scoped, tag = 'output window, operand 0']
    #allocation3 [shape = 's32[2]{0}', space=sflag, size = 0x8, scoped, tag = 'scoped memory for tpu_custom_call.1']
    %22 = vsyncpa [#allocation3], 0
    %s23 = scalar_lea.sflag [#allocation3], 1
    %24 = vsyncpa %s23, 0
    loop: start=0, step=1, limit=4
    $region2: #{tpu_custom_call.1} parent=1 // loop_pre_header
      _
    $region3: #{tpu_custom_call.1} parent=1 // loop_header
      %s26 = sphi 0, %s30
      %p27 = scmp.ge.s32.totalorder %s26, 4
      %s36 = sphi 0, %s38
      %s39 = sphi 0, %s36
      %s40 = sphi 0, %s39
      %s56 = sphi 0, %s40
      %s60 = sphi 0, %s60
      %s62 = sphi 0, %s60
      %s63 = sphi 0, %s62
      %s77 = sphi 0, %s63
      %s81 = sphi 0, %s81
      %s83 = sphi 0, %s81
      %s84 = sphi 0, %s83
      %s98 = sphi 0, %s84
      %s102 = sphi 0, %s102
      %s104 = sphi 0, %s102
      %s105 = sphi 0, %s104
      %s119 = sphi 0, %s105
      %s123 = sphi 0, %s123
      %s125 = sphi 0, %s123
      %s126 = sphi 0, %s125
      %s140 = sphi 0, %s126
      %s144 = sphi 0, %s144
      %s146 = sphi 0, %s144
      %s147 = sphi 0, %s146
      %s161 = sphi 0, %s147
      %s165 = sphi 0, %s165
      %s167 = sphi 0, %s165
      %s168 = sphi 0, %s167
      %s182 = sphi 0, %s168
      %s186 = sphi 0, %s186
      %s188 = sphi 0, %s186
      %s189 = sphi 0, %s188
      %s203 = sphi 0, %s189
      %s207 = sphi 0, %s207
      %s209 = sphi 0, %s207
      %s210 = sphi 0, %s209
      %s224 = sphi 0, %s210
      %s228 = sphi 0, %s228
      %s230 = sphi 0, %s228
      %s231 = sphi 0, %s230
      %s245 = sphi 0, %s231
      %s249 = sphi 0, %s249
      %s251 = sphi 0, %s249
      %s252 = sphi 0, %s251
      %s266 = sphi 0, %s252
      %s270 = sphi 0, %s270
      %s272 = sphi 0, %s270
      %s273 = sphi 0, %s272
      %s287 = sphi 0, %s273
      %s291 = sphi 0, %s291
      %s293 = sphi 0, %s291
      %s294 = sphi 0, %s293
      %s308 = sphi 0, %s294
      %s312 = sphi 0, %s312
      %s314 = sphi 0, %s312
      %s315 = sphi 0, %s314
      %s329 = sphi 0, %s315
      %s333 = sphi 0, %s333
      %s335 = sphi 0, %s333
      %s336 = sphi 0, %s335
      %s350 = sphi 0, %s336
      %s354 = sphi 0, %s354
      %s356 = sphi 0, %s354
      %s357 = sphi 0, %s356
      %s371 = sphi 0, %s357
      %s375 = sphi 0, %s375
      %s377 = sphi 0, %s375
      %s378 = sphi 0, %s377
      %s392 = sphi 0, %s378
      %s398 = sphi 0, %s400
      %s401 = sphi 0, %s398
      %s402 = sphi 0, %s401
      %s418 = sphi 0, %s402
    $region4: #{tpu_custom_call.1} parent=1 // loop_header_branch
      %29 = sbr.rel (%p27) target = $region8
    $region5: #{tpu_custom_call.1} parent=1 // loop_body
      %s31 = ssub.s32 %s26, 1
      %s32 = ssub.s32 %s26, 2
      %s33 = sadd.s32 %s26, 1
      %s34 = ssub.s32 %s26, %s33
      %p35 = scmp.eq.s32.totalorder %s34, 0
      %s37 = sadd.s32 %s36, 1
      %s38 = scalar_select %p35, %s36, %s37
      %p41 = pneg %p35
      %p42 = scmp.eq.s32.totalorder %s26, 1
      %p43 = por %p41, %p42
      %p44 = scmp.ne.s32.totalorder %s36, %s39
      %p45 = scmp.eq.s32.totalorder %s26, 0
      %p46 = por %p44, %p45
      %p47 = scmp.ne.s32.totalorder %s36, %s39
      %p48 = scmp.eq.s32.totalorder %s31, 1
      %p49 = por %p47, %p48
      %p50 = scmp.ne.s32.totalorder %s39, %s40
      %p51 = scmp.eq.s32.totalorder %s31, 0
      %p52 = por %p50, %p51
      %p53 = scmp.ne.s32.totalorder %s39, %s40
      %p54 = scmp.eq.s32.totalorder %s32, 1
      %p55 = por %p53, %p54
      %p57 = scmp.ne.s32.totalorder %s40, %s56
      %p58 = scmp.eq.s32.totalorder %s32, 0
      %p59 = por %p57, %p58
      %s61 = sadd.s32 %s60, 1
      %p64 = scmp.eq.s32.totalorder %s26, 1
      %p65 = scmp.ne.s32.totalorder %s60, %s62
      %p66 = scmp.eq.s32.totalorder %s26, 0
      %p67 = por %p65, %p66
      %p68 = scmp.ne.s32.totalorder %s60, %s62
      %p69 = scmp.eq.s32.totalorder %s31, 1
      %p70 = por %p68, %p69
      %p71 = scmp.ne.s32.totalorder %s62, %s63
      %p72 = scmp.eq.s32.totalorder %s31, 0
      %p73 = por %p71, %p72
      %p74 = scmp.ne.s32.totalorder %s62, %s63
      %p75 = scmp.eq.s32.totalorder %s32, 1
      %p76 = por %p74, %p75
      %p78 = scmp.ne.s32.totalorder %s63, %s77
      %p79 = scmp.eq.s32.totalorder %s32, 0
      %p80 = por %p78, %p79
      %s82 = sadd.s32 %s81, 1
      %p85 = scmp.eq.s32.totalorder %s26, 1
      %p86 = scmp.ne.s32.totalorder %s81, %s83
      %p87 = scmp.eq.s32.totalorder %s26, 0
      %p88 = por %p86, %p87
      %p89 = scmp.ne.s32.totalorder %s81, %s83
      %p90 = scmp.eq.s32.totalorder %s31, 1
      %p91 = por %p89, %p90
      %p92 = scmp.ne.s32.totalorder %s83, %s84
      %p93 = scmp.eq.s32.totalorder %s31, 0
      %p94 = por %p92, %p93
      %p95 = scmp.ne.s32.totalorder %s83, %s84
      %p96 = scmp.eq.s32.totalorder %s32, 1
      %p97 = por %p95, %p96
      %p99 = scmp.ne.s32.totalorder %s84, %s98
      %p100 = scmp.eq.s32.totalorder %s32, 0
      %p101 = por %p99, %p100
      %s103 = sadd.s32 %s102, 1
      %p106 = scmp.eq.s32.totalorder %s26, 1
      %p107 = scmp.ne.s32.totalorder %s102, %s104
      %p108 = scmp.eq.s32.totalorder %s26, 0
      %p109 = por %p107, %p108
      %p110 = scmp.ne.s32.totalorder %s102, %s104
      %p111 = scmp.eq.s32.totalorder %s31, 1
      %p112 = por %p110, %p111
      %p113 = scmp.ne.s32.totalorder %s104, %s105
      %p114 = scmp.eq.s32.totalorder %s31, 0
      %p115 = por %p113, %p114
      %p116 = scmp.ne.s32.totalorder %s104, %s105
      %p117 = scmp.eq.s32.totalorder %s32, 1
      %p118 = por %p116, %p117
      %p120 = scmp.ne.s32.totalorder %s105, %s119
      %p121 = scmp.eq.s32.totalorder %s32, 0
      %p122 = por %p120, %p121
      %s124 = sadd.s32 %s123, 1
      %p127 = scmp.eq.s32.totalorder %s26, 1
      %p128 = scmp.ne.s32.totalorder %s123, %s125
      %p129 = scmp.eq.s32.totalorder %s26, 0
      %p130 = por %p128, %p129
      %p131 = scmp.ne.s32.totalorder %s123, %s125
      %p132 = scmp.eq.s32.totalorder %s31, 1
      %p133 = por %p131, %p132
      %p134 = scmp.ne.s32.totalorder %s125, %s126
      %p135 = scmp.eq.s32.totalorder %s31, 0
      %p136 = por %p134, %p135
      %p137 = scmp.ne.s32.totalorder %s125, %s126
      %p138 = scmp.eq.s32.totalorder %s32, 1
      %p139 = por %p137, %p138
      %p141 = scmp.ne.s32.totalorder %s126, %s140
      %p142 = scmp.eq.s32.totalorder %s32, 0
      %p143 = por %p141, %p142
      %s145 = sadd.s32 %s144, 1
      %p148 = scmp.eq.s32.totalorder %s26, 1
      %p149 = scmp.ne.s32.totalorder %s144, %s146
      %p150 = scmp.eq.s32.totalorder %s26, 0
      %p151 = por %p149, %p150
      %p152 = scmp.ne.s32.totalorder %s144, %s146
      %p153 = scmp.eq.s32.totalorder %s31, 1
      %p154 = por %p152, %p153
      %p155 = scmp.ne.s32.totalorder %s146, %s147
      %p156 = scmp.eq.s32.totalorder %s31, 0
      %p157 = por %p155, %p156
      %p158 = scmp.ne.s32.totalorder %s146, %s147
      %p159 = scmp.eq.s32.totalorder %s32, 1
      %p160 = por %p158, %p159
      %p162 = scmp.ne.s32.totalorder %s147, %s161
      %p163 = scmp.eq.s32.totalorder %s32, 0
      %p164 = por %p162, %p163
      %s166 = sadd.s32 %s165, 1
      %p169 = scmp.eq.s32.totalorder %s26, 1
      %p170 = scmp.ne.s32.totalorder %s165, %s167
      %p171 = scmp.eq.s32.totalorder %s26, 0
      %p172 = por %p170, %p171
      %p173 = scmp.ne.s32.totalorder %s165, %s167
      %p174 = scmp.eq.s32.totalorder %s31, 1
      %p175 = por %p173, %p174
      %p176 = scmp.ne.s32.totalorder %s167, %s168
      %p177 = scmp.eq.s32.totalorder %s31, 0
      %p178 = por %p176, %p177
      %p179 = scmp.ne.s32.totalorder %s167, %s168
      %p180 = scmp.eq.s32.totalorder %s32, 1
      %p181 = por %p179, %p180
      %p183 = scmp.ne.s32.totalorder %s168, %s182
      %p184 = scmp.eq.s32.totalorder %s32, 0
      %p185 = por %p183, %p184
      %s187 = sadd.s32 %s186, 1
      %p190 = scmp.eq.s32.totalorder %s26, 1
      %p191 = scmp.ne.s32.totalorder %s186, %s188
      %p192 = scmp.eq.s32.totalorder %s26, 0
      %p193 = por %p191, %p192
      %p194 = scmp.ne.s32.totalorder %s186, %s188
      %p195 = scmp.eq.s32.totalorder %s31, 1
      %p196 = por %p194, %p195
      %p197 = scmp.ne.s32.totalorder %s188, %s189
      %p198 = scmp.eq.s32.totalorder %s31, 0
      %p199 = por %p197, %p198
      %p200 = scmp.ne.s32.totalorder %s188, %s189
      %p201 = scmp.eq.s32.totalorder %s32, 1
      %p202 = por %p200, %p201
      %p204 = scmp.ne.s32.totalorder %s189, %s203
      %p205 = scmp.eq.s32.totalorder %s32, 0
      %p206 = por %p204, %p205
      %s208 = sadd.s32 %s207, 1
      %p211 = scmp.eq.s32.totalorder %s26, 1
      %p212 = scmp.ne.s32.totalorder %s207, %s209
      %p213 = scmp.eq.s32.totalorder %s26, 0
      %p214 = por %p212, %p213
      %p215 = scmp.ne.s32.totalorder %s207, %s209
      %p216 = scmp.eq.s32.totalorder %s31, 1
      %p217 = por %p215, %p216
      %p218 = scmp.ne.s32.totalorder %s209, %s210
      %p219 = scmp.eq.s32.totalorder %s31, 0
      %p220 = por %p218, %p219
      %p221 = scmp.ne.s32.totalorder %s209, %s210
      %p222 = scmp.eq.s32.totalorder %s32, 1
      %p223 = por %p221, %p222
      %p225 = scmp.ne.s32.totalorder %s210, %s224
      %p226 = scmp.eq.s32.totalorder %s32, 0
      %p227 = por %p225, %p226
      %s229 = sadd.s32 %s228, 1
      %p232 = scmp.eq.s32.totalorder %s26, 1
      %p233 = scmp.ne.s32.totalorder %s228, %s230
      %p234 = scmp.eq.s32.totalorder %s26, 0
      %p235 = por %p233, %p234
      %p236 = scmp.ne.s32.totalorder %s228, %s230
      %p237 = scmp.eq.s32.totalorder %s31, 1
      %p238 = por %p236, %p237
      %p239 = scmp.ne.s32.totalorder %s230, %s231
      %p240 = scmp.eq.s32.totalorder %s31, 0
      %p241 = por %p239, %p240
      %p242 = scmp.ne.s32.totalorder %s230, %s231
      %p243 = scmp.eq.s32.totalorder %s32, 1
      %p244 = por %p242, %p243
      %p246 = scmp.ne.s32.totalorder %s231, %s245
      %p247 = scmp.eq.s32.totalorder %s32, 0
      %p248 = por %p246, %p247
      %s250 = sadd.s32 %s249, 1
      %p253 = scmp.eq.s32.totalorder %s26, 1
      %p254 = scmp.ne.s32.totalorder %s249, %s251
      %p255 = scmp.eq.s32.totalorder %s26, 0
      %p256 = por %p254, %p255
      %p257 = scmp.ne.s32.totalorder %s249, %s251
      %p258 = scmp.eq.s32.totalorder %s31, 1
      %p259 = por %p257, %p258
      %p260 = scmp.ne.s32.totalorder %s251, %s252
      %p261 = scmp.eq.s32.totalorder %s31, 0
      %p262 = por %p260, %p261
      %p263 = scmp.ne.s32.totalorder %s251, %s252
      %p264 = scmp.eq.s32.totalorder %s32, 1
      %p265 = por %p263, %p264
      %p267 = scmp.ne.s32.totalorder %s252, %s266
      %p268 = scmp.eq.s32.totalorder %s32, 0
      %p269 = por %p267, %p268
      %s271 = sadd.s32 %s270, 1
      %p274 = scmp.eq.s32.totalorder %s26, 1
      %p275 = scmp.ne.s32.totalorder %s270, %s272
      %p276 = scmp.eq.s32.totalorder %s26, 0
      %p277 = por %p275, %p276
      %p278 = scmp.ne.s32.totalorder %s270, %s272
      %p279 = scmp.eq.s32.totalorder %s31, 1
      %p280 = por %p278, %p279
      %p281 = scmp.ne.s32.totalorder %s272, %s273
      %p282 = scmp.eq.s32.totalorder %s31, 0
      %p283 = por %p281, %p282
      %p284 = scmp.ne.s32.totalorder %s272, %s273
      %p285 = scmp.eq.s32.totalorder %s32, 1
      %p286 = por %p284, %p285
      %p288 = scmp.ne.s32.totalorder %s273, %s287
      %p289 = scmp.eq.s32.totalorder %s32, 0
      %p290 = por %p288, %p289
      %s292 = sadd.s32 %s291, 1
      %p295 = scmp.eq.s32.totalorder %s26, 1
      %p296 = scmp.ne.s32.totalorder %s291, %s293
      %p297 = scmp.eq.s32.totalorder %s26, 0
      %p298 = por %p296, %p297
      %p299 = scmp.ne.s32.totalorder %s291, %s293
      %p300 = scmp.eq.s32.totalorder %s31, 1
      %p301 = por %p299, %p300
      %p302 = scmp.ne.s32.totalorder %s293, %s294
      %p303 = scmp.eq.s32.totalorder %s31, 0
      %p304 = por %p302, %p303
      %p305 = scmp.ne.s32.totalorder %s293, %s294
      %p306 = scmp.eq.s32.totalorder %s32, 1
      %p307 = por %p305, %p306
      %p309 = scmp.ne.s32.totalorder %s294, %s308
      %p310 = scmp.eq.s32.totalorder %s32, 0
      %p311 = por %p309, %p310
      %s313 = sadd.s32 %s312, 1
      %p316 = scmp.eq.s32.totalorder %s26, 1
      %p317 = scmp.ne.s32.totalorder %s312, %s314
      %p318 = scmp.eq.s32.totalorder %s26, 0
      %p319 = por %p317, %p318
      %p320 = scmp.ne.s32.totalorder %s312, %s314
      %p321 = scmp.eq.s32.totalorder %s31, 1
      %p322 = por %p320, %p321
      %p323 = scmp.ne.s32.totalorder %s314, %s315
      %p324 = scmp.eq.s32.totalorder %s31, 0
      %p325 = por %p323, %p324
      %p326 = scmp.ne.s32.totalorder %s314, %s315
      %p327 = scmp.eq.s32.totalorder %s32, 1
      %p328 = por %p326, %p327
      %p330 = scmp.ne.s32.totalorder %s315, %s329
      %p331 = scmp.eq.s32.totalorder %s32, 0
      %p332 = por %p330, %p331
      %s334 = sadd.s32 %s333, 1
      %p337 = scmp.eq.s32.totalorder %s26, 1
      %p338 = scmp.ne.s32.totalorder %s333, %s335
      %p339 = scmp.eq.s32.totalorder %s26, 0
      %p340 = por %p338, %p339
      %p341 = scmp.ne.s32.totalorder %s333, %s335
      %p342 = scmp.eq.s32.totalorder %s31, 1
      %p343 = por %p341, %p342
      %p344 = scmp.ne.s32.totalorder %s335, %s336
      %p345 = scmp.eq.s32.totalorder %s31, 0
      %p346 = por %p344, %p345
      %p347 = scmp.ne.s32.totalorder %s335, %s336
      %p348 = scmp.eq.s32.totalorder %s32, 1
      %p349 = por %p347, %p348
      %p351 = scmp.ne.s32.totalorder %s336, %s350
      %p352 = scmp.eq.s32.totalorder %s32, 0
      %p353 = por %p351, %p352
      %s355 = sadd.s32 %s354, 1
      %p358 = scmp.eq.s32.totalorder %s26, 1
      %p359 = scmp.ne.s32.totalorder %s354, %s356
      %p360 = scmp.eq.s32.totalorder %s26, 0
      %p361 = por %p359, %p360
      %p362 = scmp.ne.s32.totalorder %s354, %s356
      %p363 = scmp.eq.s32.totalorder %s31, 1
      %p364 = por %p362, %p363
      %p365 = scmp.ne.s32.totalorder %s356, %s357
      %p366 = scmp.eq.s32.totalorder %s31, 0
      %p367 = por %p365, %p366
      %p368 = scmp.ne.s32.totalorder %s356, %s357
      %p369 = scmp.eq.s32.totalorder %s32, 1
      %p370 = por %p368, %p369
      %p372 = scmp.ne.s32.totalorder %s357, %s371
      %p373 = scmp.eq.s32.totalorder %s32, 0
      %p374 = por %p372, %p373
      %s376 = sadd.s32 %s375, 1
      %p379 = scmp.eq.s32.totalorder %s26, 1
      %p380 = scmp.ne.s32.totalorder %s375, %s377
      %p381 = scmp.eq.s32.totalorder %s26, 0
      %p382 = por %p380, %p381
      %p383 = scmp.ne.s32.totalorder %s375, %s377
      %p384 = scmp.eq.s32.totalorder %s31, 1
      %p385 = por %p383, %p384
      %p386 = scmp.ne.s32.totalorder %s377, %s378
      %p387 = scmp.eq.s32.totalorder %s31, 0
      %p388 = por %p386, %p387
      %p389 = scmp.ne.s32.totalorder %s377, %s378
      %p390 = scmp.eq.s32.totalorder %s32, 1
      %p391 = por %p389, %p390
      %p393 = scmp.ne.s32.totalorder %s378, %s392
      %p394 = scmp.eq.s32.totalorder %s32, 0
      %p395 = por %p393, %p394
      %s396 = ssub.s32 %s26, %s33
      %p397 = scmp.eq.s32.totalorder %s396, 0
      %s399 = sadd.s32 %s398, 1
      %s400 = scalar_select %p397, %s398, %s399
      %p403 = pneg %p397
      %p404 = scmp.eq.s32.totalorder %s26, 1
      %p405 = por %p403, %p404
      %p406 = scmp.ne.s32.totalorder %s398, %s401
      %p407 = scmp.eq.s32.totalorder %s26, 0
      %p408 = por %p406, %p407
      %p409 = scmp.ne.s32.totalorder %s398, %s401
      %p410 = scmp.eq.s32.totalorder %s31, 1
      %p411 = por %p409, %p410
      %p412 = scmp.ne.s32.totalorder %s401, %s402
      %p413 = scmp.eq.s32.totalorder %s31, 0
      %p414 = por %p412, %p413
      %p415 = scmp.ne.s32.totalorder %s401, %s402
      %p416 = scmp.eq.s32.totalorder %s32, 1
      %p417 = por %p415, %p416
      %p419 = scmp.ne.s32.totalorder %s402, %s418
      %p420 = scmp.eq.s32.totalorder %s32, 0
      %p421 = por %p419, %p420
      %p422 = scmp.le.s32.totalorder 1, %s26
      %p423 = scmp.lt.s32.totalorder %s26, 3
      %p424 = pnand %p422, %p423
      %p425 = pneg %p424
      // Predicated region
      $region9: #{tpu_custom_call.1} parent=5 // pred_check
        _
      $region10: #{tpu_custom_call.1} parent=5 // pred_check_branch
        %427 = sbr.rel (%p424) target = $region12
      $region11: #{tpu_custom_call.1} parent=5 // pred_region
        %s428 = ssub.s32 %s26, 1
        // Predicated region
        $region13: #{tpu_custom_call.1} parent=11 // pred_check
          %p429 = pneg %p73
        $region14: #{tpu_custom_call.1} parent=11 // pred_check_branch
          %431 = sbr.rel (%p429) target = $region16
        $region15: #{tpu_custom_call.1} parent=11 // pred_region
          _
        $region16: #{tpu_custom_call.1} parent=11 // pred_fallthru
          _
        // Predicated region
        $region17: #{tpu_custom_call.1} parent=11 // pred_check
          %p432 = pneg %p94
        $region18: #{tpu_custom_call.1} parent=11 // pred_check_branch
          %434 = sbr.rel (%p432) target = $region20
        $region19: #{tpu_custom_call.1} parent=11 // pred_region
          _
        $region20: #{tpu_custom_call.1} parent=11 // pred_fallthru
          _
        // Predicated region
        $region21: #{tpu_custom_call.1} parent=11 // pred_check
          %p435 = pneg %p115
        $region22: #{tpu_custom_call.1} parent=11 // pred_check_branch
          %437 = sbr.rel (%p435) target = $region24
        $region23: #{tpu_custom_call.1} parent=11 // pred_region
          _
        $region24: #{tpu_custom_call.1} parent=11 // pred_fallthru
          _
        // Predicated region
        $region25: #{tpu_custom_call.1} parent=11 // pred_check
          %p438 = pneg %p136
        $region26: #{tpu_custom_call.1} parent=11 // pred_check_branch
          %440 = sbr.rel (%p438) target = $region28
        $region27: #{tpu_custom_call.1} parent=11 // pred_region
          _
        $region28: #{tpu_custom_call.1} parent=11 // pred_fallthru
          _
        // Predicated region
        $region29: #{tpu_custom_call.1} parent=11 // pred_check
          %p441 = pneg %p157
        $region30: #{tpu_custom_call.1} parent=11 // pred_check_branch
          %443 = sbr.rel (%p441) target = $region32
        $region31: #{tpu_custom_call.1} parent=11 // pred_region
          _
        $region32: #{tpu_custom_call.1} parent=11 // pred_fallthru
          _
        // Predicated region
        $region33: #{tpu_custom_call.1} parent=11 // pred_check
          %p444 = pneg %p178
        $region34: #{tpu_custom_call.1} parent=11 // pred_check_branch
          %446 = sbr.rel (%p444) target = $region36
        $region35: #{tpu_custom_call.1} parent=11 // pred_region
          _
        $region36: #{tpu_custom_call.1} parent=11 // pred_fallthru
          _
        // Predicated region
        $region37: #{tpu_custom_call.1} parent=11 // pred_check
          %p447 = pneg %p199
        $region38: #{tpu_custom_call.1} parent=11 // pred_check_branch
          %449 = sbr.rel (%p447) target = $region40
        $region39: #{tpu_custom_call.1} parent=11 // pred_region
          _
        $region40: #{tpu_custom_call.1} parent=11 // pred_fallthru
          _
        // Predicated region
        $region41: #{tpu_custom_call.1} parent=11 // pred_check
          %p450 = pneg %p220
        $region42: #{tpu_custom_call.1} parent=11 // pred_check_branch
          %452 = sbr.rel (%p450) target = $region44
        $region43: #{tpu_custom_call.1} parent=11 // pred_region
          _
        $region44: #{tpu_custom_call.1} parent=11 // pred_fallthru
          _
        // Predicated region
        $region45: #{tpu_custom_call.1} parent=11 // pred_check
          %p453 = pneg %p241
        $region46: #{tpu_custom_call.1} parent=11 // pred_check_branch
          %455 = sbr.rel (%p453) target = $region48
        $region47: #{tpu_custom_call.1} parent=11 // pred_region
          _
        $region48: #{tpu_custom_call.1} parent=11 // pred_fallthru
          _
        // Predicated region
        $region49: #{tpu_custom_call.1} parent=11 // pred_check
          %p456 = pneg %p262
        $region50: #{tpu_custom_call.1} parent=11 // pred_check_branch
          %458 = sbr.rel (%p456) target = $region52
        $region51: #{tpu_custom_call.1} parent=11 // pred_region
          _
        $region52: #{tpu_custom_call.1} parent=11 // pred_fallthru
          _
        // Predicated region
        $region53: #{tpu_custom_call.1} parent=11 // pred_check
          %p459 = pneg %p283
        $region54: #{tpu_custom_call.1} parent=11 // pred_check_branch
          %461 = sbr.rel (%p459) target = $region56
        $region55: #{tpu_custom_call.1} parent=11 // pred_region
          _
        $region56: #{tpu_custom_call.1} parent=11 // pred_fallthru
          _
        // Predicated region
        $region57: #{tpu_custom_call.1} parent=11 // pred_check
          %p462 = pneg %p304
        $region58: #{tpu_custom_call.1} parent=11 // pred_check_branch
          %464 = sbr.rel (%p462) target = $region60
        $region59: #{tpu_custom_call.1} parent=11 // pred_region
          _
        $region60: #{tpu_custom_call.1} parent=11 // pred_fallthru
          _
        // Predicated region
        $region61: #{tpu_custom_call.1} parent=11 // pred_check
          %p465 = pneg %p325
        $region62: #{tpu_custom_call.1} parent=11 // pred_check_branch
          %467 = sbr.rel (%p465) target = $region64
        $region63: #{tpu_custom_call.1} parent=11 // pred_region
          _
        $region64: #{tpu_custom_call.1} parent=11 // pred_fallthru
          _
        // Predicated region
        $region65: #{tpu_custom_call.1} parent=11 // pred_check
          %p468 = pneg %p346
        $region66: #{tpu_custom_call.1} parent=11 // pred_check_branch
          %470 = sbr.rel (%p468) target = $region68
        $region67: #{tpu_custom_call.1} parent=11 // pred_region
          _
        $region68: #{tpu_custom_call.1} parent=11 // pred_fallthru
          _
        // Predicated region
        $region69: #{tpu_custom_call.1} parent=11 // pred_check
          %p471 = pneg %p367
        $region70: #{tpu_custom_call.1} parent=11 // pred_check_branch
          %473 = sbr.rel (%p471) target = $region72
        $region71: #{tpu_custom_call.1} parent=11 // pred_region
          _
        $region72: #{tpu_custom_call.1} parent=11 // pred_fallthru
          _
        // Predicated region
        $region73: #{tpu_custom_call.1} parent=11 // pred_check
          %p474 = pneg %p388
        $region74: #{tpu_custom_call.1} parent=11 // pred_check_branch
          %476 = sbr.rel (%p474) target = $region76
        $region75: #{tpu_custom_call.1} parent=11 // pred_region
          _
        $region76: #{tpu_custom_call.1} parent=11 // pred_fallthru
          _
      $region12: #{tpu_custom_call.1} parent=5 // pred_fallthru
        _
      %p477 = scmp.lt.s32.totalorder %s26, 2
      // Predicated region
      $region77: #{tpu_custom_call.1} parent=5 // pred_check
        %p478 = pneg %p477
      $region78: #{tpu_custom_call.1} parent=5 // pred_check_branch
        %480 = sbr.rel (%p478) target = $region80
      $region79: #{tpu_custom_call.1} parent=5 // pred_region
        // Predicated region
        $region81: #{tpu_custom_call.1} parent=79 // pred_check
          %p481 = pneg %p46
        $region82: #{tpu_custom_call.1} parent=79 // pred_check_branch
          %483 = sbr.rel (%p481) target = $region84
        $region83: #{tpu_custom_call.1} parent=79 // pred_region
          %p484 = scmp.lt.s32.totalorder %s26, 1
          %s485 = scalar_select %p484, %s26, 1
          %s486 = smul.addr %s485, 8
          %s487 = scalar_lea.vmem %s0, %s486
        $region84: #{tpu_custom_call.1} parent=79 // pred_fallthru
          _
      $region80: #{tpu_custom_call.1} parent=5 // pred_fallthru
        _
      %p488 = scmp.le.s32.totalorder 1, %s26
      %p489 = scmp.lt.s32.totalorder %s26, 3
      %p490 = pnand %p488, %p489
      %p491 = pneg %p490
      // Predicated region
      $region85: #{tpu_custom_call.1} parent=5 // pred_check
        _
      $region86: #{tpu_custom_call.1} parent=5 // pred_check_branch
        %493 = sbr.rel (%p490) target = $region88
      $region87: #{tpu_custom_call.1} parent=5 // pred_region
        %s494 = ssub.s32 %s26, 1
        %p495 = scmp.lt.s32.totalorder %s31, 1
        %s496 = scalar_select %p495, %s31, 1
        %s497 = smul.addr %s496, 8
        %s498 = scalar_lea.vmem %s0, %s497
        %p499 = pneg %p52
        %p500 = pneg %p49
        %p501 = pneg %p73
        %p502 = pneg %p70
        %p503 = pneg %p94
        %p504 = pneg %p91
        %p505 = pneg %p115
        %p506 = pneg %p112
        %p507 = pneg %p136
        %p508 = pneg %p133
        %p509 = pneg %p157
        %p510 = pneg %p154
        %p511 = pneg %p178
        %p512 = pneg %p175
        %p513 = pneg %p199
        %p514 = pneg %p196
        %p515 = pneg %p220
        %p516 = pneg %p217
        %p517 = pneg %p241
        %p518 = pneg %p238
        %p519 = pneg %p262
        %p520 = pneg %p259
        %p521 = pneg %p283
        %p522 = pneg %p280
        %p523 = pneg %p304
        %p524 = pneg %p301
        %p525 = pneg %p325
        %p526 = pneg %p322
        %p527 = pneg %p346
        %p528 = pneg %p343
        %p529 = pneg %p367
        %p530 = pneg %p364
        %p531 = pneg %p388
        %p532 = pneg %p385
        %p533 = pneg %p414
        %p534 = pneg %p411
        %s535 = sand.u32 %s401, 1
        %s536 = scalar_lea.sflag [#allocation3], %s535
        %s537 = sand.u32 %s401, 1
        %s538 = smul.addr %s537, 8
        %s539 = scalar_lea.vmem [#allocation2], %s538
        %p540 = scmp.lt.s32.totalorder %s31, 1
        %s541 = scalar_select %p540, %s31, 1
        %s542 = smul.addr %s541, 8
        %s543 = scalar_lea.vmem %s0, %s542
        %v545 = vld [vmem:[%s543] sm:$0xff]
        %v546 = vld [vmem:[%s1] sm:$0x1]
        %v547 = vld [vmem:[%s2] sm:$0x1]
        %vm548 = vcmask 261120
        %v549 = vsel %vm548, %v545, 0.0
        %550 = vadd.xlane.f32.xlu0 %v549
        %v551 = vpop.xlane.xlu0 %550
        %v552 = vrcp.pop 32.0
        %v553 = vmul.f32 32.0, %v552
        %v554 = vsub.f32 1.0, %v553
        %v555 = vmul.f32 %v552, %v554
        %v556 = vadd.f32 %v552, %v555
        %vm557 = vweird.f32 %v552
        %v558 = vsel %vm557, %v552, %v556
        %v559 = vmul.f32 %v551, %v558
        %v560 = vsub.f32 %v545, %v559
        %v561 = vmul.f32 %v560, %v560
        %v562 = vsel %vm548, %v561, 0.0
        %563 = vadd.xlane.f32.xlu0 %v562
        %v564 = vpop.xlane.xlu0 %563
        %v565 = vmul.f32 %v564, %v558
        %v566 = vadd.f32 %v565, 1e-05
        %v567 = vrsqrt.pop %v566
        %v568 = vmul.f32 %v567, %v566
        %v569 = vmul.f32 %v568, %v567
        %v570 = vmul.f32 0.5, %v569
        %v571 = vsub.f32 1.5, %v570
        %v572 = vmul.f32 %v567, %v571
        %vm573 = vweird.f32 %v566
        %vm574 = vweird.f32 %v567
        %vm575 = vmor %vm573, %vm574
        %v576 = vsel %vm575, %v567, %v572
        %v577 = vmul.f32 %v560, %v576
        %v579 = vperm.slane %v546, 0
        %v581 = vmul.f32 %v577, %v579
        %v583 = vperm.slane %v547, 0
        %v585 = vadd.f32 %v581, %v583
        %v586 = vpack.c.bf16 %v585, %v585
        %v587 = vld [vmem:[%s3] sm:$0xf]
        %v588 = vld [vmem:[%s3 + $0x4] sm:$0xf]
        %v589 = vld [vmem:[%s3 + $0x8] sm:$0xf]
        %v590 = vld [vmem:[%s3 + $0xc] sm:$0xf]
        %v591 = vld [vmem:[%s3 + $0x10] sm:$0xf]
        %v592 = vld [vmem:[%s3 + $0x14] sm:$0xf]
        %v593 = vld [vmem:[%s3 + $0x18] sm:$0xf]
        %v594 = vld [vmem:[%s3 + $0x1c] sm:$0xf]
        %v595 = vld [vmem:[%s3 + $0x20] sm:$0xf]
        %v596 = vld [vmem:[%s3 + $0x24] sm:$0xf]
        %v597 = vld [vmem:[%s3 + $0x28] sm:$0xf]
        %v598 = vld [vmem:[%s3 + $0x2c] sm:$0xf]
        %v599 = vld [vmem:[%s3 + $0x30] sm:$0xf]
        %v600 = vld [vmem:[%s3 + $0x34] sm:$0xf]
        %v601 = vld [vmem:[%s3 + $0x38] sm:$0xf]
        %v602 = vld [vmem:[%s3 + $0x3c] sm:$0xf]
        %v603 = vld [vmem:[%s6] sm:$0x1]
        %v604 = vld [vmem:[%s6 + $0x1] sm:$0x1]
        %v605 = vld [vmem:[%s6 + $0x2] sm:$0x1]
        %v606 = vld [vmem:[%s6 + $0x3] sm:$0x1]
        %v611 = vperm.slane %v603, 0
        %v612 = vperm.slane %v604, 0
        %v613 = vperm.slane %v605, 0
        %v614 = vperm.slane %v606, 0
        %v623 = vunpack.c.l.b16 %v587
        %v624 = vunpack.c.l.b16 %v588
        %v625 = vunpack.c.l.b16 %v589
        %v626 = vunpack.c.l.b16 %v590
        %v627 = vpack.c.b16 %v624, %v623
        %v628 = vpack.c.b16 %v626, %v625
        %v632 = vsel %vm548, %v586, 0
        %634 = vmatpush.bf16.msra.mxu0 0
        %635 = vmatpush.bf16.msra.mxu0 0
        %636 = vmatpush.bf16.msra.mxu0 0
        %637 = vmatpush.bf16.msra.mxu0 0
        %638 = vmatpush.bf16.msra.mxu0 0
        %639 = vmatpush.bf16.msra.mxu0 0
        %640 = vmatpush.bf16.msra.mxu0 %v628
        %641 = vmatpush.bf16.msra.mxu0 %v627
        %642 = vmatmul.bf16.gmra.mxu0 %v632
        %v643 = vpop.f32.mrf.mxu0
        %v644 = vadd.f32 %v611, %v643
        %v645 = vpop.f32.mrf.mxu0
        %646 = vdwg.mxu0
        %v651 = vunpack.c.l.b16 %v591
        %v652 = vunpack.c.l.b16 %v592
        %v653 = vunpack.c.l.b16 %v593
        %v654 = vunpack.c.l.b16 %v594
        %v655 = vpack.c.b16 %v652, %v651
        %v656 = vpack.c.b16 %v654, %v653
        %659 = vmatpush.bf16.msra.mxu0 0
        %660 = vmatpush.bf16.msra.mxu0 0
        %661 = vmatpush.bf16.msra.mxu0 0
        %662 = vmatpush.bf16.msra.mxu0 0
        %663 = vmatpush.bf16.msra.mxu0 0
        %664 = vmatpush.bf16.msra.mxu0 0
        %665 = vmatpush.bf16.msra.mxu0 %v656
        %666 = vmatpush.bf16.msra.mxu0 %v655
        %667 = vmatmul.bf16.gmra.mxu0 %v632
        %v668 = vpop.f32.mrf.mxu0
        %v669 = vadd.f32 %v612, %v668
        %v670 = vpop.f32.mrf.mxu0
        %671 = vdwg.mxu0
        %v676 = vunpack.c.l.b16 %v595
        %v677 = vunpack.c.l.b16 %v596
        %v678 = vunpack.c.l.b16 %v597
        %v679 = vunpack.c.l.b16 %v598
        %v680 = vpack.c.b16 %v677, %v676
        %v681 = vpack.c.b16 %v679, %v678
        %684 = vmatpush.bf16.msra.mxu0 0
        %685 = vmatpush.bf16.msra.mxu0 0
        %686 = vmatpush.bf16.msra.mxu0 0
        %687 = vmatpush.bf16.msra.mxu0 0
        %688 = vmatpush.bf16.msra.mxu0 0
        %689 = vmatpush.bf16.msra.mxu0 0
        %690 = vmatpush.bf16.msra.mxu0 %v681
        %691 = vmatpush.bf16.msra.mxu0 %v680
        %692 = vmatmul.bf16.gmra.mxu0 %v632
        %v693 = vpop.f32.mrf.mxu0
        %v694 = vadd.f32 %v613, %v693
        %v695 = vpop.f32.mrf.mxu0
        %696 = vdwg.mxu0
        %v701 = vunpack.c.l.b16 %v599
        %v702 = vunpack.c.l.b16 %v600
        %v703 = vunpack.c.l.b16 %v601
        %v704 = vunpack.c.l.b16 %v602
        %v705 = vpack.c.b16 %v702, %v701
        %v706 = vpack.c.b16 %v704, %v703
        %709 = vmatpush.bf16.msra.mxu0 0
        %710 = vmatpush.bf16.msra.mxu0 0
        %711 = vmatpush.bf16.msra.mxu0 0
        %712 = vmatpush.bf16.msra.mxu0 0
        %713 = vmatpush.bf16.msra.mxu0 0
        %714 = vmatpush.bf16.msra.mxu0 0
        %715 = vmatpush.bf16.msra.mxu0 %v706
        %716 = vmatpush.bf16.msra.mxu0 %v705
        %717 = vmatmul.bf16.gmra.mxu0 %v632
        %v718 = vpop.f32.mrf.mxu0
        %v719 = vadd.f32 %v614, %v718
        %v720 = vpop.f32.mrf.mxu0
        %721 = vdwg.mxu0
        %v722 = vpack.c.bf16 %v644, %v644
        %v723 = vpack.c.bf16 %v669, %v669
        %v724 = vpack.c.bf16 %v694, %v694
        %v725 = vpack.c.bf16 %v719, %v719
        %v726 = vld [vmem:[%s4] sm:$0xf]
        %v727 = vld [vmem:[%s4 + $0x4] sm:$0xf]
        %v728 = vld [vmem:[%s4 + $0x8] sm:$0xf]
        %v729 = vld [vmem:[%s4 + $0xc] sm:$0xf]
        %v730 = vld [vmem:[%s4 + $0x10] sm:$0xf]
        %v731 = vld [vmem:[%s4 + $0x14] sm:$0xf]
        %v732 = vld [vmem:[%s4 + $0x18] sm:$0xf]
        %v733 = vld [vmem:[%s4 + $0x1c] sm:$0xf]
        %v734 = vld [vmem:[%s4 + $0x20] sm:$0xf]
        %v735 = vld [vmem:[%s4 + $0x24] sm:$0xf]
        %v736 = vld [vmem:[%s4 + $0x28] sm:$0xf]
        %v737 = vld [vmem:[%s4 + $0x2c] sm:$0xf]
        %v738 = vld [vmem:[%s4 + $0x30] sm:$0xf]
        %v739 = vld [vmem:[%s4 + $0x34] sm:$0xf]
        %v740 = vld [vmem:[%s4 + $0x38] sm:$0xf]
        %v741 = vld [vmem:[%s4 + $0x3c] sm:$0xf]
        %v742 = vld [vmem:[%s7] sm:$0x1]
        %v743 = vld [vmem:[%s7 + $0x1] sm:$0x1]
        %v744 = vld [vmem:[%s7 + $0x2] sm:$0x1]
        %v745 = vld [vmem:[%s7 + $0x3] sm:$0x1]
        %v750 = vperm.slane %v742, 0
        %v751 = vperm.slane %v743, 0
        %v752 = vperm.slane %v744, 0
        %v753 = vperm.slane %v745, 0
        %v762 = vunpack.c.l.b16 %v726
        %v763 = vunpack.c.l.b16 %v727
        %v764 = vunpack.c.l.b16 %v728
        %v765 = vunpack.c.l.b16 %v729
        %v766 = vpack.c.b16 %v763, %v762
        %v767 = vpack.c.b16 %v765, %v764
        %770 = vmatpush.bf16.msra.mxu0 0
        %771 = vmatpush.bf16.msra.mxu0 0
        %772 = vmatpush.bf16.msra.mxu0 0
        %773 = vmatpush.bf16.msra.mxu0 0
        %774 = vmatpush.bf16.msra.mxu0 0
        %775 = vmatpush.bf16.msra.mxu0 0
        %776 = vmatpush.bf16.msra.mxu0 %v767
        %777 = vmatpush.bf16.msra.mxu0 %v766
        %778 = vmatmul.bf16.gmra.mxu0 %v632
        %v779 = vpop.f32.mrf.mxu0
        %v780 = vadd.f32 %v750, %v779
        %v781 = vpop.f32.mrf.mxu0
        %782 = vdwg.mxu0
        %v787 = vunpack.c.l.b16 %v730
        %v788 = vunpack.c.l.b16 %v731
        %v789 = vunpack.c.l.b16 %v732
        %v790 = vunpack.c.l.b16 %v733
        %v791 = vpack.c.b16 %v788, %v787
        %v792 = vpack.c.b16 %v790, %v789
        %795 = vmatpush.bf16.msra.mxu0 0
        %796 = vmatpush.bf16.msra.mxu0 0
        %797 = vmatpush.bf16.msra.mxu0 0
        %798 = vmatpush.bf16.msra.mxu0 0
        %799 = vmatpush.bf16.msra.mxu0 0
        %800 = vmatpush.bf16.msra.mxu0 0
        %801 = vmatpush.bf16.msra.mxu0 %v792
        %802 = vmatpush.bf16.msra.mxu0 %v791
        %803 = vmatmul.bf16.gmra.mxu0 %v632
        %v804 = vpop.f32.mrf.mxu0
        %v805 = vadd.f32 %v751, %v804
        %v806 = vpop.f32.mrf.mxu0
        %807 = vdwg.mxu0
        %v812 = vunpack.c.l.b16 %v734
        %v813 = vunpack.c.l.b16 %v735
        %v814 = vunpack.c.l.b16 %v736
        %v815 = vunpack.c.l.b16 %v737
        %v816 = vpack.c.b16 %v813, %v812
        %v817 = vpack.c.b16 %v815, %v814
        %820 = vmatpush.bf16.msra.mxu0 0
        %821 = vmatpush.bf16.msra.mxu0 0
        %822 = vmatpush.bf16.msra.mxu0 0
        %823 = vmatpush.bf16.msra.mxu0 0
        %824 = vmatpush.bf16.msra.mxu0 0
        %825 = vmatpush.bf16.msra.mxu0 0
        %826 = vmatpush.bf16.msra.mxu0 %v817
        %827 = vmatpush.bf16.msra.mxu0 %v816
        %828 = vmatmul.bf16.gmra.mxu0 %v632
        %v829 = vpop.f32.mrf.mxu0
        %v830 = vadd.f32 %v752, %v829
        %v831 = vpop.f32.mrf.mxu0
        %832 = vdwg.mxu0
        %v837 = vunpack.c.l.b16 %v738
        %v838 = vunpack.c.l.b16 %v739
        %v839 = vunpack.c.l.b16 %v740
        %v840 = vunpack.c.l.b16 %v741
        %v841 = vpack.c.b16 %v838, %v837
        %v842 = vpack.c.b16 %v840, %v839
        %845 = vmatpush.bf16.msra.mxu0 0
        %846 = vmatpush.bf16.msra.mxu0 0
        %847 = vmatpush.bf16.msra.mxu0 0
        %848 = vmatpush.bf16.msra.mxu0 0
        %849 = vmatpush.bf16.msra.mxu0 0
        %850 = vmatpush.bf16.msra.mxu0 0
        %851 = vmatpush.bf16.msra.mxu0 %v842
        %852 = vmatpush.bf16.msra.mxu0 %v841
        %853 = vmatmul.bf16.gmra.mxu0 %v632
        %v854 = vpop.f32.mrf.mxu0
        %v855 = vadd.f32 %v753, %v854
        %v856 = vpop.f32.mrf.mxu0
        %857 = vdwg.mxu0
        %v858 = vpack.c.bf16 %v780, %v780
        %v859 = vpack.c.bf16 %v805, %v805
        %v860 = vpack.c.bf16 %v830, %v830
        %v861 = vpack.c.bf16 %v855, %v855
        %v862 = vld [vmem:[%s5] sm:$0xf]
        %v863 = vld [vmem:[%s5 + $0x4] sm:$0xf]
        %v864 = vld [vmem:[%s5 + $0x8] sm:$0xf]
        %v865 = vld [vmem:[%s5 + $0xc] sm:$0xf]
        %v866 = vld [vmem:[%s5 + $0x10] sm:$0xf]
        %v867 = vld [vmem:[%s5 + $0x14] sm:$0xf]
        %v868 = vld [vmem:[%s5 + $0x18] sm:$0xf]
        %v869 = vld [vmem:[%s5 + $0x1c] sm:$0xf]
        %v870 = vld [vmem:[%s5 + $0x20] sm:$0xf]
        %v871 = vld [vmem:[%s5 + $0x24] sm:$0xf]
        %v872 = vld [vmem:[%s5 + $0x28] sm:$0xf]
        %v873 = vld [vmem:[%s5 + $0x2c] sm:$0xf]
        %v874 = vld [vmem:[%s5 + $0x30] sm:$0xf]
        %v875 = vld [vmem:[%s5 + $0x34] sm:$0xf]
        %v876 = vld [vmem:[%s5 + $0x38] sm:$0xf]
        %v877 = vld [vmem:[%s5 + $0x3c] sm:$0xf]
        %v878 = vld [vmem:[%s8] sm:$0x1]
        %v879 = vld [vmem:[%s8 + $0x1] sm:$0x1]
        %v880 = vld [vmem:[%s8 + $0x2] sm:$0x1]
        %v881 = vld [vmem:[%s8 + $0x3] sm:$0x1]
        %v886 = vperm.slane %v878, 0
        %v887 = vperm.slane %v879, 0
        %v888 = vperm.slane %v880, 0
        %v889 = vperm.slane %v881, 0
        %v898 = vunpack.c.l.b16 %v862
        %v899 = vunpack.c.l.b16 %v863
        %v900 = vunpack.c.l.b16 %v864
        %v901 = vunpack.c.l.b16 %v865
        %v902 = vpack.c.b16 %v899, %v898
        %v903 = vpack.c.b16 %v901, %v900
        %906 = vmatpush.bf16.msra.mxu0 0
        %907 = vmatpush.bf16.msra.mxu0 0
        %908 = vmatpush.bf16.msra.mxu0 0
        %909 = vmatpush.bf16.msra.mxu0 0
        %910 = vmatpush.bf16.msra.mxu0 0
        %911 = vmatpush.bf16.msra.mxu0 0
        %912 = vmatpush.bf16.msra.mxu0 %v903
        %913 = vmatpush.bf16.msra.mxu0 %v902
        %914 = vmatmul.bf16.gmra.mxu0 %v632
        %v915 = vpop.f32.mrf.mxu0
        %v916 = vadd.f32 %v886, %v915
        %v917 = vpop.f32.mrf.mxu0
        %918 = vdwg.mxu0
        %v923 = vunpack.c.l.b16 %v866
        %v924 = vunpack.c.l.b16 %v867
        %v925 = vunpack.c.l.b16 %v868
        %v926 = vunpack.c.l.b16 %v869
        %v927 = vpack.c.b16 %v924, %v923
        %v928 = vpack.c.b16 %v926, %v925
        %931 = vmatpush.bf16.msra.mxu0 0
        %932 = vmatpush.bf16.msra.mxu0 0
        %933 = vmatpush.bf16.msra.mxu0 0
        %934 = vmatpush.bf16.msra.mxu0 0
        %935 = vmatpush.bf16.msra.mxu0 0
        %936 = vmatpush.bf16.msra.mxu0 0
        %937 = vmatpush.bf16.msra.mxu0 %v928
        %938 = vmatpush.bf16.msra.mxu0 %v927
        %939 = vmatmul.bf16.gmra.mxu0 %v632
        %v940 = vpop.f32.mrf.mxu0
        %v941 = vadd.f32 %v887, %v940
        %v942 = vpop.f32.mrf.mxu0
        %943 = vdwg.mxu0
        %v948 = vunpack.c.l.b16 %v870
        %v949 = vunpack.c.l.b16 %v871
        %v950 = vunpack.c.l.b16 %v872
        %v951 = vunpack.c.l.b16 %v873
        %v952 = vpack.c.b16 %v949, %v948
        %v953 = vpack.c.b16 %v951, %v950
        %956 = vmatpush.bf16.msra.mxu0 0
        %957 = vmatpush.bf16.msra.mxu0 0
        %958 = vmatpush.bf16.msra.mxu0 0
        %959 = vmatpush.bf16.msra.mxu0 0
        %960 = vmatpush.bf16.msra.mxu0 0
        %961 = vmatpush.bf16.msra.mxu0 0
        %962 = vmatpush.bf16.msra.mxu0 %v953
        %963 = vmatpush.bf16.msra.mxu0 %v952
        %964 = vmatmul.bf16.gmra.mxu0 %v632
        %v965 = vpop.f32.mrf.mxu0
        %v966 = vadd.f32 %v888, %v965
        %v967 = vpop.f32.mrf.mxu0
        %968 = vdwg.mxu0
        %v973 = vunpack.c.l.b16 %v874
        %v974 = vunpack.c.l.b16 %v875
        %v975 = vunpack.c.l.b16 %v876
        %v976 = vunpack.c.l.b16 %v877
        %v977 = vpack.c.b16 %v974, %v973
        %v978 = vpack.c.b16 %v976, %v975
        %981 = vmatpush.bf16.msra.mxu0 0
        %982 = vmatpush.bf16.msra.mxu0 0
        %983 = vmatpush.bf16.msra.mxu0 0
        %984 = vmatpush.bf16.msra.mxu0 0
        %985 = vmatpush.bf16.msra.mxu0 0
        %986 = vmatpush.bf16.msra.mxu0 0
        %987 = vmatpush.bf16.msra.mxu0 %v978
        %988 = vmatpush.bf16.msra.mxu0 %v977
        %989 = vmatmul.bf16.gmra.mxu0 %v632
        %v990 = vpop.f32.mrf.mxu0
        %v991 = vadd.f32 %v889, %v990
        %v992 = vpop.f32.mrf.mxu0
        %993 = vdwg.mxu0
        %v994 = vpack.c.bf16 %v916, %v916
        %v995 = vpack.c.bf16 %v941, %v941
        %v996 = vpack.c.bf16 %v966, %v966
        %v997 = vpack.c.bf16 %v991, %v991
        %vm998 = vcmask 64512
        %v1000 = vsel %vm998, %v722, 0
        %v1003 = vsel %vm998, %v858, 0
        %1005 = vmatpush.bf16.xpose.msra.mxu0 0
        %1006 = vmatpush.bf16.xpose.msra.mxu0 0
        %1007 = vmatpush.bf16.xpose.msra.mxu0 0
        %1008 = vmatpush.bf16.xpose.msra.mxu0 0
        %1009 = vmatpush.bf16.xpose.msra.mxu0 0
        %1010 = vmatpush.bf16.xpose.msra.mxu0 0
        %1011 = vmatpush.bf16.xpose.msra.mxu0 0
        %1012 = vmatpush.bf16.xpose.msra.mxu0 %v1003
        %1013 = vmatmul.bf16.gmra.mxu0 %v1000
        %v1014 = vpop.f32.mrf.mxu0
        %v1015 = vadd.f32 0.0, %v1014
        %v1016 = vpop.f32.mrf.mxu0
        %1017 = vdwg.mxu0
        %v1019 = vsel %vm998, %v723, 0
        %v1022 = vsel %vm998, %v859, 0
        %1024 = vmatpush.bf16.xpose.msra.mxu0 0
        %1025 = vmatpush.bf16.xpose.msra.mxu0 0
        %1026 = vmatpush.bf16.xpose.msra.mxu0 0
        %1027 = vmatpush.bf16.xpose.msra.mxu0 0
        %1028 = vmatpush.bf16.xpose.msra.mxu0 0
        %1029 = vmatpush.bf16.xpose.msra.mxu0 0
        %1030 = vmatpush.bf16.xpose.msra.mxu0 0
        %1031 = vmatpush.bf16.xpose.msra.mxu0 %v1022
        %1032 = vmatmul.bf16.gmra.mxu0 %v1019
        %v1033 = vpop.f32.mrf.mxu0
        %v1034 = vadd.f32 0.0, %v1033
        %v1035 = vpop.f32.mrf.mxu0
        %1036 = vdwg.mxu0
        %v1038 = vsel %vm998, %v724, 0
        %v1041 = vsel %vm998, %v860, 0
        %1043 = vmatpush.bf16.xpose.msra.mxu0 0
        %1044 = vmatpush.bf16.xpose.msra.mxu0 0
        %1045 = vmatpush.bf16.xpose.msra.mxu0 0
        %1046 = vmatpush.bf16.xpose.msra.mxu0 0
        %1047 = vmatpush.bf16.xpose.msra.mxu0 0
        %1048 = vmatpush.bf16.xpose.msra.mxu0 0
        %1049 = vmatpush.bf16.xpose.msra.mxu0 0
        %1050 = vmatpush.bf16.xpose.msra.mxu0 %v1041
        %1051 = vmatmul.bf16.gmra.mxu0 %v1038
        %v1052 = vpop.f32.mrf.mxu0
        %v1053 = vadd.f32 0.0, %v1052
        %v1054 = vpop.f32.mrf.mxu0
        %1055 = vdwg.mxu0
        %v1057 = vsel %vm998, %v725, 0
        %v1060 = vsel %vm998, %v861, 0
        %1062 = vmatpush.bf16.xpose.msra.mxu0 0
        %1063 = vmatpush.bf16.xpose.msra.mxu0 0
        %1064 = vmatpush.bf16.xpose.msra.mxu0 0
        %1065 = vmatpush.bf16.xpose.msra.mxu0 0
        %1066 = vmatpush.bf16.xpose.msra.mxu0 0
        %1067 = vmatpush.bf16.xpose.msra.mxu0 0
        %1068 = vmatpush.bf16.xpose.msra.mxu0 0
        %1069 = vmatpush.bf16.xpose.msra.mxu0 %v1060
        %1070 = vmatmul.bf16.gmra.mxu0 %v1057
        %v1071 = vpop.f32.mrf.mxu0
        %v1072 = vadd.f32 0.0, %v1071
        %v1073 = vpop.f32.mrf.mxu0
        %1074 = vdwg.mxu0
        %v1075 = vmul.f32 %v1015, 0.35355338
        %v1076 = vmul.f32 %v1034, 0.35355338
        %v1077 = vmul.f32 %v1053, 0.35355338
        %v1078 = vmul.f32 %v1072, 0.35355338
        %v1079 = vsel %vm998, %v1075, -inf
        %1080 = vmax.xlane.f32.xlu0 %v1079
        %v1081 = vpop.xlane.xlu0 %1080
        %v1082 = vsel %vm998, %v1076, -inf
        %1083 = vmax.xlane.f32.xlu0 %v1082
        %v1084 = vpop.xlane.xlu0 %1083
        %v1085 = vsel %vm998, %v1077, -inf
        %1086 = vmax.xlane.f32.xlu0 %v1085
        %v1087 = vpop.xlane.xlu0 %1086
        %v1088 = vsel %vm998, %v1078, -inf
        %1089 = vmax.xlane.f32.xlu0 %v1088
        %v1090 = vpop.xlane.xlu0 %1089
        %v1091 = vsub.f32 %v1075, %v1081
        %v1092 = vsub.f32 %v1076, %v1084
        %v1093 = vsub.f32 %v1077, %v1087
        %v1094 = vsub.f32 %v1078, %v1090
        %v1095 = vmul.f32 %v1091, 1.442695
        %v1096 = vpow.pop %v1095
        %v1097 = vmul.f32 %v1092, 1.442695
        %v1098 = vpow.pop %v1097
        %v1099 = vmul.f32 %v1093, 1.442695
        %v1100 = vpow.pop %v1099
        %v1101 = vmul.f32 %v1094, 1.442695
        %v1102 = vpow.pop %v1101
        %v1103 = vsel %vm998, %v1096, 0.0
        %1104 = vadd.xlane.f32.xlu0 %v1103
        %v1105 = vpop.xlane.xlu0 %1104
        %v1106 = vsel %vm998, %v1098, 0.0
        %1107 = vadd.xlane.f32.xlu0 %v1106
        %v1108 = vpop.xlane.xlu0 %1107
        %v1109 = vsel %vm998, %v1100, 0.0
        %1110 = vadd.xlane.f32.xlu0 %v1109
        %v1111 = vpop.xlane.xlu0 %1110
        %v1112 = vsel %vm998, %v1102, 0.0
        %1113 = vadd.xlane.f32.xlu0 %v1112
        %v1114 = vpop.xlane.xlu0 %1113
        %v1115 = vrcp.pop %v1105
        %v1116 = vmul.f32 %v1105, %v1115
        %v1117 = vsub.f32 1.0, %v1116
        %v1118 = vmul.f32 %v1115, %v1117
        %v1119 = vadd.f32 %v1115, %v1118
        %vm1120 = vweird.f32 %v1105
        %vm1121 = vweird.f32 %v1115
        %vm1122 = vmor %vm1120, %vm1121
        %v1123 = vsel %vm1122, %v1115, %v1119
        %v1124 = vand.u32 2147483647, %v1105
        %vm1125 = vcmp.eq.f32.partialorder %v1124, 8.507059e+37
        %v1126 = vand.u32 %v1105, 2147483648
        %v1127 = vor.u32 1.1754944e-38, %v1126
        %v1128 = vsel %vm1125, %v1127, %v1123
        %v1129 = vmul.f32 %v1096, %v1128
        %v1130 = vrcp.pop %v1108
        %v1131 = vmul.f32 %v1108, %v1130
        %v1132 = vsub.f32 1.0, %v1131
        %v1133 = vmul.f32 %v1130, %v1132
        %v1134 = vadd.f32 %v1130, %v1133
        %vm1135 = vweird.f32 %v1108
        %vm1136 = vweird.f32 %v1130
        %vm1137 = vmor %vm1135, %vm1136
        %v1138 = vsel %vm1137, %v1130, %v1134
        %v1139 = vand.u32 2147483647, %v1108
        %vm1140 = vcmp.eq.f32.partialorder %v1139, 8.507059e+37
        %v1141 = vand.u32 %v1108, 2147483648
        %v1142 = vor.u32 1.1754944e-38, %v1141
        %v1143 = vsel %vm1140, %v1142, %v1138
        %v1144 = vmul.f32 %v1098, %v1143
        %v1145 = vrcp.pop %v1111
        %v1146 = vmul.f32 %v1111, %v1145
        %v1147 = vsub.f32 1.0, %v1146
        %v1148 = vmul.f32 %v1145, %v1147
        %v1149 = vadd.f32 %v1145, %v1148
        %vm1150 = vweird.f32 %v1111
        %vm1151 = vweird.f32 %v1145
        %vm1152 = vmor %vm1150, %vm1151
        %v1153 = vsel %vm1152, %v1145, %v1149
        %v1154 = vand.u32 2147483647, %v1111
        %vm1155 = vcmp.eq.f32.partialorder %v1154, 8.507059e+37
        %v1156 = vand.u32 %v1111, 2147483648
        %v1157 = vor.u32 1.1754944e-38, %v1156
        %v1158 = vsel %vm1155, %v1157, %v1153
        %v1159 = vmul.f32 %v1100, %v1158
        %v1160 = vrcp.pop %v1114
        %v1161 = vmul.f32 %v1114, %v1160
        %v1162 = vsub.f32 1.0, %v1161
        %v1163 = vmul.f32 %v1160, %v1162
        %v1164 = vadd.f32 %v1160, %v1163
        %vm1165 = vweird.f32 %v1114
        %vm1166 = vweird.f32 %v1160
        %vm1167 = vmor %vm1165, %vm1166
        %v1168 = vsel %vm1167, %v1160, %v1164
        %v1169 = vand.u32 2147483647, %v1114
        %vm1170 = vcmp.eq.f32.partialorder %v1169, 8.507059e+37
        %v1171 = vand.u32 %v1114, 2147483648
        %v1172 = vor.u32 1.1754944e-38, %v1171
        %v1173 = vsel %vm1170, %v1172, %v1168
        %v1174 = vmul.f32 %v1102, %v1173
        %v1175 = vpack.c.bf16 %v1129, %v1129
        %v1176 = vpack.c.bf16 %v1144, %v1144
        %v1177 = vpack.c.bf16 %v1159, %v1159
        %v1178 = vpack.c.bf16 %v1174, %v1174
        %v1180 = vsel %vm998, %v1175, 0
        %vm1182 = vcmask 1043456
        %v1184 = vsel %vm1182, %v994, 0
        %1186 = vmatpush.bf16.msra.mxu0 0
        %1187 = vmatpush.bf16.msra.mxu0 0
        %1188 = vmatpush.bf16.msra.mxu0 0
        %1189 = vmatpush.bf16.msra.mxu0 0
        %1190 = vmatpush.bf16.msra.mxu0 0
        %1191 = vmatpush.bf16.msra.mxu0 0
        %1192 = vmatpush.bf16.msra.mxu0 0
        %1193 = vmatpush.bf16.msra.mxu0 %v1184
        %1194 = vmatmul.bf16.gmra.mxu0 %v1180
        %v1195 = vpop.f32.mrf.mxu0
        %v1196 = vadd.f32 0.0, %v1195
        %v1197 = vpop.f32.mrf.mxu0
        %1198 = vdwg.mxu0
        %v1200 = vsel %vm998, %v1176, 0
        %v1203 = vsel %vm1182, %v995, 0
        %1205 = vmatpush.bf16.msra.mxu0 0
        %1206 = vmatpush.bf16.msra.mxu0 0
        %1207 = vmatpush.bf16.msra.mxu0 0
        %1208 = vmatpush.bf16.msra.mxu0 0
        %1209 = vmatpush.bf16.msra.mxu0 0
        %1210 = vmatpush.bf16.msra.mxu0 0
        %1211 = vmatpush.bf16.msra.mxu0 0
        %1212 = vmatpush.bf16.msra.mxu0 %v1203
        %1213 = vmatmul.bf16.gmra.mxu0 %v1200
        %v1214 = vpop.f32.mrf.mxu0
        %v1215 = vadd.f32 0.0, %v1214
        %v1216 = vpop.f32.mrf.mxu0
        %1217 = vdwg.mxu0
        %v1219 = vsel %vm998, %v1177, 0
        %v1222 = vsel %vm1182, %v996, 0
        %1224 = vmatpush.bf16.msra.mxu0 0
        %1225 = vmatpush.bf16.msra.mxu0 0
        %1226 = vmatpush.bf16.msra.mxu0 0
        %1227 = vmatpush.bf16.msra.mxu0 0
        %1228 = vmatpush.bf16.msra.mxu0 0
        %1229 = vmatpush.bf16.msra.mxu0 0
        %1230 = vmatpush.bf16.msra.mxu0 0
        %1231 = vmatpush.bf16.msra.mxu0 %v1222
        %1232 = vmatmul.bf16.gmra.mxu0 %v1219
        %v1233 = vpop.f32.mrf.mxu0
        %v1234 = vadd.f32 0.0, %v1233
        %v1235 = vpop.f32.mrf.mxu0
        %1236 = vdwg.mxu0
        %v1238 = vsel %vm998, %v1178, 0
        %v1241 = vsel %vm1182, %v997, 0
        %1243 = vmatpush.bf16.msra.mxu0 0
        %1244 = vmatpush.bf16.msra.mxu0 0
        %1245 = vmatpush.bf16.msra.mxu0 0
        %1246 = vmatpush.bf16.msra.mxu0 0
        %1247 = vmatpush.bf16.msra.mxu0 0
        %1248 = vmatpush.bf16.msra.mxu0 0
        %1249 = vmatpush.bf16.msra.mxu0 0
        %1250 = vmatpush.bf16.msra.mxu0 %v1241
        %1251 = vmatmul.bf16.gmra.mxu0 %v1238
        %v1252 = vpop.f32.mrf.mxu0
        %v1253 = vadd.f32 0.0, %v1252
        %v1254 = vpop.f32.mrf.mxu0
        %1255 = vdwg.mxu0
        %v1256 = vpack.c.bf16 %v1196, %v1196
        %v1257 = vpack.c.bf16 %v1215, %v1215
        %v1258 = vpack.c.bf16 %v1234, %v1234
        %v1259 = vpack.c.bf16 %v1253, %v1253
        %v1260 = vld [vmem:[%s9] sm:$0xf]
        %v1261 = vld [vmem:[%s9 + $0x4] sm:$0xf]
        %v1262 = vld [vmem:[%s9 + $0x8] sm:$0xf]
        %v1263 = vld [vmem:[%s9 + $0xc] sm:$0xf]
        %v1265 = vsel %vm998, %v1256, 0
        %v1268 = vsel %vm1182, %v1260, 0
        %1270 = vmatpush.bf16.msra.mxu0 0
        %1271 = vmatpush.bf16.msra.mxu0 0
        %1272 = vmatpush.bf16.msra.mxu0 0
        %1273 = vmatpush.bf16.msra.mxu0 0
        %1274 = vmatpush.bf16.msra.mxu0 0
        %1275 = vmatpush.bf16.msra.mxu0 0
        %1276 = vmatpush.bf16.msra.mxu0 0
        %1277 = vmatpush.bf16.msra.mxu0 %v1268
        %1278 = vmatmul.bf16.gmra.mxu0 %v1265
        %v1279 = vpop.f32.mrf.mxu0
        %v1280 = vadd.f32 0.0, %v1279
        %v1281 = vpop.f32.mrf.mxu0
        %1282 = vdwg.mxu0
        %v1284 = vsel %vm998, %v1257, 0
        %v1287 = vsel %vm1182, %v1261, 0
        %1289 = vmatpush.bf16.msra.mxu0 0
        %1290 = vmatpush.bf16.msra.mxu0 0
        %1291 = vmatpush.bf16.msra.mxu0 0
        %1292 = vmatpush.bf16.msra.mxu0 0
        %1293 = vmatpush.bf16.msra.mxu0 0
        %1294 = vmatpush.bf16.msra.mxu0 0
        %1295 = vmatpush.bf16.msra.mxu0 0
        %1296 = vmatpush.bf16.msra.mxu0 %v1287
        %1297 = vmatmul.bf16.gmra.mxu0 %v1284
        %v1298 = vpop.f32.mrf.mxu0
        %v1299 = vadd.f32 0.0, %v1298
        %v1300 = vpop.f32.mrf.mxu0
        %1301 = vdwg.mxu0
        %v1303 = vsel %vm998, %v1258, 0
        %v1306 = vsel %vm1182, %v1262, 0
        %1308 = vmatpush.bf16.msra.mxu0 0
        %1309 = vmatpush.bf16.msra.mxu0 0
        %1310 = vmatpush.bf16.msra.mxu0 0
        %1311 = vmatpush.bf16.msra.mxu0 0
        %1312 = vmatpush.bf16.msra.mxu0 0
        %1313 = vmatpush.bf16.msra.mxu0 0
        %1314 = vmatpush.bf16.msra.mxu0 0
        %1315 = vmatpush.bf16.msra.mxu0 %v1306
        %1316 = vmatmul.bf16.gmra.mxu0 %v1303
        %v1317 = vpop.f32.mrf.mxu0
        %v1318 = vadd.f32 0.0, %v1317
        %v1319 = vpop.f32.mrf.mxu0
        %1320 = vdwg.mxu0
        %v1322 = vsel %vm998, %v1259, 0
        %v1325 = vsel %vm1182, %v1263, 0
        %1327 = vmatpush.bf16.msra.mxu0 0
        %1328 = vmatpush.bf16.msra.mxu0 0
        %1329 = vmatpush.bf16.msra.mxu0 0
        %1330 = vmatpush.bf16.msra.mxu0 0
        %1331 = vmatpush.bf16.msra.mxu0 0
        %1332 = vmatpush.bf16.msra.mxu0 0
        %1333 = vmatpush.bf16.msra.mxu0 0
        %1334 = vmatpush.bf16.msra.mxu0 %v1325
        %1335 = vmatmul.bf16.gmra.mxu0 %v1322
        %v1336 = vpop.f32.mrf.mxu0
        %v1337 = vadd.f32 0.0, %v1336
        %v1338 = vpop.f32.mrf.mxu0
        %1339 = vdwg.mxu0
        %v1340 = vsel %vm548, %v1280, 0.0
        %v1341 = vsel %vm548, %v1299, 0.0
        %v1342 = vadd.f32 %v1340, %v1341
        %v1343 = vsel %vm548, %v1318, 0.0
        %v1344 = vadd.f32 %v1342, %v1343
        %v1345 = vsel %vm548, %v1337, 0.0
        %v1346 = vadd.f32 %v1344, %v1345
        %v1347 = vld [vmem:[%s10] sm:$0x1]
        %v1349 = vperm.slane %v1347, 0
        %v1351 = vadd.f32 %v1346, %v1349
        %v1352 = vadd.f32 %v545, %v1351
        %v1353 = vld [vmem:[%s11] sm:$0x1]
        %v1354 = vld [vmem:[%s12] sm:$0x1]
        %v1355 = vsel %vm548, %v1352, 0.0
        %1356 = vadd.xlane.f32.xlu0 %v1355
        %v1357 = vpop.xlane.xlu0 %1356
        %v1358 = vmul.f32 %v1357, %v558
        %v1359 = vsub.f32 %v1352, %v1358
        %v1360 = vmul.f32 %v1359, %v1359
        %v1361 = vsel %vm548, %v1360, 0.0
        %1362 = vadd.xlane.f32.xlu0 %v1361
        %v1363 = vpop.xlane.xlu0 %1362
        %v1364 = vmul.f32 %v1363, %v558
        %v1365 = vadd.f32 %v1364, 1e-05
        %v1366 = vrsqrt.pop %v1365
        %v1367 = vmul.f32 %v1366, %v1365
        %v1368 = vmul.f32 %v1367, %v1366
        %v1369 = vmul.f32 0.5, %v1368
        %v1370 = vsub.f32 1.5, %v1369
        %v1371 = vmul.f32 %v1366, %v1370
        %vm1372 = vweird.f32 %v1365
        %vm1373 = vweird.f32 %v1366
        %vm1374 = vmor %vm1372, %vm1373
        %v1375 = vsel %vm1374, %v1366, %v1371
        %v1376 = vmul.f32 %v1359, %v1375
        %v1378 = vperm.slane %v1353, 0
        %v1380 = vmul.f32 %v1376, %v1378
        %v1382 = vperm.slane %v1354, 0
        %v1384 = vadd.f32 %v1380, %v1382
        %v1385 = vpack.c.bf16 %v1384, %v1384
        %v1386 = vld [vmem:[%s13] sm:$0xf]
        %v1387 = vld [vmem:[%s13 + $0x4] sm:$0xf]
        %v1388 = vld [vmem:[%s13 + $0x8] sm:$0xf]
        %v1389 = vld [vmem:[%s13 + $0xc] sm:$0xf]
        %v1390 = vld [vmem:[%s14] sm:$0x1]
        %v1392 = vperm.slane %v1390, 0
        %v1398 = vunpack.c.l.b16 %v1386
        %v1399 = vunpack.c.l.b16 %v1387
        %v1400 = vunpack.c.l.b16 %v1388
        %v1401 = vunpack.c.l.b16 %v1389
        %v1402 = vpack.c.b16 %v1399, %v1398
        %v1403 = vpack.c.b16 %v1401, %v1400
        %v1407 = vsel %vm548, %v1385, 0
        %1409 = vmatpush.bf16.msra.mxu0 0
        %1410 = vmatpush.bf16.msra.mxu0 0
        %1411 = vmatpush.bf16.msra.mxu0 0
        %1412 = vmatpush.bf16.msra.mxu0 0
        %1413 = vmatpush.bf16.msra.mxu0 0
        %1414 = vmatpush.bf16.msra.mxu0 0
        %1415 = vmatpush.bf16.msra.mxu0 %v1403
        %1416 = vmatpush.bf16.msra.mxu0 %v1402
        %1417 = vmatmul.bf16.gmra.mxu0 %v1407
        %v1418 = vpop.f32.mrf.mxu0
        %v1419 = vadd.f32 %v1392, %v1418
        %v1420 = vpop.f32.mrf.mxu0
        %1421 = vdwg.mxu0
        %v1422 = vmul.f32 %v1419, 0.5
        %v1423 = vmul.f32 %v1419, 0.70710677
        %v1424 = vmul.f32 %v1423, %v1423
        %v1425 = vmin.f32 16.0, %v1424
        %v1426 = vmul.f32 %v1425, 2.1237322e-06
        %v1427 = vadd.f32 %v1426, 0.00028619796
        %v1428 = vmul.f32 %v1425, %v1427
        %v1429 = vadd.f32 %v1428, 0.0036580483
        %v1430 = vmul.f32 %v1425, %v1429
        %v1431 = vadd.f32 %v1430, 0.05243302
        %v1432 = vmul.f32 %v1425, %v1431
        %v1433 = vadd.f32 %v1432, 0.18741608
        %v1434 = vmul.f32 %v1425, %v1433
        %v1435 = vadd.f32 %v1434, 1.1283791
        %v1436 = vmul.f32 %v1423, %v1435
        %v1437 = vmul.f32 %v1425, 3.8918573e-05
        %v1438 = vadd.f32 %v1437, 0.001143296
        %v1439 = vmul.f32 %v1425, %v1438
        %v1440 = vadd.f32 %v1439, 0.014752088
        %v1441 = vmul.f32 %v1425, %v1440
        %v1442 = vadd.f32 %v1441, 0.112945676
        %v1443 = vmul.f32 %v1425, %v1442
        %v1444 = vadd.f32 %v1443, 0.4994258
        %v1445 = vmul.f32 %v1425, %v1444
        %v1446 = vadd.f32 %v1445, 1.0
        %v1447 = vrcp.pop %v1446
        %v1448 = vmul.f32 %v1446, %v1447
        %v1449 = vsub.f32 1.0, %v1448
        %v1450 = vmul.f32 %v1447, %v1449
        %v1451 = vadd.f32 %v1447, %v1450
        %vm1452 = vweird.f32 %v1446
        %vm1453 = vweird.f32 %v1447
        %vm1454 = vmor %vm1452, %vm1453
        %v1455 = vsel %vm1454, %v1447, %v1451
        %v1456 = vand.u32 2147483647, %v1446
        %vm1457 = vcmp.eq.f32.partialorder %v1456, 8.507059e+37
        %v1458 = vand.u32 %v1446, 2147483648
        %v1459 = vor.u32 1.1754944e-38, %v1458
        %v1460 = vsel %vm1457, %v1459, %v1455
        %v1461 = vmul.f32 %v1436, %v1460
        %v1462 = vmin.f32 %v1461, 1.0
        %v1463 = vmax.f32 %v1462, -1.0
        %v1464 = vadd.f32 %v1463, 1.0
        %v1465 = vmul.f32 %v1422, %v1464
        %v1466 = vpack.c.bf16 %v1465, %v1465
        %v1467 = vld [vmem:[%s15] sm:$0xf]
        %v1468 = vld [vmem:[%s15 + $0x4] sm:$0xf]
        %v1469 = vld [vmem:[%s15 + $0x8] sm:$0xf]
        %v1470 = vld [vmem:[%s15 + $0xc] sm:$0xf]
        %v1471 = vld [vmem:[%s15 + $0x10] sm:$0xf]
        %v1472 = vld [vmem:[%s15 + $0x14] sm:$0xf]
        %v1473 = vld [vmem:[%s15 + $0x18] sm:$0xf]
        %v1474 = vld [vmem:[%s15 + $0x1c] sm:$0xf]
        %v1475 = vld [vmem:[%s15 + $0x20] sm:$0xf]
        %v1476 = vld [vmem:[%s15 + $0x24] sm:$0xf]
        %v1477 = vld [vmem:[%s15 + $0x28] sm:$0xf]
        %v1478 = vld [vmem:[%s15 + $0x2c] sm:$0xf]
        %v1479 = vld [vmem:[%s15 + $0x30] sm:$0xf]
        %v1480 = vld [vmem:[%s15 + $0x34] sm:$0xf]
        %v1481 = vld [vmem:[%s15 + $0x38] sm:$0xf]
        %v1482 = vld [vmem:[%s15 + $0x3c] sm:$0xf]
        %v1483 = vld [vmem:[%s16] sm:$0x1]
        %v1485 = vperm.slane %v1483, 0
        %v1503 = vunpack.c.l.b16 %v1467
        %v1504 = vunpack.c.l.b16 %v1468
        %v1505 = vunpack.c.l.b16 %v1469
        %v1506 = vunpack.c.l.b16 %v1470
        %v1507 = vunpack.c.l.b16 %v1471
        %v1508 = vunpack.c.l.b16 %v1472
        %v1509 = vunpack.c.l.b16 %v1473
        %v1510 = vunpack.c.l.b16 %v1474
        %v1511 = vunpack.c.l.b16 %v1475
        %v1512 = vunpack.c.l.b16 %v1476
        %v1513 = vunpack.c.l.b16 %v1477
        %v1514 = vunpack.c.l.b16 %v1478
        %v1515 = vunpack.c.l.b16 %v1479
        %v1516 = vunpack.c.l.b16 %v1480
        %v1517 = vunpack.c.l.b16 %v1481
        %v1518 = vunpack.c.l.b16 %v1482
        %v1519 = vpack.c.b16 %v1504, %v1503
        %v1520 = vpack.c.b16 %v1506, %v1505
        %v1521 = vpack.c.b16 %v1508, %v1507
        %v1522 = vpack.c.b16 %v1510, %v1509
        %v1523 = vpack.c.b16 %v1512, %v1511
        %v1524 = vpack.c.b16 %v1514, %v1513
        %v1525 = vpack.c.b16 %v1516, %v1515
        %v1526 = vpack.c.b16 %v1518, %v1517
        %1535 = vmatpush.bf16.msra.mxu0 %v1526
        %1536 = vmatpush.bf16.msra.mxu0 %v1525
        %1537 = vmatpush.bf16.msra.mxu0 %v1524
        %1538 = vmatpush.bf16.msra.mxu0 %v1523
        %1539 = vmatpush.bf16.msra.mxu0 %v1522
        %1540 = vmatpush.bf16.msra.mxu0 %v1521
        %1541 = vmatpush.bf16.msra.mxu0 %v1520
        %1542 = vmatpush.bf16.msra.mxu0 %v1519
        %1543 = vmatmul.bf16.gmra.mxu0 %v1466
        %v1544 = vpop.f32.mrf.mxu0
        %v1545 = vadd.f32 %v1485, %v1544
        %v1546 = vpop.f32.mrf.mxu0
        %1547 = vdwg.mxu0
        %v1548 = vadd.f32 %v1352, %v1545
        %1549 = vst.msk [vmem:[%s539] sm:$0xff] %vm548, %v1548
        %s1550 = sand.u32 %s401, 1
        %s1551 = scalar_lea.sflag [#allocation3], %s1550
        %s1552 = sand.u32 %s401, 1
        %s1553 = smul.addr %s1552, 8
        %s1554 = scalar_lea.vmem [#allocation2], %s1553
        // Predicated region
        $region89: #{tpu_custom_call.1} parent=87 // pred_check
          %p1555 = pneg %p411
        $region90: #{tpu_custom_call.1} parent=87 // pred_check_branch
          %1557 = sbr.rel (%p1555) target = $region92
        $region91: #{tpu_custom_call.1} parent=87 // pred_region
          %1559 = vsyncadd %s1551, 0
          %s1560 = smul.addr %s31, 8
          %s1561 = scalar_lea.hbm %s17, %s1560
          %s1563 = sshll.u32 %s1554, 4
          %s1564 = int_to_ptr.vmem [resolvable:$true] %s1563
          %s1565 = sshll.u32 %s1561, 4
          %s1566 = int_to_ptr.hbm [resolvable:$true] %s1565
          %1568 = dma.vmem_to_hbm [thread:$0]  %s1564, 128, %s1566, %s1551
        $region92: #{tpu_custom_call.1} parent=87 // pred_fallthru
          _
      $region88: #{tpu_custom_call.1} parent=5 // pred_fallthru
        _
      %p1569 = scmp.le.s32.totalorder 2, %s26
      // Predicated region
      $region93: #{tpu_custom_call.1} parent=5 // pred_check
        %p1570 = pneg %p1569
      $region94: #{tpu_custom_call.1} parent=5 // pred_check_branch
        %1572 = sbr.rel (%p1570) target = $region96
      $region95: #{tpu_custom_call.1} parent=5 // pred_region
        %s1573 = ssub.s32 %s26, 2
        // Predicated region
        $region97: #{tpu_custom_call.1} parent=95 // pred_check
          %p1574 = pneg %p417
        $region98: #{tpu_custom_call.1} parent=95 // pred_check_branch
          %1576 = sbr.rel (%p1574) target = $region100
        $region99: #{tpu_custom_call.1} parent=95 // pred_region
          %s1577 = sand.u32 %s402, 1
          %s1578 = scalar_lea.sflag [#allocation3], %s1577
          %s1579 = sand.u32 %s402, 1
          %s1580 = smul.addr %s1579, 8
          %s1581 = scalar_lea.vmem [#allocation2], %s1580
          %1583 = dma.done %s1578, 128
        $region100: #{tpu_custom_call.1} parent=95 // pred_fallthru
          _
      $region96: #{tpu_custom_call.1} parent=5 // pred_fallthru
        _
    $region6: #{tpu_custom_call.1} parent=1 // loop_footer
      %s30 = sadd.s32 1, %s26
    $region7: #{tpu_custom_call.1} parent=1 // loop_footer_branch
      %25 = sbr.rel target = $region3
    $region8: #{tpu_custom_call.1} parent=1 // loop_exit
      _
    %1584 = vsyncpa [#allocation3], 1
    %s1585 = scalar_lea.sflag [#allocation3], 1
    %1586 = vsyncpa %s1585, 1

// kernel: tpu_custom_call.1
$region0: #{tpu_custom_call.1}
  #allocation0 [shape = 'u32[]', space=smem, size = 0x4, offset = 0x4, fixed_abs, tag = 'smem constant byte address 0x4 - core index']
  #allocation1 [shape = 'u32[72,128]{1,0:T(1,128)}', space=vmem, size = 0x9000, scoped, tag = 'internal scratch']
  %s0 = inlined_call_operand.vmem [shape: f32[2,8,32], index: 0, kind: input, shape index: {}]
  %s1 = inlined_call_operand.vmem [shape: f32[1,32], index: 1, kind: input, shape index: {}]
  %s2 = inlined_call_operand.vmem [shape: f32[1,32], index: 2, kind: input, shape index: {}]
  %s3 = inlined_call_operand.vmem [shape: bf16[4,32,8], index: 3, kind: input, shape index: {}]
  %s4 = inlined_call_operand.vmem [shape: bf16[4,32,8], index: 4, kind: input, shape index: {}]
  %s5 = inlined_call_operand.vmem [shape: bf16[4,32,8], index: 5, kind: input, shape index: {}]
  %s6 = inlined_call_operand.vmem [shape: f32[4,1,8], index: 6, kind: input, shape index: {}]
  %s7 = inlined_call_operand.vmem [shape: f32[4,1,8], index: 7, kind: input, shape index: {}]
  %s8 = inlined_call_operand.vmem [shape: f32[4,1,8], index: 8, kind: input, shape index: {}]
  %s9 = inlined_call_operand.vmem [shape: bf16[4,8,32], index: 9, kind: input, shape index: {}]
  %s10 = inlined_call_operand.vmem [shape: f32[1,32], index: 10, kind: input, shape index: {}]
  %s11 = inlined_call_operand.vmem [shape: f32[1,32], index: 11, kind: input, shape index: {}]
  %s12 = inlined_call_operand.vmem [shape: f32[1,32], index: 12, kind: input, shape index: {}]
  %s13 = inlined_call_operand.vmem [shape: bf16[32,128], index: 13, kind: input, shape index: {}]
  %s14 = inlined_call_operand.vmem [shape: f32[1,128], index: 14, kind: input, shape index: {}]
  %s15 = inlined_call_operand.vmem [shape: bf16[128,32], index: 15, kind: input, shape index: {}]
  %s16 = inlined_call_operand.vmem [shape: f32[1,32], index: 16, kind: input, shape index: {}]
  %s17 = inlined_call_operand.hbm [shape: f32[2,8,32], index: 17, kind: output, shape index: {}]
  %s18 = sld [smem:[#allocation0]]
  $region101: #{tpu_custom_call.1} parent=0
    _
  %s20 = ssub.s32 1, %s18
  %s21 = scalar_select 0, %s20, %s18
  $region1: #{tpu_custom_call.1} parent=0
    #allocation2 [shape = 'u8[8192]{0}', space=vmem, size = 0x2000, scoped, tag = 'output window, operand 0']
    #allocation3 [shape = 's32[2]{0}', space=sflag, size = 0x8, scoped, tag = 'scoped memory for tpu_custom_call.1']
    %22 = vsyncpa [#allocation3], 0
    %s23 = scalar_lea.sflag [#allocation3], 1
    %24 = vsyncpa %s23, 0
    loop: start=0, step=1, limit=4
    $region2: #{tpu_custom_call.1} parent=1 // loop_pre_header
      _
    $region3: #{tpu_custom_call.1} parent=1 // loop_header
      %s26 = sphi 0, %s30
      %p27 = scmp.ge.s32.totalorder %s26, 4
      %s36 = sphi 0, %s38
      %s39 = sphi 0, %s36
      %s40 = sphi 0, %s39
      %s56 = sphi 0, %s40
      %s60 = sphi 0, %s60
      %s62 = sphi 0, %s60
      %s63 = sphi 0, %s62
      %s77 = sphi 0, %s63
      %s81 = sphi 0, %s81
      %s83 = sphi 0, %s81
      %s84 = sphi 0, %s83
      %s98 = sphi 0, %s84
      %s102 = sphi 0, %s102
      %s104 = sphi 0, %s102
      %s105 = sphi 0, %s104
      %s119 = sphi 0, %s105
      %s123 = sphi 0, %s123
      %s125 = sphi 0, %s123
      %s126 = sphi 0, %s125
      %s140 = sphi 0, %s126
      %s144 = sphi 0, %s144
      %s146 = sphi 0, %s144
      %s147 = sphi 0, %s146
      %s161 = sphi 0, %s147
      %s165 = sphi 0, %s165
      %s167 = sphi 0, %s165
      %s168 = sphi 0, %s167
      %s182 = sphi 0, %s168
      %s186 = sphi 0, %s186
      %s188 = sphi 0, %s186
      %s189 = sphi 0, %s188
      %s203 = sphi 0, %s189
      %s207 = sphi 0, %s207
      %s209 = sphi 0, %s207
      %s210 = sphi 0, %s209
      %s224 = sphi 0, %s210
      %s228 = sphi 0, %s228
      %s230 = sphi 0, %s228
      %s231 = sphi 0, %s230
      %s245 = sphi 0, %s231
      %s249 = sphi 0, %s249
      %s251 = sphi 0, %s249
      %s252 = sphi 0, %s251
      %s266 = sphi 0, %s252
      %s270 = sphi 0, %s270
      %s272 = sphi 0, %s270
      %s273 = sphi 0, %s272
      %s287 = sphi 0, %s273
      %s291 = sphi 0, %s291
      %s293 = sphi 0, %s291
      %s294 = sphi 0, %s293
      %s308 = sphi 0, %s294
      %s312 = sphi 0, %s312
      %s314 = sphi 0, %s312
      %s315 = sphi 0, %s314
      %s329 = sphi 0, %s315
      %s333 = sphi 0, %s333
      %s335 = sphi 0, %s333
      %s336 = sphi 0, %s335
      %s350 = sphi 0, %s336
      %s354 = sphi 0, %s354
      %s356 = sphi 0, %s354
      %s357 = sphi 0, %s356
      %s371 = sphi 0, %s357
      %s375 = sphi 0, %s375
      %s377 = sphi 0, %s375
      %s378 = sphi 0, %s377
      %s392 = sphi 0, %s378
      %s398 = sphi 0, %s400
      %s401 = sphi 0, %s398
      %s402 = sphi 0, %s401
      %s418 = sphi 0, %s402
    $region4: #{tpu_custom_call.1} parent=1 // loop_header_branch
      %29 = sbr.rel (%p27) target = $region8
    $region5: #{tpu_custom_call.1} parent=1 // loop_body
      %s31 = ssub.s32 %s26, 1
      %s32 = ssub.s32 %s26, 2
      %s33 = sadd.s32 %s26, 1
      %s34 = ssub.s32 %s26, %s33
      %p35 = scmp.eq.s32.totalorder %s34, 0
      %s37 = sadd.s32 %s36, 1
      %s38 = scalar_select %p35, %s36, %s37
      %p41 = pneg %p35
      %p42 = scmp.eq.s32.totalorder %s26, 1
      %p43 = por %p41, %p42
      %p44 = scmp.ne.s32.totalorder %s36, %s39
      %p45 = scmp.eq.s32.totalorder %s26, 0
      %p46 = por %p44, %p45
      %p47 = scmp.ne.s32.totalorder %s36, %s39
      %p48 = scmp.eq.s32.totalorder %s31, 1
      %p49 = por %p47, %p48
      %p50 = scmp.ne.s32.totalorder %s39, %s40
      %p51 = scmp.eq.s32.totalorder %s31, 0
      %p52 = por %p50, %p51
      %p53 = scmp.ne.s32.totalorder %s39, %s40
      %p54 = scmp.eq.s32.totalorder %s32, 1
      %p55 = por %p53, %p54
      %p57 = scmp.ne.s32.totalorder %s40, %s56
      %p58 = scmp.eq.s32.totalorder %s32, 0
      %p59 = por %p57, %p58
      %s61 = sadd.s32 %s60, 1
      %p64 = scmp.eq.s32.totalorder %s26, 1
      %p65 = scmp.ne.s32.totalorder %s60, %s62
      %p66 = scmp.eq.s32.totalorder %s26, 0
      %p67 = por %p65, %p66
      %p68 = scmp.ne.s32.totalorder %s60, %s62
      %p69 = scmp.eq.s32.totalorder %s31, 1
      %p70 = por %p68, %p69
      %p71 = scmp.ne.s32.totalorder %s62, %s63
      %p72 = scmp.eq.s32.totalorder %s31, 0
      %p73 = por %p71, %p72
      %p74 = scmp.ne.s32.totalorder %s62, %s63
      %p75 = scmp.eq.s32.totalorder %s32, 1
      %p76 = por %p74, %p75
      %p78 = scmp.ne.s32.totalorder %s63, %s77
      %p79 = scmp.eq.s32.totalorder %s32, 0
      %p80 = por %p78, %p79
      %s82 = sadd.s32 %s81, 1
      %p85 = scmp.eq.s32.totalorder %s26, 1
      %p86 = scmp.ne.s32.totalorder %s81, %s83
      %p87 = scmp.eq.s32.totalorder %s26, 0
      %p88 = por %p86, %p87
      %p89 = scmp.ne.s32.totalorder %s81, %s83
      %p90 = scmp.eq.s32.totalorder %s31, 1
      %p91 = por %p89, %p90
      %p92 = scmp.ne.s32.totalorder %s83, %s84
      %p93 = scmp.eq.s32.totalorder %s31, 0
      %p94 = por %p92, %p93
      %p95 = scmp.ne.s32.totalorder %s83, %s84
      %p96 = scmp.eq.s32.totalorder %s32, 1
      %p97 = por %p95, %p96
      %p99 = scmp.ne.s32.totalorder %s84, %s98
      %p100 = scmp.eq.s32.totalorder %s32, 0
      %p101 = por %p99, %p100
      %s103 = sadd.s32 %s102, 1
      %p106 = scmp.eq.s32.totalorder %s26, 1
      %p107 = scmp.ne.s32.totalorder %s102, %s104
      %p108 = scmp.eq.s32.totalorder %s26, 0
      %p109 = por %p107, %p108
      %p110 = scmp.ne.s32.totalorder %s102, %s104
      %p111 = scmp.eq.s32.totalorder %s31, 1
      %p112 = por %p110, %p111
      %p113 = scmp.ne.s32.totalorder %s104, %s105
      %p114 = scmp.eq.s32.totalorder %s31, 0
      %p115 = por %p113, %p114
      %p116 = scmp.ne.s32.totalorder %s104, %s105
      %p117 = scmp.eq.s32.totalorder %s32, 1
      %p118 = por %p116, %p117
      %p120 = scmp.ne.s32.totalorder %s105, %s119
      %p121 = scmp.eq.s32.totalorder %s32, 0
      %p122 = por %p120, %p121
      %s124 = sadd.s32 %s123, 1
      %p127 = scmp.eq.s32.totalorder %s26, 1
      %p128 = scmp.ne.s32.totalorder %s123, %s125
      %p129 = scmp.eq.s32.totalorder %s26, 0
      %p130 = por %p128, %p129
      %p131 = scmp.ne.s32.totalorder %s123, %s125
      %p132 = scmp.eq.s32.totalorder %s31, 1
      %p133 = por %p131, %p132
      %p134 = scmp.ne.s32.totalorder %s125, %s126
      %p135 = scmp.eq.s32.totalorder %s31, 0
      %p136 = por %p134, %p135
      %p137 = scmp.ne.s32.totalorder %s125, %s126
      %p138 = scmp.eq.s32.totalorder %s32, 1
      %p139 = por %p137, %p138
      %p141 = scmp.ne.s32.totalorder %s126, %s140
      %p142 = scmp.eq.s32.totalorder %s32, 0
      %p143 = por %p141, %p142
      %s145 = sadd.s32 %s144, 1
      %p148 = scmp.eq.s32.totalorder %s26, 1
      %p149 = scmp.ne.s32.totalorder %s144, %s146
      %p150 = scmp.eq.s32.totalorder %s26, 0
      %p151 = por %p149, %p150
      %p152 = scmp.ne.s32.totalorder %s144, %s146
      %p153 = scmp.eq.s32.totalorder %s31, 1
      %p154 = por %p152, %p153
      %p155 = scmp.ne.s32.totalorder %s146, %s147
      %p156 = scmp.eq.s32.totalorder %s31, 0
      %p157 = por %p155, %p156
      %p158 = scmp.ne.s32.totalorder %s146, %s147
      %p159 = scmp.eq.s32.totalorder %s32, 1
      %p160 = por %p158, %p159
      %p162 = scmp.ne.s32.totalorder %s147, %s161
      %p163 = scmp.eq.s32.totalorder %s32, 0
      %p164 = por %p162, %p163
      %s166 = sadd.s32 %s165, 1
      %p169 = scmp.eq.s32.totalorder %s26, 1
      %p170 = scmp.ne.s32.totalorder %s165, %s167
      %p171 = scmp.eq.s32.totalorder %s26, 0
      %p172 = por %p170, %p171
      %p173 = scmp.ne.s32.totalorder %s165, %s167
      %p174 = scmp.eq.s32.totalorder %s31, 1
      %p175 = por %p173, %p174
      %p176 = scmp.ne.s32.totalorder %s167, %s168
      %p177 = scmp.eq.s32.totalorder %s31, 0
      %p178 = por %p176, %p177
      %p179 = scmp.ne.s32.totalorder %s167, %s168
      %p180 = scmp.eq.s32.totalorder %s32, 1
      %p181 = por %p179, %p180
      %p183 = scmp.ne.s32.totalorder %s168, %s182
      %p184 = scmp.eq.s32.totalorder %s32, 0
      %p185 = por %p183, %p184
      %s187 = sadd.s32 %s186, 1
      %p190 = scmp.eq.s32.totalorder %s26, 1
      %p191 = scmp.ne.s32.totalorder %s186, %s188
      %p192 = scmp.eq.s32.totalorder %s26, 0
      %p193 = por %p191, %p192
      %p194 = scmp.ne.s32.totalorder %s186, %s188
      %p195 = scmp.eq.s32.totalorder %s31, 1
      %p196 = por %p194, %p195
      %p197 = scmp.ne.s32.totalorder %s188, %s189
      %p198 = scmp.eq.s32.totalorder %s31, 0
      %p199 = por %p197, %p198
      %p200 = scmp.ne.s32.totalorder %s188, %s189
      %p201 = scmp.eq.s32.totalorder %s32, 1
      %p202 = por %p200, %p201
      %p204 = scmp.ne.s32.totalorder %s189, %s203
      %p205 = scmp.eq.s32.totalorder %s32, 0
      %p206 = por %p204, %p205
      %s208 = sadd.s32 %s207, 1
      %p211 = scmp.eq.s32.totalorder %s26, 1
      %p212 = scmp.ne.s32.totalorder %s207, %s209
      %p213 = scmp.eq.s32.totalorder %s26, 0
      %p214 = por %p212, %p213
      %p215 = scmp.ne.s32.totalorder %s207, %s209
      %p216 = scmp.eq.s32.totalorder %s31, 1
      %p217 = por %p215, %p216
      %p218 = scmp.ne.s32.totalorder %s209, %s210
      %p219 = scmp.eq.s32.totalorder %s31, 0
      %p220 = por %p218, %p219
      %p221 = scmp.ne.s32.totalorder %s209, %s210
      %p222 = scmp.eq.s32.totalorder %s32, 1
      %p223 = por %p221, %p222
      %p225 = scmp.ne.s32.totalorder %s210, %s224
      %p226 = scmp.eq.s32.totalorder %s32, 0
      %p227 = por %p225, %p226
      %s229 = sadd.s32 %s228, 1
      %p232 = scmp.eq.s32.totalorder %s26, 1
      %p233 = scmp.ne.s32.totalorder %s228, %s230
      %p234 = scmp.eq.s32.totalorder %s26, 0
      %p235 = por %p233, %p234
      %p236 = scmp.ne.s32.totalorder %s228, %s230
      %p237 = scmp.eq.s32.totalorder %s31, 1
      %p238 = por %p236, %p237
      %p239 = scmp.ne.s32.totalorder %s230, %s231
      %p240 = scmp.eq.s32.totalorder %s31, 0
      %p241 = por %p239, %p240
      %p242 = scmp.ne.s32.totalorder %s230, %s231
      %p243 = scmp.eq.s32.totalorder %s32, 1
      %p244 = por %p242, %p243
      %p246 = scmp.ne.s32.totalorder %s231, %s245
      %p247 = scmp.eq.s32.totalorder %s32, 0
      %p248 = por %p246, %p247
      %s250 = sadd.s32 %s249, 1
      %p253 = scmp.eq.s32.totalorder %s26, 1
      %p254 = scmp.ne.s32.totalorder %s249, %s251
      %p255 = scmp.eq.s32.totalorder %s26, 0
      %p256 = por %p254, %p255
      %p257 = scmp.ne.s32.totalorder %s249, %s251
      %p258 = scmp.eq.s32.totalorder %s31, 1
      %p259 = por %p257, %p258
      %p260 = scmp.ne.s32.totalorder %s251, %s252
      %p261 = scmp.eq.s32.totalorder %s31, 0
      %p262 = por %p260, %p261
      %p263 = scmp.ne.s32.totalorder %s251, %s252
      %p264 = scmp.eq.s32.totalorder %s32, 1
      %p265 = por %p263, %p264
      %p267 = scmp.ne.s32.totalorder %s252, %s266
      %p268 = scmp.eq.s32.totalorder %s32, 0
      %p269 = por %p267, %p268
      %s271 = sadd.s32 %s270, 1
      %p274 = scmp.eq.s32.totalorder %s26, 1
      %p275 = scmp.ne.s32.totalorder %s270, %s272
      %p276 = scmp.eq.s32.totalorder %s26, 0
      %p277 = por %p275, %p276
      %p278 = scmp.ne.s32.totalorder %s270, %s272
      %p279 = scmp.eq.s32.totalorder %s31, 1
      %p280 = por %p278, %p279
      %p281 = scmp.ne.s32.totalorder %s272, %s273
      %p282 = scmp.eq.s32.totalorder %s31, 0
      %p283 = por %p281, %p282
      %p284 = scmp.ne.s32.totalorder %s272, %s273
      %p285 = scmp.eq.s32.totalorder %s32, 1
      %p286 = por %p284, %p285
      %p288 = scmp.ne.s32.totalorder %s273, %s287
      %p289 = scmp.eq.s32.totalorder %s32, 0
      %p290 = por %p288, %p289
      %s292 = sadd.s32 %s291, 1
      %p295 = scmp.eq.s32.totalorder %s26, 1
      %p296 = scmp.ne.s32.totalorder %s291, %s293
      %p297 = scmp.eq.s32.totalorder %s26, 0
      %p298 = por %p296, %p297
      %p299 = scmp.ne.s32.totalorder %s291, %s293
      %p300 = scmp.eq.s32.totalorder %s31, 1
      %p301 = por %p299, %p300
      %p302 = scmp.ne.s32.totalorder %s293, %s294
      %p303 = scmp.eq.s32.totalorder %s31, 0
      %p304 = por %p302, %p303
      %p305 = scmp.ne.s32.totalorder %s293, %s294
      %p306 = scmp.eq.s32.totalorder %s32, 1
      %p307 = por %p305, %p306
      %p309 = scmp.ne.s32.totalorder %s294, %s308
      %p310 = scmp.eq.s32.totalorder %s32, 0
      %p311 = por %p309, %p310
      %s313 = sadd.s32 %s312, 1
      %p316 = scmp.eq.s32.totalorder %s26, 1
      %p317 = scmp.ne.s32.totalorder %s312, %s314
      %p318 = scmp.eq.s32.totalorder %s26, 0
      %p319 = por %p317, %p318
      %p320 = scmp.ne.s32.totalorder %s312, %s314
      %p321 = scmp.eq.s32.totalorder %s31, 1
      %p322 = por %p320, %p321
      %p323 = scmp.ne.s32.totalorder %s314, %s315
      %p324 = scmp.eq.s32.totalorder %s31, 0
      %p325 = por %p323, %p324
      %p326 = scmp.ne.s32.totalorder %s314, %s315
      %p327 = scmp.eq.s32.totalorder %s32, 1
      %p328 = por %p326, %p327
      %p330 = scmp.ne.s32.totalorder %s315, %s329
      %p331 = scmp.eq.s32.totalorder %s32, 0
      %p332 = por %p330, %p331
      %s334 = sadd.s32 %s333, 1
      %p337 = scmp.eq.s32.totalorder %s26, 1
      %p338 = scmp.ne.s32.totalorder %s333, %s335
      %p339 = scmp.eq.s32.totalorder %s26, 0
      %p340 = por %p338, %p339
      %p341 = scmp.ne.s32.totalorder %s333, %s335
      %p342 = scmp.eq.s32.totalorder %s31, 1
      %p343 = por %p341, %p342
      %p344 = scmp.ne.s32.totalorder %s335, %s336
      %p345 = scmp.eq.s32.totalorder %s31, 0
      %p346 = por %p344, %p345
      %p347 = scmp.ne.s32.totalorder %s335, %s336
      %p348 = scmp.eq.s32.totalorder %s32, 1
      %p349 = por %p347, %p348
      %p351 = scmp.ne.s32.totalorder %s336, %s350
      %p352 = scmp.eq.s32.totalorder %s32, 0
      %p353 = por %p351, %p352
      %s355 = sadd.s32 %s354, 1
      %p358 = scmp.eq.s32.totalorder %s26, 1
      %p359 = scmp.ne.s32.totalorder %s354, %s356
      %p360 = scmp.eq.s32.totalorder %s26, 0
      %p361 = por %p359, %p360
      %p362 = scmp.ne.s32.totalorder %s354, %s356
      %p363 = scmp.eq.s32.totalorder %s31, 1
      %p364 = por %p362, %p363
      %p365 = scmp.ne.s32.totalorder %s356, %s357
      %p366 = scmp.eq.s32.totalorder %s31, 0
      %p367 = por %p365, %p366
      %p368 = scmp.ne.s32.totalorder %s356, %s357
      %p369 = scmp.eq.s32.totalorder %s32, 1
      %p370 = por %p368, %p369
      %p372 = scmp.ne.s32.totalorder %s357, %s371
      %p373 = scmp.eq.s32.totalorder %s32, 0
      %p374 = por %p372, %p373
      %s376 = sadd.s32 %s375, 1
      %p379 = scmp.eq.s32.totalorder %s26, 1
      %p380 = scmp.ne.s32.totalorder %s375, %s377
      %p381 = scmp.eq.s32.totalorder %s26, 0
      %p382 = por %p380, %p381
      %p383 = scmp.ne.s32.totalorder %s375, %s377
      %p384 = scmp.eq.s32.totalorder %s31, 1
      %p385 = por %p383, %p384
      %p386 = scmp.ne.s32.totalorder %s377, %s378
      %p387 = scmp.eq.s32.totalorder %s31, 0
      %p388 = por %p386, %p387
      %p389 = scmp.ne.s32.totalorder %s377, %s378
      %p390 = scmp.eq.s32.totalorder %s32, 1
      %p391 = por %p389, %p390
      %p393 = scmp.ne.s32.totalorder %s378, %s392
      %p394 = scmp.eq.s32.totalorder %s32, 0
      %p395 = por %p393, %p394
      %s396 = ssub.s32 %s26, %s33
      %p397 = scmp.eq.s32.totalorder %s396, 0
      %s399 = sadd.s32 %s398, 1
      %s400 = scalar_select %p397, %s398, %s399
      %p403 = pneg %p397
      %p404 = scmp.eq.s32.totalorder %s26, 1
      %p405 = por %p403, %p404
      %p406 = scmp.ne.s32.totalorder %s398, %s401
      %p407 = scmp.eq.s32.totalorder %s26, 0
      %p408 = por %p406, %p407
      %p409 = scmp.ne.s32.totalorder %s398, %s401
      %p410 = scmp.eq.s32.totalorder %s31, 1
      %p411 = por %p409, %p410
      %p412 = scmp.ne.s32.totalorder %s401, %s402
      %p413 = scmp.eq.s32.totalorder %s31, 0
      %p414 = por %p412, %p413
      %p415 = scmp.ne.s32.totalorder %s401, %s402
      %p416 = scmp.eq.s32.totalorder %s32, 1
      %p417 = por %p415, %p416
      %p419 = scmp.ne.s32.totalorder %s402, %s418
      %p420 = scmp.eq.s32.totalorder %s32, 0
      %p421 = por %p419, %p420
      %p422 = scmp.le.s32.totalorder 1, %s26
      %p423 = scmp.lt.s32.totalorder %s26, 3
      %p424 = pnand %p422, %p423
      %p425 = pneg %p424
      // Predicated region
      $region9: #{tpu_custom_call.1} parent=5 // pred_check
        _
      $region10: #{tpu_custom_call.1} parent=5 // pred_check_branch
        %427 = sbr.rel (%p424) target = $region12
      $region11: #{tpu_custom_call.1} parent=5 // pred_region
        %s428 = ssub.s32 %s26, 1
        // Predicated region
        $region13: #{tpu_custom_call.1} parent=11 // pred_check
          %p429 = pneg %p73
        $region14: #{tpu_custom_call.1} parent=11 // pred_check_branch
          %431 = sbr.rel (%p429) target = $region16
        $region15: #{tpu_custom_call.1} parent=11 // pred_region
          _
        $region16: #{tpu_custom_call.1} parent=11 // pred_fallthru
          _
        // Predicated region
        $region17: #{tpu_custom_call.1} parent=11 // pred_check
          %p432 = pneg %p94
        $region18: #{tpu_custom_call.1} parent=11 // pred_check_branch
          %434 = sbr.rel (%p432) target = $region20
        $region19: #{tpu_custom_call.1} parent=11 // pred_region
          _
        $region20: #{tpu_custom_call.1} parent=11 // pred_fallthru
          _
        // Predicated region
        $region21: #{tpu_custom_call.1} parent=11 // pred_check
          %p435 = pneg %p115
        $region22: #{tpu_custom_call.1} parent=11 // pred_check_branch
          %437 = sbr.rel (%p435) target = $region24
        $region23: #{tpu_custom_call.1} parent=11 // pred_region
          _
        $region24: #{tpu_custom_call.1} parent=11 // pred_fallthru
          _
        // Predicated region
        $region25: #{tpu_custom_call.1} parent=11 // pred_check
          %p438 = pneg %p136
        $region26: #{tpu_custom_call.1} parent=11 // pred_check_branch
          %440 = sbr.rel (%p438) target = $region28
        $region27: #{tpu_custom_call.1} parent=11 // pred_region
          _
        $region28: #{tpu_custom_call.1} parent=11 // pred_fallthru
          _
        // Predicated region
        $region29: #{tpu_custom_call.1} parent=11 // pred_check
          %p441 = pneg %p157
        $region30: #{tpu_custom_call.1} parent=11 // pred_check_branch
          %443 = sbr.rel (%p441) target = $region32
        $region31: #{tpu_custom_call.1} parent=11 // pred_region
          _
        $region32: #{tpu_custom_call.1} parent=11 // pred_fallthru
          _
        // Predicated region
        $region33: #{tpu_custom_call.1} parent=11 // pred_check
          %p444 = pneg %p178
        $region34: #{tpu_custom_call.1} parent=11 // pred_check_branch
          %446 = sbr.rel (%p444) target = $region36
        $region35: #{tpu_custom_call.1} parent=11 // pred_region
          _
        $region36: #{tpu_custom_call.1} parent=11 // pred_fallthru
          _
        // Predicated region
        $region37: #{tpu_custom_call.1} parent=11 // pred_check
          %p447 = pneg %p199
        $region38: #{tpu_custom_call.1} parent=11 // pred_check_branch
          %449 = sbr.rel (%p447) target = $region40
        $region39: #{tpu_custom_call.1} parent=11 // pred_region
          _
        $region40: #{tpu_custom_call.1} parent=11 // pred_fallthru
          _
        // Predicated region
        $region41: #{tpu_custom_call.1} parent=11 // pred_check
          %p450 = pneg %p220
        $region42: #{tpu_custom_call.1} parent=11 // pred_check_branch
          %452 = sbr.rel (%p450) target = $region44
        $region43: #{tpu_custom_call.1} parent=11 // pred_region
          _
        $region44: #{tpu_custom_call.1} parent=11 // pred_fallthru
          _
        // Predicated region
        $region45: #{tpu_custom_call.1} parent=11 // pred_check
          %p453 = pneg %p241
        $region46: #{tpu_custom_call.1} parent=11 // pred_check_branch
          %455 = sbr.rel (%p453) target = $region48
        $region47: #{tpu_custom_call.1} parent=11 // pred_region
          _
        $region48: #{tpu_custom_call.1} parent=11 // pred_fallthru
          _
        // Predicated region
        $region49: #{tpu_custom_call.1} parent=11 // pred_check
          %p456 = pneg %p262
        $region50: #{tpu_custom_call.1} parent=11 // pred_check_branch
          %458 = sbr.rel (%p456) target = $region52
        $region51: #{tpu_custom_call.1} parent=11 // pred_region
          _
        $region52: #{tpu_custom_call.1} parent=11 // pred_fallthru
          _
        // Predicated region
        $region53: #{tpu_custom_call.1} parent=11 // pred_check
          %p459 = pneg %p283
        $region54: #{tpu_custom_call.1} parent=11 // pred_check_branch
          %461 = sbr.rel (%p459) target = $region56
        $region55: #{tpu_custom_call.1} parent=11 // pred_region
          _
        $region56: #{tpu_custom_call.1} parent=11 // pred_fallthru
          _
        // Predicated region
        $region57: #{tpu_custom_call.1} parent=11 // pred_check
          %p462 = pneg %p304
        $region58: #{tpu_custom_call.1} parent=11 // pred_check_branch
          %464 = sbr.rel (%p462) target = $region60
        $region59: #{tpu_custom_call.1} parent=11 // pred_region
          _
        $region60: #{tpu_custom_call.1} parent=11 // pred_fallthru
          _
        // Predicated region
        $region61: #{tpu_custom_call.1} parent=11 // pred_check
          %p465 = pneg %p325
        $region62: #{tpu_custom_call.1} parent=11 // pred_check_branch
          %467 = sbr.rel (%p465) target = $region64
        $region63: #{tpu_custom_call.1} parent=11 // pred_region
          _
        $region64: #{tpu_custom_call.1} parent=11 // pred_fallthru
          _
        // Predicated region
        $region65: #{tpu_custom_call.1} parent=11 // pred_check
          %p468 = pneg %p346
        $region66: #{tpu_custom_call.1} parent=11 // pred_check_branch
          %470 = sbr.rel (%p468) target = $region68
        $region67: #{tpu_custom_call.1} parent=11 // pred_region
          _
        $region68: #{tpu_custom_call.1} parent=11 // pred_fallthru
          _
        // Predicated region
        $region69: #{tpu_custom_call.1} parent=11 // pred_check
          %p471 = pneg %p367
        $region70: #{tpu_custom_call.1} parent=11 // pred_check_branch
          %473 = sbr.rel (%p471) target = $region72
        $region71: #{tpu_custom_call.1} parent=11 // pred_region
          _
        $region72: #{tpu_custom_call.1} parent=11 // pred_fallthru
          _
        // Predicated region
        $region73: #{tpu_custom_call.1} parent=11 // pred_check
          %p474 = pneg %p388
        $region74: #{tpu_custom_call.1} parent=11 // pred_check_branch
          %476 = sbr.rel (%p474) target = $region76
        $region75: #{tpu_custom_call.1} parent=11 // pred_region
          _
        $region76: #{tpu_custom_call.1} parent=11 // pred_fallthru
          _
      $region12: #{tpu_custom_call.1} parent=5 // pred_fallthru
        _
      %p477 = scmp.lt.s32.totalorder %s26, 2
      // Predicated region
      $region77: #{tpu_custom_call.1} parent=5 // pred_check
        %p478 = pneg %p477
      $region78: #{tpu_custom_call.1} parent=5 // pred_check_branch
        %480 = sbr.rel (%p478) target = $region80
      $region79: #{tpu_custom_call.1} parent=5 // pred_region
        // Predicated region
        $region81: #{tpu_custom_call.1} parent=79 // pred_check
          %p481 = pneg %p46
        $region82: #{tpu_custom_call.1} parent=79 // pred_check_branch
          %483 = sbr.rel (%p481) target = $region84
        $region83: #{tpu_custom_call.1} parent=79 // pred_region
          %p484 = scmp.lt.s32.totalorder %s26, 1
          %s485 = scalar_select %p484, %s26, 1
          %s486 = smul.addr %s485, 8
          %s487 = scalar_lea.vmem %s0, %s486
        $region84: #{tpu_custom_call.1} parent=79 // pred_fallthru
          _
      $region80: #{tpu_custom_call.1} parent=5 // pred_fallthru
        _
      %p488 = scmp.le.s32.totalorder 1, %s26
      %p489 = scmp.lt.s32.totalorder %s26, 3
      %p490 = pnand %p488, %p489
      %p491 = pneg %p490
      // Predicated region
      $region85: #{tpu_custom_call.1} parent=5 // pred_check
        _
      $region86: #{tpu_custom_call.1} parent=5 // pred_check_branch
        %493 = sbr.rel (%p490) target = $region88
      $region87: #{tpu_custom_call.1} parent=5 // pred_region
        %s494 = ssub.s32 %s26, 1
        %p495 = scmp.lt.s32.totalorder %s31, 1
        %s496 = scalar_select %p495, %s31, 1
        %s497 = smul.addr %s496, 8
        %s498 = scalar_lea.vmem %s0, %s497
        %p499 = pneg %p52
        %p500 = pneg %p49
        %p501 = pneg %p73
        %p502 = pneg %p70
        %p503 = pneg %p94
        %p504 = pneg %p91
        %p505 = pneg %p115
        %p506 = pneg %p112
        %p507 = pneg %p136
        %p508 = pneg %p133
        %p509 = pneg %p157
        %p510 = pneg %p154
        %p511 = pneg %p178
        %p512 = pneg %p175
        %p513 = pneg %p199
        %p514 = pneg %p196
        %p515 = pneg %p220
        %p516 = pneg %p217
        %p517 = pneg %p241
        %p518 = pneg %p238
        %p519 = pneg %p262
        %p520 = pneg %p259
        %p521 = pneg %p283
        %p522 = pneg %p280
        %p523 = pneg %p304
        %p524 = pneg %p301
        %p525 = pneg %p325
        %p526 = pneg %p322
        %p527 = pneg %p346
        %p528 = pneg %p343
        %p529 = pneg %p367
        %p530 = pneg %p364
        %p531 = pneg %p388
        %p532 = pneg %p385
        %p533 = pneg %p414
        %p534 = pneg %p411
        %s535 = sand.u32 %s401, 1
        %s536 = scalar_lea.sflag [#allocation3], %s535
        %s537 = sand.u32 %s401, 1
        %s538 = smul.addr %s537, 8
        %s539 = scalar_lea.vmem [#allocation2], %s538
        %p540 = scmp.lt.s32.totalorder %s31, 1
        %s541 = scalar_select %p540, %s31, 1
        %s542 = smul.addr %s541, 8
        %s543 = scalar_lea.vmem %s0, %s542
        %v545 = vld [vmem:[%s543] sm:$0xff]
        %v546 = vld [vmem:[%s1] sm:$0x1]
        %v547 = vld [vmem:[%s2] sm:$0x1]
        %vm548 = vcmask 261120
        %v549 = vsel %vm548, %v545, 0.0
        %550 = vadd.xlane.f32.xlu0 %v549
        %v551 = vpop.xlane.xlu0 %550
        %v552 = vrcp.pop 32.0
        %v553 = vmul.f32 32.0, %v552
        %v554 = vsub.f32 1.0, %v553
        %v555 = vmul.f32 %v552, %v554
        %v556 = vadd.f32 %v552, %v555
        %vm557 = vweird.f32 %v552
        %v558 = vsel %vm557, %v552, %v556
        %v559 = vmul.f32 %v551, %v558
        %v560 = vsub.f32 %v545, %v559
        %v561 = vmul.f32 %v560, %v560
        %v562 = vsel %vm548, %v561, 0.0
        %563 = vadd.xlane.f32.xlu0 %v562
        %v564 = vpop.xlane.xlu0 %563
        %v565 = vmul.f32 %v564, %v558
        %v566 = vadd.f32 %v565, 1e-05
        %v567 = vrsqrt.pop %v566
        %v568 = vmul.f32 %v567, %v566
        %v569 = vmul.f32 %v568, %v567
        %v570 = vmul.f32 0.5, %v569
        %v571 = vsub.f32 1.5, %v570
        %v572 = vmul.f32 %v567, %v571
        %vm573 = vweird.f32 %v566
        %vm574 = vweird.f32 %v567
        %vm575 = vmor %vm573, %vm574
        %v576 = vsel %vm575, %v567, %v572
        %v577 = vmul.f32 %v560, %v576
        %v579 = vperm.slane %v546, 0
        %v581 = vmul.f32 %v577, %v579
        %v583 = vperm.slane %v547, 0
        %v585 = vadd.f32 %v581, %v583
        %v586 = vpack.c.bf16 %v585, %v585
        %v587 = vld [vmem:[%s3] sm:$0xf]
        %v588 = vld [vmem:[%s3 + $0x4] sm:$0xf]
        %v589 = vld [vmem:[%s3 + $0x8] sm:$0xf]
        %v590 = vld [vmem:[%s3 + $0xc] sm:$0xf]
        %v591 = vld [vmem:[%s3 + $0x10] sm:$0xf]
        %v592 = vld [vmem:[%s3 + $0x14] sm:$0xf]
        %v593 = vld [vmem:[%s3 + $0x18] sm:$0xf]
        %v594 = vld [vmem:[%s3 + $0x1c] sm:$0xf]
        %v595 = vld [vmem:[%s3 + $0x20] sm:$0xf]
        %v596 = vld [vmem:[%s3 + $0x24] sm:$0xf]
        %v597 = vld [vmem:[%s3 + $0x28] sm:$0xf]
        %v598 = vld [vmem:[%s3 + $0x2c] sm:$0xf]
        %v599 = vld [vmem:[%s3 + $0x30] sm:$0xf]
        %v600 = vld [vmem:[%s3 + $0x34] sm:$0xf]
        %v601 = vld [vmem:[%s3 + $0x38] sm:$0xf]
        %v602 = vld [vmem:[%s3 + $0x3c] sm:$0xf]
        %v603 = vld [vmem:[%s6] sm:$0x1]
        %v604 = vld [vmem:[%s6 + $0x1] sm:$0x1]
        %v605 = vld [vmem:[%s6 + $0x2] sm:$0x1]
        %v606 = vld [vmem:[%s6 + $0x3] sm:$0x1]
        %v611 = vperm.slane %v603, 0
        %v612 = vperm.slane %v604, 0
        %v613 = vperm.slane %v605, 0
        %v614 = vperm.slane %v606, 0
        %v623 = vunpack.c.l.b16 %v587
        %v624 = vunpack.c.l.b16 %v588
        %v625 = vunpack.c.l.b16 %v589
        %v626 = vunpack.c.l.b16 %v590
        %v627 = vpack.c.b16 %v624, %v623
        %v628 = vpack.c.b16 %v626, %v625
        %v632 = vsel %vm548, %v586, 0
        %634 = vmatpush.bf16.msra.mxu0 0
        %635 = vmatpush.bf16.msra.mxu0 0
        %636 = vmatpush.bf16.msra.mxu0 0
        %637 = vmatpush.bf16.msra.mxu0 0
        %638 = vmatpush.bf16.msra.mxu0 0
        %639 = vmatpush.bf16.msra.mxu0 0
        %640 = vmatpush.bf16.msra.mxu0 %v628
        %641 = vmatpush.bf16.msra.mxu0 %v627
        %642 = vmatmul.bf16.gmra.mxu0 %v632
        %v643 = vpop.f32.mrf.mxu0
        %v644 = vadd.f32 %v611, %v643
        %v645 = vpop.f32.mrf.mxu0
        %646 = vdwg.mxu0
        %v651 = vunpack.c.l.b16 %v591
        %v652 = vunpack.c.l.b16 %v592
        %v653 = vunpack.c.l.b16 %v593
        %v654 = vunpack.c.l.b16 %v594
        %v655 = vpack.c.b16 %v652, %v651
        %v656 = vpack.c.b16 %v654, %v653
        %659 = vmatpush.bf16.msra.mxu0 0
        %660 = vmatpush.bf16.msra.mxu0 0
        %661 = vmatpush.bf16.msra.mxu0 0
        %662 = vmatpush.bf16.msra.mxu0 0
        %663 = vmatpush.bf16.msra.mxu0 0
        %664 = vmatpush.bf16.msra.mxu0 0
        %665 = vmatpush.bf16.msra.mxu0 %v656
        %666 = vmatpush.bf16.msra.mxu0 %v655
        %667 = vmatmul.bf16.gmra.mxu0 %v632
        %v668 = vpop.f32.mrf.mxu0
        %v669 = vadd.f32 %v612, %v668
        %v670 = vpop.f32.mrf.mxu0
        %671 = vdwg.mxu0
        %v676 = vunpack.c.l.b16 %v595
        %v677 = vunpack.c.l.b16 %v596
        %v678 = vunpack.c.l.b16 %v597
        %v679 = vunpack.c.l.b16 %v598
        %v680 = vpack.c.b16 %v677, %v676
        %v681 = vpack.c.b16 %v679, %v678
        %684 = vmatpush.bf16.msra.mxu0 0
        %685 = vmatpush.bf16.msra.mxu0 0
        %686 = vmatpush.bf16.msra.mxu0 0
        %687 = vmatpush.bf16.msra.mxu0 0
        %688 = vmatpush.bf16.msra.mxu0 0
        %689 = vmatpush.bf16.msra.mxu0 0
        %690 = vmatpush.bf16.msra.mxu0 %v681
        %691 = vmatpush.bf16.msra.mxu0 %v680
        %692 = vmatmul.bf16.gmra.mxu0 %v632
        %v693 = vpop.f32.mrf.mxu0
        %v694 = vadd.f32 %v613, %v693
        %v695 = vpop.f32.mrf.mxu0
        %696 = vdwg.mxu0
        %v701 = vunpack.c.l.b16 %v599
        %v702 = vunpack.c.l.b16 %v600
        %v703 = vunpack.c.l.b16 %v601
        %v704 = vunpack.c.l.b16 %v602
        %v705 = vpack.c.b16 %v702, %v701
        %v706 = vpack.c.b16 %v704, %v703
        %709 = vmatpush.bf16.msra.mxu0 0
        %710 = vmatpush.bf16.msra.mxu0 0
        %711 = vmatpush.bf16.msra.mxu0 0
        %712 = vmatpush.bf16.msra.mxu0 0
        %713 = vmatpush.bf16.msra.mxu0 0
        %714 = vmatpush.bf16.msra.mxu0 0
        %715 = vmatpush.bf16.msra.mxu0 %v706
        %716 = vmatpush.bf16.msra.mxu0 %v705
        %717 = vmatmul.bf16.gmra.mxu0 %v632
        %v718 = vpop.f32.mrf.mxu0
        %v719 = vadd.f32 %v614, %v718
        %v720 = vpop.f32.mrf.mxu0
        %721 = vdwg.mxu0
        %v722 = vpack.c.bf16 %v644, %v644
        %v723 = vpack.c.bf16 %v669, %v669
        %v724 = vpack.c.bf16 %v694, %v694
        %v725 = vpack.c.bf16 %v719, %v719
        %v726 = vld [vmem:[%s4] sm:$0xf]
        %v727 = vld [vmem:[%s4 + $0x4] sm:$0xf]
        %v728 = vld [vmem:[%s4 + $0x8] sm:$0xf]
        %v729 = vld [vmem:[%s4 + $0xc] sm:$0xf]
        %v730 = vld [vmem:[%s4 + $0x10] sm:$0xf]
        %v731 = vld [vmem:[%s4 + $0x14] sm:$0xf]
        %v732 = vld [vmem:[%s4 + $0x18] sm:$0xf]
        %v733 = vld [vmem:[%s4 + $0x1c] sm:$0xf]
        %v734 = vld [vmem:[%s4 + $0x20] sm:$0xf]
        %v735 = vld [vmem:[%s4 + $0x24] sm:$0xf]
        %v736 = vld [vmem:[%s4 + $0x28] sm:$0xf]
        %v737 = vld [vmem:[%s4 + $0x2c] sm:$0xf]
        %v738 = vld [vmem:[%s4 + $0x30] sm:$0xf]
        %v739 = vld [vmem:[%s4 + $0x34] sm:$0xf]
        %v740 = vld [vmem:[%s4 + $0x38] sm:$0xf]
        %v741 = vld [vmem:[%s4 + $0x3c] sm:$0xf]
        %v742 = vld [vmem:[%s7] sm:$0x1]
        %v743 = vld [vmem:[%s7 + $0x1] sm:$0x1]
        %v744 = vld [vmem:[%s7 + $0x2] sm:$0x1]
        %v745 = vld [vmem:[%s7 + $0x3] sm:$0x1]
        %v750 = vperm.slane %v742, 0
        %v751 = vperm.slane %v743, 0
        %v752 = vperm.slane %v744, 0
        %v753 = vperm.slane %v745, 0
        %v762 = vunpack.c.l.b16 %v726
        %v763 = vunpack.c.l.b16 %v727
        %v764 = vunpack.c.l.b16 %v728
        %v765 = vunpack.c.l.b16 %v729
        %v766 = vpack.c.b16 %v763, %v762
        %v767 = vpack.c.b16 %v765, %v764
        %770 = vmatpush.bf16.msra.mxu0 0
        %771 = vmatpush.bf16.msra.mxu0 0
        %772 = vmatpush.bf16.msra.mxu0 0
        %773 = vmatpush.bf16.msra.mxu0 0
        %774 = vmatpush.bf16.msra.mxu0 0
        %775 = vmatpush.bf16.msra.mxu0 0
        %776 = vmatpush.bf16.msra.mxu0 %v767
        %777 = vmatpush.bf16.msra.mxu0 %v766
        %778 = vmatmul.bf16.gmra.mxu0 %v632
        %v779 = vpop.f32.mrf.mxu0
        %v780 = vadd.f32 %v750, %v779
        %v781 = vpop.f32.mrf.mxu0
        %782 = vdwg.mxu0
        %v787 = vunpack.c.l.b16 %v730
        %v788 = vunpack.c.l.b16 %v731
        %v789 = vunpack.c.l.b16 %v732
        %v790 = vunpack.c.l.b16 %v733
        %v791 = vpack.c.b16 %v788, %v787
        %v792 = vpack.c.b16 %v790, %v789
        %795 = vmatpush.bf16.msra.mxu0 0
        %796 = vmatpush.bf16.msra.mxu0 0
        %797 = vmatpush.bf16.msra.mxu0 0
        %798 = vmatpush.bf16.msra.mxu0 0
        %799 = vmatpush.bf16.msra.mxu0 0
        %800 = vmatpush.bf16.msra.mxu0 0
        %801 = vmatpush.bf16.msra.mxu0 %v792
        %802 = vmatpush.bf16.msra.mxu0 %v791
        %803 = vmatmul.bf16.gmra.mxu0 %v632
        %v804 = vpop.f32.mrf.mxu0
        %v805 = vadd.f32 %v751, %v804
        %v806 = vpop.f32.mrf.mxu0
        %807 = vdwg.mxu0
        %v812 = vunpack.c.l.b16 %v734
        %v813 = vunpack.c.l.b16 %v735
        %v814 = vunpack.c.l.b16 %v736
        %v815 = vunpack.c.l.b16 %v737
        %v816 = vpack.c.b16 %v813, %v812
        %v817 = vpack.c.b16 %v815, %v814
        %820 = vmatpush.bf16.msra.mxu0 0
        %821 = vmatpush.bf16.msra.mxu0 0
        %822 = vmatpush.bf16.msra.mxu0 0
        %823 = vmatpush.bf16.msra.mxu0 0
        %824 = vmatpush.bf16.msra.mxu0 0
        %825 = vmatpush.bf16.msra.mxu0 0
        %826 = vmatpush.bf16.msra.mxu0 %v817
        %827 = vmatpush.bf16.msra.mxu0 %v816
        %828 = vmatmul.bf16.gmra.mxu0 %v632
        %v829 = vpop.f32.mrf.mxu0
        %v830 = vadd.f32 %v752, %v829
        %v831 = vpop.f32.mrf.mxu0
        %832 = vdwg.mxu0
        %v837 = vunpack.c.l.b16 %v738
        %v838 = vunpack.c.l.b16 %v739
        %v839 = vunpack.c.l.b16 %v740
        %v840 = vunpack.c.l.b16 %v741
        %v841 = vpack.c.b16 %v838, %v837
        %v842 = vpack.c.b16 %v840, %v839
        %845 = vmatpush.bf16.msra.mxu0 0
        %846 = vmatpush.bf16.msra.mxu0 0
        %847 = vmatpush.bf16.msra.mxu0 0
        %848 = vmatpush.bf16.msra.mxu0 0
        %849 = vmatpush.bf16.msra.mxu0 0
        %850 = vmatpush.bf16.msra.mxu0 0
        %851 = vmatpush.bf16.msra.mxu0 %v842
        %852 = vmatpush.bf16.msra.mxu0 %v841
        %853 = vmatmul.bf16.gmra.mxu0 %v632
        %v854 = vpop.f32.mrf.mxu0
        %v855 = vadd.f32 %v753, %v854
        %v856 = vpop.f32.mrf.mxu0
        %857 = vdwg.mxu0
        %v858 = vpack.c.bf16 %v780, %v780
        %v859 = vpack.c.bf16 %v805, %v805
        %v860 = vpack.c.bf16 %v830, %v830
        %v861 = vpack.c.bf16 %v855, %v855
        %v862 = vld [vmem:[%s5] sm:$0xf]
        %v863 = vld [vmem:[%s5 + $0x4] sm:$0xf]
        %v864 = vld [vmem:[%s5 + $0x8] sm:$0xf]
        %v865 = vld [vmem:[%s5 + $0xc] sm:$0xf]
        %v866 = vld [vmem:[%s5 + $0x10] sm:$0xf]
        %v867 = vld [vmem:[%s5 + $0x14] sm:$0xf]
        %v868 = vld [vmem:[%s5 + $0x18] sm:$0xf]
        %v869 = vld [vmem:[%s5 + $0x1c] sm:$0xf]
        %v870 = vld [vmem:[%s5 + $0x20] sm:$0xf]
        %v871 = vld [vmem:[%s5 + $0x24] sm:$0xf]
        %v872 = vld [vmem:[%s5 + $0x28] sm:$0xf]
        %v873 = vld [vmem:[%s5 + $0x2c] sm:$0xf]
        %v874 = vld [vmem:[%s5 + $0x30] sm:$0xf]
        %v875 = vld [vmem:[%s5 + $0x34] sm:$0xf]
        %v876 = vld [vmem:[%s5 + $0x38] sm:$0xf]
        %v877 = vld [vmem:[%s5 + $0x3c] sm:$0xf]
        %v878 = vld [vmem:[%s8] sm:$0x1]
        %v879 = vld [vmem:[%s8 + $0x1] sm:$0x1]
        %v880 = vld [vmem:[%s8 + $0x2] sm:$0x1]
        %v881 = vld [vmem:[%s8 + $0x3] sm:$0x1]
        %v886 = vperm.slane %v878, 0
        %v887 = vperm.slane %v879, 0
        %v888 = vperm.slane %v880, 0
        %v889 = vperm.slane %v881, 0
        %v898 = vunpack.c.l.b16 %v862
        %v899 = vunpack.c.l.b16 %v863
        %v900 = vunpack.c.l.b16 %v864
        %v901 = vunpack.c.l.b16 %v865
        %v902 = vpack.c.b16 %v899, %v898
        %v903 = vpack.c.b16 %v901, %v900
        %906 = vmatpush.bf16.msra.mxu0 0
        %907 = vmatpush.bf16.msra.mxu0 0
        %908 = vmatpush.bf16.msra.mxu0 0
        %909 = vmatpush.bf16.msra.mxu0 0
        %910 = vmatpush.bf16.msra.mxu0 0
        %911 = vmatpush.bf16.msra.mxu0 0
        %912 = vmatpush.bf16.msra.mxu0 %v903
        %913 = vmatpush.bf16.msra.mxu0 %v902
        %914 = vmatmul.bf16.gmra.mxu0 %v632
        %v915 = vpop.f32.mrf.mxu0
        %v916 = vadd.f32 %v886, %v915
        %v917 = vpop.f32.mrf.mxu0
        %918 = vdwg.mxu0
        %v923 = vunpack.c.l.b16 %v866
        %v924 = vunpack.c.l.b16 %v867
        %v925 = vunpack.c.l.b16 %v868
        %v926 = vunpack.c.l.b16 %v869
        %v927 = vpack.c.b16 %v924, %v923
        %v928 = vpack.c.b16 %v926, %v925
        %931 = vmatpush.bf16.msra.mxu0 0
        %932 = vmatpush.bf16.msra.mxu0 0
        %933 = vmatpush.bf16.msra.mxu0 0
        %934 = vmatpush.bf16.msra.mxu0 0
        %935 = vmatpush.bf16.msra.mxu0 0
        %936 = vmatpush.bf16.msra.mxu0 0
        %937 = vmatpush.bf16.msra.mxu0 %v928
        %938 = vmatpush.bf16.msra.mxu0 %v927
        %939 = vmatmul.bf16.gmra.mxu0 %v632
        %v940 = vpop.f32.mrf.mxu0
        %v941 = vadd.f32 %v887, %v940
        %v942 = vpop.f32.mrf.mxu0
        %943 = vdwg.mxu0
        %v948 = vunpack.c.l.b16 %v870
        %v949 = vunpack.c.l.b16 %v871
        %v950 = vunpack.c.l.b16 %v872
        %v951 = vunpack.c.l.b16 %v873
        %v952 = vpack.c.b16 %v949, %v948
        %v953 = vpack.c.b16 %v951, %v950
        %956 = vmatpush.bf16.msra.mxu0 0
        %957 = vmatpush.bf16.msra.mxu0 0
        %958 = vmatpush.bf16.msra.mxu0 0
        %959 = vmatpush.bf16.msra.mxu0 0
        %960 = vmatpush.bf16.msra.mxu0 0
        %961 = vmatpush.bf16.msra.mxu0 0
        %962 = vmatpush.bf16.msra.mxu0 %v953
        %963 = vmatpush.bf16.msra.mxu0 %v952
        %964 = vmatmul.bf16.gmra.mxu0 %v632
        %v965 = vpop.f32.mrf.mxu0
        %v966 = vadd.f32 %v888, %v965
        %v967 = vpop.f32.mrf.mxu0
        %968 = vdwg.mxu0
        %v973 = vunpack.c.l.b16 %v874
        %v974 = vunpack.c.l.b16 %v875
        %v975 = vunpack.c.l.b16 %v876
        %v976 = vunpack.c.l.b16 %v877
        %v977 = vpack.c.b16 %v974, %v973
        %v978 = vpack.c.b16 %v976, %v975
        %981 = vmatpush.bf16.msra.mxu0 0
        %982 = vmatpush.bf16.msra.mxu0 0
        %983 = vmatpush.bf16.msra.mxu0 0
        %984 = vmatpush.bf16.msra.mxu0 0
        %985 = vmatpush.bf16.msra.mxu0 0
        %986 = vmatpush.bf16.msra.mxu0 0
        %987 = vmatpush.bf16.msra.mxu0 %v978
        %988 = vmatpush.bf16.msra.mxu0 %v977
        %989 = vmatmul.bf16.gmra.mxu0 %v632
        %v990 = vpop.f32.mrf.mxu0
        %v991 = vadd.f32 %v889, %v990
        %v992 = vpop.f32.mrf.mxu0
        %993 = vdwg.mxu0
        %v994 = vpack.c.bf16 %v916, %v916
        %v995 = vpack.c.bf16 %v941, %v941
        %v996 = vpack.c.bf16 %v966, %v966
        %v997 = vpack.c.bf16 %v991, %v991
        %vm998 = vcmask 64512
        %v1000 = vsel %vm998, %v722, 0
        %v1003 = vsel %vm998, %v858, 0
        %1005 = vmatpush.bf16.xpose.msra.mxu0 0
        %1006 = vmatpush.bf16.xpose.msra.mxu0 0
        %1007 = vmatpush.bf16.xpose.msra.mxu0 0
        %1008 = vmatpush.bf16.xpose.msra.mxu0 0
        %1009 = vmatpush.bf16.xpose.msra.mxu0 0
        %1010 = vmatpush.bf16.xpose.msra.mxu0 0
        %1011 = vmatpush.bf16.xpose.msra.mxu0 0
        %1012 = vmatpush.bf16.xpose.msra.mxu0 %v1003
        %1013 = vmatmul.bf16.gmra.mxu0 %v1000
        %v1014 = vpop.f32.mrf.mxu0
        %v1015 = vadd.f32 0.0, %v1014
        %v1016 = vpop.f32.mrf.mxu0
        %1017 = vdwg.mxu0
        %v1019 = vsel %vm998, %v723, 0
        %v1022 = vsel %vm998, %v859, 0
        %1024 = vmatpush.bf16.xpose.msra.mxu0 0
        %1025 = vmatpush.bf16.xpose.msra.mxu0 0
        %1026 = vmatpush.bf16.xpose.msra.mxu0 0
        %1027 = vmatpush.bf16.xpose.msra.mxu0 0
        %1028 = vmatpush.bf16.xpose.msra.mxu0 0
        %1029 = vmatpush.bf16.xpose.msra.mxu0 0
        %1030 = vmatpush.bf16.xpose.msra.mxu0 0
        %1031 = vmatpush.bf16.xpose.msra.mxu0 %v1022
        %1032 = vmatmul.bf16.gmra.mxu0 %v1019
        %v1033 = vpop.f32.mrf.mxu0
        %v1034 = vadd.f32 0.0, %v1033
        %v1035 = vpop.f32.mrf.mxu0
        %1036 = vdwg.mxu0
        %v1038 = vsel %vm998, %v724, 0
        %v1041 = vsel %vm998, %v860, 0
        %1043 = vmatpush.bf16.xpose.msra.mxu0 0
        %1044 = vmatpush.bf16.xpose.msra.mxu0 0
        %1045 = vmatpush.bf16.xpose.msra.mxu0 0
        %1046 = vmatpush.bf16.xpose.msra.mxu0 0
        %1047 = vmatpush.bf16.xpose.msra.mxu0 0
        %1048 = vmatpush.bf16.xpose.msra.mxu0 0
        %1049 = vmatpush.bf16.xpose.msra.mxu0 0
        %1050 = vmatpush.bf16.xpose.msra.mxu0 %v1041
        %1051 = vmatmul.bf16.gmra.mxu0 %v1038
        %v1052 = vpop.f32.mrf.mxu0
        %v1053 = vadd.f32 0.0, %v1052
        %v1054 = vpop.f32.mrf.mxu0
        %1055 = vdwg.mxu0
        %v1057 = vsel %vm998, %v725, 0
        %v1060 = vsel %vm998, %v861, 0
        %1062 = vmatpush.bf16.xpose.msra.mxu0 0
        %1063 = vmatpush.bf16.xpose.msra.mxu0 0
        %1064 = vmatpush.bf16.xpose.msra.mxu0 0
        %1065 = vmatpush.bf16.xpose.msra.mxu0 0
        %1066 = vmatpush.bf16.xpose.msra.mxu0 0
        %1067 = vmatpush.bf16.xpose.msra.mxu0 0
        %1068 = vmatpush.bf16.xpose.msra.mxu0 0
        %1069 = vmatpush.bf16.xpose.msra.mxu0 %v1060
        %1070 = vmatmul.bf16.gmra.mxu0 %v1057
        %v1071 = vpop.f32.mrf.mxu0
        %v1072 = vadd.f32 0.0, %v1071
        %v1073 = vpop.f32.mrf.mxu0
        %1074 = vdwg.mxu0
        %v1075 = vmul.f32 %v1015, 0.35355338
        %v1076 = vmul.f32 %v1034, 0.35355338
        %v1077 = vmul.f32 %v1053, 0.35355338
        %v1078 = vmul.f32 %v1072, 0.35355338
        %v1079 = vsel %vm998, %v1075, -inf
        %1080 = vmax.xlane.f32.xlu0 %v1079
        %v1081 = vpop.xlane.xlu0 %1080
        %v1082 = vsel %vm998, %v1076, -inf
        %1083 = vmax.xlane.f32.xlu0 %v1082
        %v1084 = vpop.xlane.xlu0 %1083
        %v1085 = vsel %vm998, %v1077, -inf
        %1086 = vmax.xlane.f32.xlu0 %v1085
        %v1087 = vpop.xlane.xlu0 %1086
        %v1088 = vsel %vm998, %v1078, -inf
        %1089 = vmax.xlane.f32.xlu0 %v1088
        %v1090 = vpop.xlane.xlu0 %1089
        %v1091 = vsub.f32 %v1075, %v1081
        %v1092 = vsub.f32 %v1076, %v1084
        %v1093 = vsub.f32 %v1077, %v1087
        %v1094 = vsub.f32 %v1078, %v1090
        %v1095 = vmul.f32 %v1091, 1.442695
        %v1096 = vpow.pop %v1095
        %v1097 = vmul.f32 %v1092, 1.442695
        %v1098 = vpow.pop %v1097
        %v1099 = vmul.f32 %v1093, 1.442695
        %v1100 = vpow.pop %v1099
        %v1101 = vmul.f32 %v1094, 1.442695
        %v1102 = vpow.pop %v1101
        %v1103 = vsel %vm998, %v1096, 0.0
        %1104 = vadd.xlane.f32.xlu0 %v1103
        %v1105 = vpop.xlane.xlu0 %1104
        %v1106 = vsel %vm998, %v1098, 0.0
        %1107 = vadd.xlane.f32.xlu0 %v1106
        %v1108 = vpop.xlane.xlu0 %1107
        %v1109 = vsel %vm998, %v1100, 0.0
        %1110 = vadd.xlane.f32.xlu0 %v1109
        %v1111 = vpop.xlane.xlu0 %1110
        %v1112 = vsel %vm998, %v1102, 0.0
        %1113 = vadd.xlane.f32.xlu0 %v1112
        %v1114 = vpop.xlane.xlu0 %1113
        %v1115 = vrcp.pop %v1105
        %v1116 = vmul.f32 %v1105, %v1115
        %v1117 = vsub.f32 1.0, %v1116
        %v1118 = vmul.f32 %v1115, %v1117
        %v1119 = vadd.f32 %v1115, %v1118
        %vm1120 = vweird.f32 %v1105
        %vm1121 = vweird.f32 %v1115
        %vm1122 = vmor %vm1120, %vm1121
        %v1123 = vsel %vm1122, %v1115, %v1119
        %v1124 = vand.u32 2147483647, %v1105
        %vm1125 = vcmp.eq.f32.partialorder %v1124, 8.507059e+37
        %v1126 = vand.u32 %v1105, 2147483648
        %v1127 = vor.u32 1.1754944e-38, %v1126
        %v1128 = vsel %vm1125, %v1127, %v1123
        %v1129 = vmul.f32 %v1096, %v1128
        %v1130 = vrcp.pop %v1108
        %v1131 = vmul.f32 %v1108, %v1130
        %v1132 = vsub.f32 1.0, %v1131
        %v1133 = vmul.f32 %v1130, %v1132
        %v1134 = vadd.f32 %v1130, %v1133
        %vm1135 = vweird.f32 %v1108
        %vm1136 = vweird.f32 %v1130
        %vm1137 = vmor %vm1135, %vm1136
        %v1138 = vsel %vm1137, %v1130, %v1134
        %v1139 = vand.u32 2147483647, %v1108
        %vm1140 = vcmp.eq.f32.partialorder %v1139, 8.507059e+37
        %v1141 = vand.u32 %v1108, 2147483648
        %v1142 = vor.u32 1.1754944e-38, %v1141
        %v1143 = vsel %vm1140, %v1142, %v1138
        %v1144 = vmul.f32 %v1098, %v1143
        %v1145 = vrcp.pop %v1111
        %v1146 = vmul.f32 %v1111, %v1145
        %v1147 = vsub.f32 1.0, %v1146
        %v1148 = vmul.f32 %v1145, %v1147
        %v1149 = vadd.f32 %v1145, %v1148
        %vm1150 = vweird.f32 %v1111
        %vm1151 = vweird.f32 %v1145
        %vm1152 = vmor %vm1150, %vm1151
        %v1153 = vsel %vm1152, %v1145, %v1149
        %v1154 = vand.u32 2147483647, %v1111
        %vm1155 = vcmp.eq.f32.partialorder %v1154, 8.507059e+37
        %v1156 = vand.u32 %v1111, 2147483648
        %v1157 = vor.u32 1.1754944e-38, %v1156
        %v1158 = vsel %vm1155, %v1157, %v1153
        %v1159 = vmul.f32 %v1100, %v1158
        %v1160 = vrcp.pop %v1114
        %v1161 = vmul.f32 %v1114, %v1160
        %v1162 = vsub.f32 1.0, %v1161
        %v1163 = vmul.f32 %v1160, %v1162
        %v1164 = vadd.f32 %v1160, %v1163
        %vm1165 = vweird.f32 %v1114
        %vm1166 = vweird.f32 %v1160
        %vm1167 = vmor %vm1165, %vm1166
        %v1168 = vsel %vm1167, %v1160, %v1164
        %v1169 = vand.u32 2147483647, %v1114
        %vm1170 = vcmp.eq.f32.partialorder %v1169, 8.507059e+37
        %v1171 = vand.u32 %v1114, 2147483648
        %v1172 = vor.u32 1.1754944e-38, %v1171
        %v1173 = vsel %vm1170, %v1172, %v1168
        %v1174 = vmul.f32 %v1102, %v1173
        %v1175 = vpack.c.bf16 %v1129, %v1129
        %v1176 = vpack.c.bf16 %v1144, %v1144
        %v1177 = vpack.c.bf16 %v1159, %v1159
        %v1178 = vpack.c.bf16 %v1174, %v1174
        %v1180 = vsel %vm998, %v1175, 0
        %vm1182 = vcmask 1043456
        %v1184 = vsel %vm1182, %v994, 0
        %1186 = vmatpush.bf16.msra.mxu0 0
        %1187 = vmatpush.bf16.msra.mxu0 0
        %1188 = vmatpush.bf16.msra.mxu0 0
        %1189 = vmatpush.bf16.msra.mxu0 0
        %1190 = vmatpush.bf16.msra.mxu0 0
        %1191 = vmatpush.bf16.msra.mxu0 0
        %1192 = vmatpush.bf16.msra.mxu0 0
        %1193 = vmatpush.bf16.msra.mxu0 %v1184
        %1194 = vmatmul.bf16.gmra.mxu0 %v1180
        %v1195 = vpop.f32.mrf.mxu0
        %v1196 = vadd.f32 0.0, %v1195
        %v1197 = vpop.f32.mrf.mxu0
        %1198 = vdwg.mxu0
        %v1200 = vsel %vm998, %v1176, 0
        %v1203 = vsel %vm1182, %v995, 0
        %1205 = vmatpush.bf16.msra.mxu0 0
        %1206 = vmatpush.bf16.msra.mxu0 0
        %1207 = vmatpush.bf16.msra.mxu0 0
        %1208 = vmatpush.bf16.msra.mxu0 0
        %1209 = vmatpush.bf16.msra.mxu0 0
        %1210 = vmatpush.bf16.msra.mxu0 0
        %1211 = vmatpush.bf16.msra.mxu0 0
        %1212 = vmatpush.bf16.msra.mxu0 %v1203
        %1213 = vmatmul.bf16.gmra.mxu0 %v1200
        %v1214 = vpop.f32.mrf.mxu0
        %v1215 = vadd.f32 0.0, %v1214
        %v1216 = vpop.f32.mrf.mxu0
        %1217 = vdwg.mxu0
        %v1219 = vsel %vm998, %v1177, 0
        %v1222 = vsel %vm1182, %v996, 0
        %1224 = vmatpush.bf16.msra.mxu0 0
        %1225 = vmatpush.bf16.msra.mxu0 0
        %1226 = vmatpush.bf16.msra.mxu0 0
        %1227 = vmatpush.bf16.msra.mxu0 0
        %1228 = vmatpush.bf16.msra.mxu0 0
        %1229 = vmatpush.bf16.msra.mxu0 0
        %1230 = vmatpush.bf16.msra.mxu0 0
        %1231 = vmatpush.bf16.msra.mxu0 %v1222
        %1232 = vmatmul.bf16.gmra.mxu0 %v1219
        %v1233 = vpop.f32.mrf.mxu0
        %v1234 = vadd.f32 0.0, %v1233
        %v1235 = vpop.f32.mrf.mxu0
        %1236 = vdwg.mxu0
        %v1238 = vsel %vm998, %v1178, 0
        %v1241 = vsel %vm1182, %v997, 0
        %1243 = vmatpush.bf16.msra.mxu0 0
        %1244 = vmatpush.bf16.msra.mxu0 0
        %1245 = vmatpush.bf16.msra.mxu0 0
        %1246 = vmatpush.bf16.msra.mxu0 0
        %1247 = vmatpush.bf16.msra.mxu0 0
        %1248 = vmatpush.bf16.msra.mxu0 0
        %1249 = vmatpush.bf16.msra.mxu0 0
        %1250 = vmatpush.bf16.msra.mxu0 %v1241
        %1251 = vmatmul.bf16.gmra.mxu0 %v1238
        %v1252 = vpop.f32.mrf.mxu0
        %v1253 = vadd.f32 0.0, %v1252
        %v1254 = vpop.f32.mrf.mxu0
        %1255 = vdwg.mxu0
        %v1256 = vpack.c.bf16 %v1196, %v1196
        %v1257 = vpack.c.bf16 %v1215, %v1215
        %v1258 = vpack.c.bf16 %v1234, %v1234
        %v1259 = vpack.c.bf16 %v1253, %v1253
        %v1260 = vld [vmem:[%s9] sm:$0xf]
        %v1261 = vld [vmem:[%s9 + $0x4] sm:$0xf]
        %v1262 = vld [vmem:[%s9 + $0x8] sm:$0xf]
        %v1263 = vld [vmem:[%s9 + $0xc] sm:$0xf]
        %v1265 = vsel %vm998, %v1256, 0
        %v1268 = vsel %vm1182, %v1260, 0
        %1270 = vmatpush.bf16.msra.mxu0 0
        %1271 = vmatpush.bf16.msra.mxu0 0
        %1272 = vmatpush.bf16.msra.mxu0 0
        %1273 = vmatpush.bf16.msra.mxu0 0
        %1274 = vmatpush.bf16.msra.mxu0 0
        %1275 = vmatpush.bf16.msra.mxu0 0
        %1276 = vmatpush.bf16.msra.mxu0 0
        %1277 = vmatpush.bf16.msra.mxu0 %v1268
        %1278 = vmatmul.bf16.gmra.mxu0 %v1265
        %v1279 = vpop.f32.mrf.mxu0
        %v1280 = vadd.f32 0.0, %v1279
        %v1281 = vpop.f32.mrf.mxu0
        %1282 = vdwg.mxu0
        %v1284 = vsel %vm998, %v1257, 0
        %v1287 = vsel %vm1182, %v1261, 0
        %1289 = vmatpush.bf16.msra.mxu0 0
        %1290 = vmatpush.bf16.msra.mxu0 0
        %1291 = vmatpush.bf16.msra.mxu0 0
        %1292 = vmatpush.bf16.msra.mxu0 0
        %1293 = vmatpush.bf16.msra.mxu0 0
        %1294 = vmatpush.bf16.msra.mxu0 0
        %1295 = vmatpush.bf16.msra.mxu0 0
        %1296 = vmatpush.bf16.msra.mxu0 %v1287
        %1297 = vmatmul.bf16.gmra.mxu0 %v1284
        %v1298 = vpop.f32.mrf.mxu0
        %v1299 = vadd.f32 0.0, %v1298
        %v1300 = vpop.f32.mrf.mxu0
        %1301 = vdwg.mxu0
        %v1303 = vsel %vm998, %v1258, 0
        %v1306 = vsel %vm1182, %v1262, 0
        %1308 = vmatpush.bf16.msra.mxu0 0
        %1309 = vmatpush.bf16.msra.mxu0 0
        %1310 = vmatpush.bf16.msra.mxu0 0
        %1311 = vmatpush.bf16.msra.mxu0 0
        %1312 = vmatpush.bf16.msra.mxu0 0
        %1313 = vmatpush.bf16.msra.mxu0 0
        %1314 = vmatpush.bf16.msra.mxu0 0
        %1315 = vmatpush.bf16.msra.mxu0 %v1306
        %1316 = vmatmul.bf16.gmra.mxu0 %v1303
        %v1317 = vpop.f32.mrf.mxu0
        %v1318 = vadd.f32 0.0, %v1317
        %v1319 = vpop.f32.mrf.mxu0
        %1320 = vdwg.mxu0
        %v1322 = vsel %vm998, %v1259, 0
        %v1325 = vsel %vm1182, %v1263, 0
        %1327 = vmatpush.bf16.msra.mxu0 0
        %1328 = vmatpush.bf16.msra.mxu0 0
        %1329 = vmatpush.bf16.msra.mxu0 0
        %1330 = vmatpush.bf16.msra.mxu0 0
        %1331 = vmatpush.bf16.msra.mxu0 0
        %1332 = vmatpush.bf16.msra.mxu0 0
        %1333 = vmatpush.bf16.msra.mxu0 0
        %1334 = vmatpush.bf16.msra.mxu0 %v1325
        %1335 = vmatmul.bf16.gmra.mxu0 %v1322
        %v1336 = vpop.f32.mrf.mxu0
        %v1337 = vadd.f32 0.0, %v1336
        %v1338 = vpop.f32.mrf.mxu0
        %1339 = vdwg.mxu0
        %v1340 = vsel %vm548, %v1280, 0.0
        %v1341 = vsel %vm548, %v1299, 0.0
        %v1342 = vadd.f32 %v1340, %v1341
        %v1343 = vsel %vm548, %v1318, 0.0
        %v1344 = vadd.f32 %v1342, %v1343
        %v1345 = vsel %vm548, %v1337, 0.0
        %v1346 = vadd.f32 %v1344, %v1345
        %v1347 = vld [vmem:[%s10] sm:$0x1]
        %v1349 = vperm.slane %v1347, 0
        %v1351 = vadd.f32 %v1346, %v1349
        %v1352 = vadd.f32 %v545, %v1351
        %v1353 = vld [vmem:[%s11] sm:$0x1]
        %v1354 = vld [vmem:[%s12] sm:$0x1]
        %v1355 = vsel %vm548, %v1352, 0.0
        %1356 = vadd.xlane.f32.xlu0 %v1355
        %v1357 = vpop.xlane.xlu0 %1356
        %v1358 = vmul.f32 %v1357, %v558
        %v1359 = vsub.f32 %v1352, %v1358
        %v1360 = vmul.f32 %v1359, %v1359
        %v1361 = vsel %vm548, %v1360, 0.0
        %1362 = vadd.xlane.f32.xlu0 %v1361
        %v1363 = vpop.xlane.xlu0 %1362
        %v1364 = vmul.f32 %v1363, %v558
        %v1365 = vadd.f32 %v1364, 1e-05
        %v1366 = vrsqrt.pop %v1365
        %v1367 = vmul.f32 %v1366, %v1365
        %v1368 = vmul.f32 %v1367, %v1366
        %v1369 = vmul.f32 0.5, %v1368
        %v1370 = vsub.f32 1.5, %v1369
        %v1371 = vmul.f32 %v1366, %v1370
        %vm1372 = vweird.f32 %v1365
        %vm1373 = vweird.f32 %v1366
        %vm1374 = vmor %vm1372, %vm1373
        %v1375 = vsel %vm1374, %v1366, %v1371
        %v1376 = vmul.f32 %v1359, %v1375
        %v1378 = vperm.slane %v1353, 0
        %v1380 = vmul.f32 %v1376, %v1378
        %v1382 = vperm.slane %v1354, 0
        %v1384 = vadd.f32 %v1380, %v1382
        %v1385 = vpack.c.bf16 %v1384, %v1384
        %v1386 = vld [vmem:[%s13] sm:$0xf]
        %v1387 = vld [vmem:[%s13 + $0x4] sm:$0xf]
        %v1388 = vld [vmem:[%s13 + $0x8] sm:$0xf]
        %v1389 = vld [vmem:[%s13 + $0xc] sm:$0xf]
        %v1390 = vld [vmem:[%s14] sm:$0x1]
        %v1392 = vperm.slane %v1390, 0
        %v1398 = vunpack.c.l.b16 %v1386
        %v1399 = vunpack.c.l.b16 %v1387
        %v1400 = vunpack.c.l.b16 %v1388
        %v1401 = vunpack.c.l.b16 %v1389
        %v1402 = vpack.c.b16 %v1399, %v1398
        %v1403 = vpack.c.b16 %v1401, %v1400
        %v1407 = vsel %vm548, %v1385, 0
        %1409 = vmatpush.bf16.msra.mxu0 0
        %1410 = vmatpush.bf16.msra.mxu0 0
        %1411 = vmatpush.bf16.msra.mxu0 0
        %1412 = vmatpush.bf16.msra.mxu0 0
        %1413 = vmatpush.bf16.msra.mxu0 0
        %1414 = vmatpush.bf16.msra.mxu0 0
        %1415 = vmatpush.bf16.msra.mxu0 %v1403
        %1416 = vmatpush.bf16.msra.mxu0 %v1402
        %1417 = vmatmul.bf16.gmra.mxu0 %v1407
        %v1418 = vpop.f32.mrf.mxu0
        %v1419 = vadd.f32 %v1392, %v1418
        %v1420 = vpop.f32.mrf.mxu0
        %1421 = vdwg.mxu0
        %v1422 = vmul.f32 %v1419, 0.5
        %v1423 = vmul.f32 %v1419, 0.70710677
        %v1424 = vmul.f32 %v1423, %v1423
        %v1425 = vmin.f32 16.0, %v1424
        %v1426 = vmul.f32 %v1425, 2.1237322e-06
        %v1427 = vadd.f32 %v1426, 0.00028619796
        %v1428 = vmul.f32 %v1425, %v1427
        %v1429 = vadd.f32 %v1428, 0.0036580483
        %v1430 = vmul.f32 %v1425, %v1429
        %v1431 = vadd.f32 %v1430, 0.05243302
        %v1432 = vmul.f32 %v1425, %v1431
        %v1433 = vadd.f32 %v1432, 0.18741608
        %v1434 = vmul.f32 %v1425, %v1433
        %v1435 = vadd.f32 %v1434, 1.1283791
        %v1436 = vmul.f32 %v1423, %v1435
        %v1437 = vmul.f32 %v1425, 3.8918573e-05
        %v1438 = vadd.f32 %v1437, 0.001143296
        %v1439 = vmul.f32 %v1425, %v1438
        %v1440 = vadd.f32 %v1439, 0.014752088
        %v1441 = vmul.f32 %v1425, %v1440
        %v1442 = vadd.f32 %v1441, 0.112945676
        %v1443 = vmul.f32 %v1425, %v1442
        %v1444 = vadd.f32 %v1443, 0.4994258
        %v1445 = vmul.f32 %v1425, %v1444
        %v1446 = vadd.f32 %v1445, 1.0
        %v1447 = vrcp.pop %v1446
        %v1448 = vmul.f32 %v1446, %v1447
        %v1449 = vsub.f32 1.0, %v1448
        %v1450 = vmul.f32 %v1447, %v1449
        %v1451 = vadd.f32 %v1447, %v1450
        %vm1452 = vweird.f32 %v1446
        %vm1453 = vweird.f32 %v1447
        %vm1454 = vmor %vm1452, %vm1453
        %v1455 = vsel %vm1454, %v1447, %v1451
        %v1456 = vand.u32 2147483647, %v1446
        %vm1457 = vcmp.eq.f32.partialorder %v1456, 8.507059e+37
        %v1458 = vand.u32 %v1446, 2147483648
        %v1459 = vor.u32 1.1754944e-38, %v1458
        %v1460 = vsel %vm1457, %v1459, %v1455
        %v1461 = vmul.f32 %v1436, %v1460
        %v1462 = vmin.f32 %v1461, 1.0
        %v1463 = vmax.f32 %v1462, -1.0
        %v1464 = vadd.f32 %v1463, 1.0
        %v1465 = vmul.f32 %v1422, %v1464
        %v1466 = vpack.c.bf16 %v1465, %v1465
        %v1467 = vld [vmem:[%s15] sm:$0xf]
        %v1468 = vld [vmem:[%s15 + $0x4] sm:$0xf]
        %v1469 = vld [vmem:[%s15 + $0x8] sm:$0xf]
        %v1470 = vld [vmem:[%s15 + $0xc] sm:$0xf]
        %v1471 = vld [vmem:[%s15 + $0x10] sm:$0xf]
        %v1472 = vld [vmem:[%s15 + $0x14] sm:$0xf]
        %v1473 = vld [vmem:[%s15 + $0x18] sm:$0xf]
        %v1474 = vld [vmem:[%s15 + $0x1c] sm:$0xf]
        %v1475 = vld [vmem:[%s15 + $0x20] sm:$0xf]
        %v1476 = vld [vmem:[%s15 + $0x24] sm:$0xf]
        %v1477 = vld [vmem:[%s15 + $0x28] sm:$0xf]
        %v1478 = vld [vmem:[%s15 + $0x2c] sm:$0xf]
        %v1479 = vld [vmem:[%s15 + $0x30] sm:$0xf]
        %v1480 = vld [vmem:[%s15 + $0x34] sm:$0xf]
        %v1481 = vld [vmem:[%s15 + $0x38] sm:$0xf]
        %v1482 = vld [vmem:[%s15 + $0x3c] sm:$0xf]
        %v1483 = vld [vmem:[%s16] sm:$0x1]
        %v1485 = vperm.slane %v1483, 0
        %v1503 = vunpack.c.l.b16 %v1467
        %v1504 = vunpack.c.l.b16 %v1468
        %v1505 = vunpack.c.l.b16 %v1469
        %v1506 = vunpack.c.l.b16 %v1470
        %v1507 = vunpack.c.l.b16 %v1471
        %v1508 = vunpack.c.l.b16 %v1472
        %v1509 = vunpack.c.l.b16 %v1473
        %v1510 = vunpack.c.l.b16 %v1474
        %v1511 = vunpack.c.l.b16 %v1475
        %v1512 = vunpack.c.l.b16 %v1476
        %v1513 = vunpack.c.l.b16 %v1477
        %v1514 = vunpack.c.l.b16 %v1478
        %v1515 = vunpack.c.l.b16 %v1479
        %v1516 = vunpack.c.l.b16 %v1480
        %v1517 = vunpack.c.l.b16 %v1481
        %v1518 = vunpack.c.l.b16 %v1482
        %v1519 = vpack.c.b16 %v1504, %v1503
        %v1520 = vpack.c.b16 %v1506, %v1505
        %v1521 = vpack.c.b16 %v1508, %v1507
        %v1522 = vpack.c.b16 %v1510, %v1509
        %v1523 = vpack.c.b16 %v1512, %v1511
        %v1524 = vpack.c.b16 %v1514, %v1513
        %v1525 = vpack.c.b16 %v1516, %v1515
        %v1526 = vpack.c.b16 %v1518, %v1517
        %1535 = vmatpush.bf16.msra.mxu0 %v1526
        %1536 = vmatpush.bf16.msra.mxu0 %v1525
        %1537 = vmatpush.bf16.msra.mxu0 %v1524
        %1538 = vmatpush.bf16.msra.mxu0 %v1523
        %1539 = vmatpush.bf16.msra.mxu0 %v1522
        %1540 = vmatpush.bf16.msra.mxu0 %v1521
        %1541 = vmatpush.bf16.msra.mxu0 %v1520
        %1542 = vmatpush.bf16.msra.mxu0 %v1519
        %1543 = vmatmul.bf16.gmra.mxu0 %v1466
        %v1544 = vpop.f32.mrf.mxu0
        %v1545 = vadd.f32 %v1485, %v1544
        %v1546 = vpop.f32.mrf.mxu0
        %1547 = vdwg.mxu0
        %v1548 = vadd.f32 %v1352, %v1545
        %1549 = vst.msk [vmem:[%s539] sm:$0xff] %vm548, %v1548
        %s1550 = sand.u32 %s401, 1
        %s1551 = scalar_lea.sflag [#allocation3], %s1550
        %s1552 = sand.u32 %s401, 1
        %s1553 = smul.addr %s1552, 8
        %s1554 = scalar_lea.vmem [#allocation2], %s1553
        // Predicated region
        $region89: #{tpu_custom_call.1} parent=87 // pred_check
          %p1555 = pneg %p411
        $region90: #{tpu_custom_call.1} parent=87 // pred_check_branch
          %1557 = sbr.rel (%p1555) target = $region92
        $region91: #{tpu_custom_call.1} parent=87 // pred_region
          %1559 = vsyncadd %s1551, 0
          %s1560 = smul.addr %s31, 8
          %s1561 = scalar_lea.hbm %s17, %s1560
          %s1563 = sshll.u32 %s1554, 4
          %s1564 = int_to_ptr.vmem [resolvable:$true] %s1563
          %s1565 = sshll.u32 %s1561, 4
          %s1566 = int_to_ptr.hbm [resolvable:$true] %s1565
          %1568 = dma.vmem_to_hbm [thread:$0]  %s1564, 128, %s1566, %s1551
        $region92: #{tpu_custom_call.1} parent=87 // pred_fallthru
          _
      $region88: #{tpu_custom_call.1} parent=5 // pred_fallthru
        _
      %p1569 = scmp.le.s32.totalorder 2, %s26
      // Predicated region
      $region93: #{tpu_custom_call.1} parent=5 // pred_check
        %p1570 = pneg %p1569
      $region94: #{tpu_custom_call.1} parent=5 // pred_check_branch
        %1572 = sbr.rel (%p1570) target = $region96
      $region95: #{tpu_custom_call.1} parent=5 // pred_region
        %s1573 = ssub.s32 %s26, 2
        // Predicated region
        $region97: #{tpu_custom_call.1} parent=95 // pred_check
          %p1574 = pneg %p417
        $region98: #{tpu_custom_call.1} parent=95 // pred_check_branch
          %1576 = sbr.rel (%p1574) target = $region100
        $region99: #{tpu_custom_call.1} parent=95 // pred_region
          %s1577 = sand.u32 %s402, 1
          %s1578 = scalar_lea.sflag [#allocation3], %s1577
          %s1579 = sand.u32 %s402, 1
          %s1580 = smul.addr %s1579, 8
          %s1581 = scalar_lea.vmem [#allocation2], %s1580
          %1583 = dma.done %s1578, 128
        $region100: #{tpu_custom_call.1} parent=95 // pred_fallthru
          _
      $region96: #{tpu_custom_call.1} parent=5 // pred_fallthru
        _
    $region6: #{tpu_custom_call.1} parent=1 // loop_footer
      %s30 = sadd.s32 1, %s26
    $region7: #{tpu_custom_call.1} parent=1 // loop_footer_branch
      %25 = sbr.rel target = $region3
    $region8: #{tpu_custom_call.1} parent=1 // loop_exit
      _
    %1584 = vsyncpa [#allocation3], 1
    %s1585 = scalar_lea.sflag [#allocation3], 1
    %1586 = vsyncpa %s1585, 1

</llo_original>
